<compile_context>
chip_gen: v7x
topology: tpu7x:2x2x1
jax: 0.10.0
libtpu: 0.0.40
codegen_flags: <defaults>
</compile_context>

<pallas_src>
import jax
import jax.numpy as jnp
from jax.experimental import pallas as pl
from jax.experimental.pallas import tpu as pltpu

H = 14
W = 14
HW = H * W                               # 196
N_SPRITES = 11
INPUT_DIM = HW * N_SPRITES               # 2156
INPUT_DIM_PAD = 2176                     # 2156 rounded up to a multiple of 128
H_DIMS = [256, 128]                      # default hidden dims of VAEMario
Z_DIM = 32                               # small latent dim for the example


def _vae_fused_kernel(x_ref, eps_ref,
                      we1_ref, be1_ref, we2_ref, be2_ref,
                      wmv_ref, bmv_ref,
                      wd1_ref, bd1_ref, wd2_ref, bd2_ref,
                      wd3_ref, bd3_ref,
                      out_ref, mulv_ref):
    """Full VAEMario forward for one batch tile; LogSoftmax fused via online LSE."""
    f32 = jnp.float32
    bf16 = jnp.bfloat16
    zd = eps_ref.shape[-1]

    # ---- encoder: Linear+Tanh, Linear+Tanh ----
    x = x_ref[...]                                                      # (TB, 2176) bf16
    h = jnp.tanh(jnp.dot(x, we1_ref[...], preferred_element_type=f32) + be1_ref[...])
    h = jnp.tanh(jnp.dot(h.astype(bf16), we2_ref[...],
                         preferred_element_type=f32) + be2_ref[...])

    # ---- fused mu / log_var head: one (128, 2*z) matmul; split in the wrapper ----
    mulv = jnp.dot(h.astype(bf16), wmv_ref[...],
                   preferred_element_type=f32) + bmv_ref[...]           # (TB, 2*z)
    mulv_ref[...] = mulv
    mu = mulv[:, :zd]
    log_var = mulv[:, zd:]

    # ---- reparametrize: z = mu + eps * exp(0.5 * log_var) ----
    z = mu + eps_ref[...] * jnp.exp(0.5 * log_var)

    # ---- decoder: Linear+Tanh, Linear+Tanh ----
    d = jnp.tanh(jnp.dot(z.astype(bf16), wd1_ref[...],
                         preferred_element_type=f32) + bd1_ref[...])
    d = jnp.tanh(jnp.dot(d.astype(bf16), wd2_ref[...],
                         preferred_element_type=f32) + bd2_ref[...])
    d = d.astype(bf16)

    # ---- final Linear (per sprite) + fused LogSoftmax over the sprite axis ----
    # wd3_ref: (11, 256, 196) so every per-sprite logits slab is a lane-dense
    # (TB, 196) store into out_ref[c].  Online logsumexp keeps only one slab plus
    # running max / rescaled sum live (no 11-slab vreg spill).
    m = None
    s = None
    for c in range(N_SPRITES):
        slab = jnp.dot(d, wd3_ref[c], preferred_element_type=f32) + bd3_ref[c]
        out_ref[c] = slab                                    # raw logits, dense slab
        if c == 0:
            m = slab
            s = jnp.ones_like(slab)
        else:
            m_new = jnp.maximum(m, slab)
            s = s * jnp.exp(m - m_new) + jnp.exp(slab - m_new)
            m = m_new
    lse = m + jnp.log(s)

    for c in range(N_SPRITES):
        out_ref[c] = out_ref[c] - lse                        # log-softmax, dense slab


def _linear_init(key, d_in, d_out):
    """Deterministic PyTorch-style uniform init; weight stored as (in, out), f32."""
    kw, kb = jax.random.split(key)
    lim = 1.0 / (d_in ** 0.5)
    w = jax.random.uniform(kw, (d_in, d_out), jnp.float32, -lim, lim)
    b = jax.random.uniform(kb, (d_out,), jnp.float32, -lim, lim)
    return w, b


def init_params(key, z_dim=Z_DIM):
    """Master f32 parameters in a PyTorch-equivalent (in, out) layout."""
    hid1, hid2 = H_DIMS
    keys = jax.random.split(key, 7)
    we1, be1 = _linear_init(keys[0], INPUT_DIM, hid1)
    we2, be2 = _linear_init(keys[1], hid1, hid2)
    wmu, bmu = _linear_init(keys[2], hid2, z_dim)
    wlv, blv = _linear_init(keys[3], hid2, z_dim)
    wd1, bd1 = _linear_init(keys[4], z_dim, hid2)
    wd2, bd2 = _linear_init(keys[5], hid2, hid1)
    wd3, bd3 = _linear_init(keys[6], hid1, INPUT_DIM)
    return {"we1": we1, "be1": be1, "we2": we2, "be2": be2,
            "wmu": wmu, "bmu": bmu, "wlv": wlv, "blv": blv,
            "wd1": wd1, "bd1": bd1, "wd2": wd2, "bd2": bd2,
            "wd3": wd3, "bd3": bd3}


def pack_params(p):
    """Pre-pack master params into the kernel-friendly layout (bf16 weights, f32 biases)."""
    bf = jnp.bfloat16
    hid1, _ = H_DIMS
    we1 = jnp.pad(p["we1"], ((0, INPUT_DIM_PAD - INPUT_DIM), (0, 0)))   # K-pad with zeros
    return {
        "we1": we1.astype(bf), "be1": p["be1"].reshape(1, -1),
        "we2": p["we2"].astype(bf), "be2": p["be2"].reshape(1, -1),
        # fused mu / log_var head: (hid2, 2*z)
        "wmv": jnp.concatenate([p["wmu"], p["wlv"]], axis=1).astype(bf),
        "bmv": jnp.concatenate([p["bmu"], p["blv"]], axis=0).reshape(1, -1),
        "wd1": p["wd1"].astype(bf), "bd1": p["bd1"].reshape(1, -1),
        "wd2": p["wd2"].astype(bf), "bd2": p["bd2"].reshape(1, -1),
        # dec3 pre-split per sprite (NCHW flatten order = c*196 + h*14 + w):
        # weight (11, hid1, 196), bias (11, 1, 196)
        "wd3": p["wd3"].reshape(hid1, N_SPRITES, HW).transpose(1, 0, 2).astype(bf),
        "bd3": p["bd3"].reshape(N_SPRITES, 1, HW),
    }


def _choose_tile(B):
    """Batch tile: fill the 256-row MXU (512 for very large B); >=2 grid steps when
    B permits so v7x's two TensorCores both get work; always a multiple of 8."""
    target = 512 if B >= 4096 else 256
    min_steps = 2 if B > 16 else 1
    steps = max(min_steps, pl.cdiv(B, target))
    tb = ((pl.cdiv(B, steps) + 7) // 8) * 8
    return tb


@jax.jit
def vae_mario_forward(x, eps, packed):
    """Returns [x_prime, x, mu, log_var] like VAEMario.forward (NCHW x)."""
    B = x.shape[0]
    zd = eps.shape[-1]
    hid1, hid2 = H_DIMS

    x_flat = x.reshape(B, INPUT_DIM).astype(jnp.bfloat16)
    x_flat = jnp.pad(x_flat, ((0, 0), (0, INPUT_DIM_PAD - INPUT_DIM)))
    eps_f = eps.astype(jnp.float32)

    TB = _choose_tile(B)
    nb = pl.cdiv(B, TB)
    Bp = nb * TB
    if Bp != B:
        x_flat = jnp.pad(x_flat, ((0, Bp - B), (0, 0)))
        eps_f = jnp.pad(eps_f, ((0, Bp - B), (0, 0)))

    def tile_spec(block):                      # batch-tiled 2-D array, batch leading
        return pl.BlockSpec(block, lambda i: (i, 0))

    def const_spec(shape):                     # grid-invariant weight, stays VMEM-resident
        nd = len(shape)
        return pl.BlockSpec(shape, lambda i, _n=nd: (0,) * _n)

    weight_keys = ["we1", "be1", "we2", "be2", "wmv", "bmv",
                   "wd1", "bd1", "wd2", "bd2", "wd3", "bd3"]
    weight_args = [packed[k] for k in weight_keys]

    in_specs = [tile_spec((TB, INPUT_DIM_PAD)), tile_spec((TB, zd))]
    in_specs += [const_spec(w.shape) for w in weight_args]

    out_shapes = (
        jax.ShapeDtypeStruct((N_SPRITES, Bp, HW), jnp.float32),   # sprite-leading log-probs
        jax.ShapeDtypeStruct((Bp, 2 * zd), jnp.float32),          # fused [mu | log_var]
    )
    out_specs = (
        pl.BlockSpec((N_SPRITES, TB, HW), lambda i: (0, i, 0)),   # dense (TB,196) slabs
        tile_spec((TB, 2 * zd)),
    )

    flops = 2 * Bp * (INPUT_DIM_PAD * hid1 + hid1 * hid2 + hid2 * 2 * zd
                      + zd * hid2 + hid2 * hid1 + hid1 * INPUT_DIM)
    transcendentals = Bp * (hid1 + hid2 + zd + hid2 + hid1 + (2 * N_SPRITES + 2) * HW)
    weight_bytes = sum(int(w.size) * w.dtype.itemsize for w in weight_args)
    bytes_accessed = weight_bytes + Bp * (INPUT_DIM_PAD * 2 + zd * 4
                                          + N_SPRITES * HW * 4 + 2 * zd * 4)

    log_probs, mulv = pl.pallas_call(
        _vae_fused_kernel,
        grid=(nb,),
        in_specs=in_specs,
        out_specs=out_specs,
        out_shape=out_shapes,
        compiler_params=pltpu.CompilerParams(
            dimension_semantics=("parallel",),
            vmem_limit_bytes=32 * 1024 * 1024,
        ),
        cost_estimate=pl.CostEstimate(
            flops=flops,
            transcendentals=transcendentals,
            bytes_accessed=bytes_accessed,
        ),
    )(x_flat, eps_f, *weight_args)

    if Bp != B:
        log_probs = log_probs[:, :B]
        mulv = mulv[:B]

    mu = mulv[:, :zd]
    log_var = mulv[:, zd:]
    # (11, B, 196) -> (B, 11, 14, 14): transpose is a cheap HBM copy done by XLA,
    # the trailing reshape is row-major-free.
    x_prime = jnp.transpose(log_probs, (1, 0, 2)).reshape(B, N_SPRITES, H, W)
    return x_prime, x, mu, log_var


def _reference_forward(x, eps, p):
    """Pure-JAX f32 reference matching the PyTorch module (unpacked master weights)."""
    B = x.shape[0]
    xf = x.reshape(B, INPUT_DIM)
    h = jnp.tanh(xf @ p["we1"] + p["be1"])
    h = jnp.tanh(h @ p["we2"] + p["be2"])
    mu = h @ p["wmu"] + p["bmu"]
    log_var = h @ p["wlv"] + p["blv"]
    z = mu + eps * jnp.exp(0.5 * log_var)
    d = jnp.tanh(z @ p["wd1"] + p["bd1"])
    d = jnp.tanh(d @ p["wd2"] + p["bd2"])
    logits = (d @ p["wd3"] + p["bd3"]).reshape(B, N_SPRITES, H, W)
    return jax.nn.log_softmax(logits, axis=1), mu, log_var


if __name__ == "__main__":
    key = jax.random.PRNGKey(0)
    k_params, k_x, k_eps = jax.random.split(key, 3)

    B = 2
    params_f32 = init_params(k_params, Z_DIM)
    packed = pack_params(params_f32)
    x = jax.random.normal(k_x, (B, N_SPRITES, H, W), jnp.float32)     # NCHW input
    eps = jax.random.normal(k_eps, (B, Z_DIM), jnp.float32)           # randn_like(std)

    x_prime, x_out, mu, log_var = vae_mario_forward(x, eps, packed)
    jax.block_until_ready((x_prime, x_out, mu, log_var))

    assert x_prime.shape == (B, N_SPRITES, H, W)
    assert x_out.shape == (B, N_SPRITES, H, W)
    assert mu.shape == (B, Z_DIM) and log_var.shape == (B, Z_DIM)
    assert bool(jnp.all(jnp.isfinite(x_prime)))
    # log-softmax sanity: probabilities over the sprite axis sum to 1
    assert bool(jnp.allclose(jnp.exp(x_prime).sum(axis=1), 1.0, atol=1e-3))

    # cross-check against a pure-f32 JAX reference (bounds bf16 cast error)
    xp_ref, mu_ref, lv_ref = _reference_forward(x, eps, params_f32)
    assert bool(jnp.allclose(x_prime, xp_ref, atol=5e-2, rtol=5e-2))
    assert bool(jnp.allclose(mu, mu_ref, atol=5e-2, rtol=5e-2))
    assert bool(jnp.allclose(log_var, lv_ref, atol=5e-2, rtol=5e-2))

    print("KERNEL_OK")
</pallas_src>

<mosaic_0001>
module attributes {stable_mosaic.version = 11 : i64} {
  func.func @_vae_fused_kernel(%arg0: i32, %arg1: memref<8x2176xbf16, #tpu.memory_space<vmem>>, %arg2: memref<8x32xf32, #tpu.memory_space<vmem>>, %arg3: memref<2176x256xbf16, #tpu.memory_space<vmem>>, %arg4: memref<1x256xf32, #tpu.memory_space<vmem>>, %arg5: memref<256x128xbf16, #tpu.memory_space<vmem>>, %arg6: memref<1x128xf32, #tpu.memory_space<vmem>>, %arg7: memref<128x64xbf16, #tpu.memory_space<vmem>>, %arg8: memref<1x64xf32, #tpu.memory_space<vmem>>, %arg9: memref<32x128xbf16, #tpu.memory_space<vmem>>, %arg10: memref<1x128xf32, #tpu.memory_space<vmem>>, %arg11: memref<128x256xbf16, #tpu.memory_space<vmem>>, %arg12: memref<1x256xf32, #tpu.memory_space<vmem>>, %arg13: memref<11x256x196xbf16, #tpu.memory_space<vmem>>, %arg14: memref<11x1x196xf32, #tpu.memory_space<vmem>>, %arg15: memref<11x8x196xf32, #tpu.memory_space<vmem>>, %arg16: memref<8x64xf32, #tpu.memory_space<vmem>>) attributes {dimension_semantics = [#tpu.dimension_semantics<parallel>], iteration_bounds = array<i64: 1>, scalar_prefetch = 0 : i64, scratch_operands = 0 : i64, tpu.core_type = #tpu.core_type<tc>, window_params = [{transform_indices = @transform_0, window_bounds = array<i64: 8, 2176>}, {transform_indices = @transform_1, window_bounds = array<i64: 8, 32>}, {pipeline_mode = #tpu.pipeline_mode<synchronous>, transform_indices = @transform_2, window_bounds = array<i64: 2176, 256>}, {pipeline_mode = #tpu.pipeline_mode<synchronous>, transform_indices = @transform_3, window_bounds = array<i64: 1, 256>}, {pipeline_mode = #tpu.pipeline_mode<synchronous>, transform_indices = @transform_4, window_bounds = array<i64: 256, 128>}, {pipeline_mode = #tpu.pipeline_mode<synchronous>, transform_indices = @transform_5, window_bounds = array<i64: 1, 128>}, {pipeline_mode = #tpu.pipeline_mode<synchronous>, transform_indices = @transform_6, window_bounds = array<i64: 128, 64>}, {pipeline_mode = #tpu.pipeline_mode<synchronous>, transform_indices = @transform_7, window_bounds = array<i64: 1, 64>}, {pipeline_mode = #tpu.pipeline_mode<synchronous>, transform_indices = @transform_8, window_bounds = array<i64: 32, 128>}, {pipeline_mode = #tpu.pipeline_mode<synchronous>, transform_indices = @transform_9, window_bounds = array<i64: 1, 128>}, {pipeline_mode = #tpu.pipeline_mode<synchronous>, transform_indices = @transform_10, window_bounds = array<i64: 128, 256>}, {pipeline_mode = #tpu.pipeline_mode<synchronous>, transform_indices = @transform_11, window_bounds = array<i64: 1, 256>}, {pipeline_mode = #tpu.pipeline_mode<synchronous>, transform_indices = @transform_12, window_bounds = array<i64: 11, 256, 196>}, {pipeline_mode = #tpu.pipeline_mode<synchronous>, transform_indices = @transform_13, window_bounds = array<i64: 11, 1, 196>}, {transform_indices = @transform_14, window_bounds = array<i64: 11, 8, 196>}, {transform_indices = @transform_15, window_bounds = array<i64: 8, 64>}]} {
    %c0 = arith.constant 0 : index
    %c0_0 = arith.constant 0 : index
    %0 = vector.load %arg1[%c0, %c0_0] : memref<8x2176xbf16, #tpu.memory_space<vmem>>, vector<8x2176xbf16>
    %c0_1 = arith.constant 0 : index
    %c0_2 = arith.constant 0 : index
    %1 = vector.load %arg3[%c0_1, %c0_2] : memref<2176x256xbf16, #tpu.memory_space<vmem>>, vector<2176x256xbf16>
    %cst = arith.constant dense<0.000000e+00> : vector<8x256xf32>
    %2 = tpu.matmul %0, %1, %cst {dimension_numbers = #tpu.dot_dimension_numbers<[1], [0], [0], [1], [0, 0, 1, 1], [], []>} : vector<8x2176xbf16>, vector<2176x256xbf16>, vector<8x256xf32> -> vector<8x256xf32>
    %c0_3 = arith.constant 0 : index
    %c0_4 = arith.constant 0 : index
    %3 = vector.load %arg4[%c0_3, %c0_4] : memref<1x256xf32, #tpu.memory_space<vmem>>, vector<1x256xf32>
    %4 = vector.broadcast %3 : vector<1x256xf32> to vector<8x256xf32>
    %5 = arith.addf %2, %4 : vector<8x256xf32>
    %6 = math.tanh %5 : vector<8x256xf32>
    %7 = arith.truncf %6 : vector<8x256xf32> to vector<8x256xbf16>
    %c0_5 = arith.constant 0 : index
    %c0_6 = arith.constant 0 : index
    %8 = vector.load %arg5[%c0_5, %c0_6] : memref<256x128xbf16, #tpu.memory_space<vmem>>, vector<256x128xbf16>
    %cst_7 = arith.constant dense<0.000000e+00> : vector<8x128xf32>
    %9 = tpu.matmul %7, %8, %cst_7 {dimension_numbers = #tpu.dot_dimension_numbers<[1], [0], [0], [1], [0, 0, 1, 1], [], []>} : vector<8x256xbf16>, vector<256x128xbf16>, vector<8x128xf32> -> vector<8x128xf32>
    %c0_8 = arith.constant 0 : index
    %c0_9 = arith.constant 0 : index
    %10 = vector.load %arg6[%c0_8, %c0_9] : memref<1x128xf32, #tpu.memory_space<vmem>>, vector<1x128xf32>
    %11 = vector.broadcast %10 : vector<1x128xf32> to vector<8x128xf32>
    %12 = arith.addf %9, %11 : vector<8x128xf32>
    %13 = math.tanh %12 : vector<8x128xf32>
    %14 = arith.truncf %13 : vector<8x128xf32> to vector<8x128xbf16>
    %c0_10 = arith.constant 0 : index
    %c0_11 = arith.constant 0 : index
    %15 = vector.load %arg7[%c0_10, %c0_11] : memref<128x64xbf16, #tpu.memory_space<vmem>>, vector<128x64xbf16>
    %cst_12 = arith.constant dense<0.000000e+00> : vector<8x64xf32>
    %16 = tpu.matmul %14, %15, %cst_12 {dimension_numbers = #tpu.dot_dimension_numbers<[1], [0], [0], [1], [0, 0, 1, 1], [], []>} : vector<8x128xbf16>, vector<128x64xbf16>, vector<8x64xf32> -> vector<8x64xf32>
    %c0_13 = arith.constant 0 : index
    %c0_14 = arith.constant 0 : index
    %17 = vector.load %arg8[%c0_13, %c0_14] : memref<1x64xf32, #tpu.memory_space<vmem>>, vector<1x64xf32>
    %18 = vector.broadcast %17 : vector<1x64xf32> to vector<8x64xf32>
    %19 = arith.addf %16, %18 : vector<8x64xf32>
    %c0_15 = arith.constant 0 : index
    %c0_16 = arith.constant 0 : index
    %20 = vector.load %arg16[%c0_15, %c0_16] : memref<8x64xf32, #tpu.memory_space<vmem>>, vector<8x64xf32>
    tpu.vector_store %arg16[%c0_15, %c0_16], %19 {strides = array<i32>} : memref<8x64xf32, #tpu.memory_space<vmem>>, vector<8x64xf32>,
    %21 = vector.extract_strided_slice %19 {offsets = [0, 0], sizes = [8, 32], strides = [1, 1]} : vector<8x64xf32> to vector<8x32xf32>
    %22 = vector.extract_strided_slice %19 {offsets = [0, 32], sizes = [8, 32], strides = [1, 1]} : vector<8x64xf32> to vector<8x32xf32>
    %c0_17 = arith.constant 0 : index
    %c0_18 = arith.constant 0 : index
    %23 = vector.load %arg2[%c0_17, %c0_18] : memref<8x32xf32, #tpu.memory_space<vmem>>, vector<8x32xf32>
    %cst_19 = arith.constant 5.000000e-01 : f32
    %24 = vector.broadcast %cst_19 : f32 to vector<8x32xf32>
    %25 = arith.mulf %24, %22 : vector<8x32xf32>
    %26 = math.exp %25 : vector<8x32xf32>
    %27 = arith.mulf %23, %26 : vector<8x32xf32>
    %28 = arith.addf %21, %27 : vector<8x32xf32>
    %29 = arith.truncf %28 : vector<8x32xf32> to vector<8x32xbf16>
    %c0_20 = arith.constant 0 : index
    %c0_21 = arith.constant 0 : index
    %30 = vector.load %arg9[%c0_20, %c0_21] : memref<32x128xbf16, #tpu.memory_space<vmem>>, vector<32x128xbf16>
    %cst_22 = arith.constant dense<0.000000e+00> : vector<8x128xf32>
    %31 = tpu.matmul %29, %30, %cst_22 {dimension_numbers = #tpu.dot_dimension_numbers<[1], [0], [0], [1], [0, 0, 1, 1], [], []>} : vector<8x32xbf16>, vector<32x128xbf16>, vector<8x128xf32> -> vector<8x128xf32>
    %c0_23 = arith.constant 0 : index
    %c0_24 = arith.constant 0 : index
    %32 = vector.load %arg10[%c0_23, %c0_24] : memref<1x128xf32, #tpu.memory_space<vmem>>, vector<1x128xf32>
    %33 = vector.broadcast %32 : vector<1x128xf32> to vector<8x128xf32>
    %34 = arith.addf %31, %33 : vector<8x128xf32>
    %35 = math.tanh %34 : vector<8x128xf32>
    %36 = arith.truncf %35 : vector<8x128xf32> to vector<8x128xbf16>
    %c0_25 = arith.constant 0 : index
    %c0_26 = arith.constant 0 : index
    %37 = vector.load %arg11[%c0_25, %c0_26] : memref<128x256xbf16, #tpu.memory_space<vmem>>, vector<128x256xbf16>
    %cst_27 = arith.constant dense<0.000000e+00> : vector<8x256xf32>
    %38 = tpu.matmul %36, %37, %cst_27 {dimension_numbers = #tpu.dot_dimension_numbers<[1], [0], [0], [1], [0, 0, 1, 1], [], []>} : vector<8x128xbf16>, vector<128x256xbf16>, vector<8x256xf32> -> vector<8x256xf32>
    %c0_28 = arith.constant 0 : index
    %c0_29 = arith.constant 0 : index
    %39 = vector.load %arg12[%c0_28, %c0_29] : memref<1x256xf32, #tpu.memory_space<vmem>>, vector<1x256xf32>
    %40 = vector.broadcast %39 : vector<1x256xf32> to vector<8x256xf32>
    %41 = arith.addf %38, %40 : vector<8x256xf32>
    %42 = math.tanh %41 : vector<8x256xf32>
    %43 = arith.truncf %42 : vector<8x256xf32> to vector<8x256xbf16>
    %c0_30 = arith.constant 0 : index
    %c0_31 = arith.constant 0 : index
    %c0_32 = arith.constant 0 : index
    %44 = vector.load %arg13[%c0_30, %c0_31, %c0_32] : memref<11x256x196xbf16, #tpu.memory_space<vmem>>, vector<1x256x196xbf16>
    %45 = vector.shape_cast %44 : vector<1x256x196xbf16> to vector<256x196xbf16>
    %cst_33 = arith.constant dense<0.000000e+00> : vector<8x196xf32>
    %46 = tpu.matmul %43, %45, %cst_33 {dimension_numbers = #tpu.dot_dimension_numbers<[1], [0], [0], [1], [0, 0, 1, 1], [], []>} : vector<8x256xbf16>, vector<256x196xbf16>, vector<8x196xf32> -> vector<8x196xf32>
    %c0_34 = arith.constant 0 : index
    %c0_35 = arith.constant 0 : index
    %c0_36 = arith.constant 0 : index
    %47 = vector.load %arg14[%c0_34, %c0_35, %c0_36] : memref<11x1x196xf32, #tpu.memory_space<vmem>>, vector<1x1x196xf32>
    %48 = vector.shape_cast %47 : vector<1x1x196xf32> to vector<1x196xf32>
    %49 = vector.broadcast %48 : vector<1x196xf32> to vector<8x196xf32>
    %50 = arith.addf %46, %49 : vector<8x196xf32>
    %c0_37 = arith.constant 0 : index
    %c0_38 = arith.constant 0 : index
    %c0_39 = arith.constant 0 : index
    %51 = vector.load %arg15[%c0_37, %c0_38, %c0_39] : memref<11x8x196xf32, #tpu.memory_space<vmem>>, vector<1x8x196xf32>
    %52 = vector.shape_cast %51 : vector<1x8x196xf32> to vector<8x196xf32>
    %53 = vector.shape_cast %50 : vector<8x196xf32> to vector<1x8x196xf32>
    tpu.vector_store %arg15[%c0_37, %c0_38, %c0_39], %53 {strides = array<i32>} : memref<11x8x196xf32, #tpu.memory_space<vmem>>, vector<1x8x196xf32>,
    %cst_40 = arith.constant 1.000000e+00 : f32
    %54 = vector.broadcast %cst_40 : f32 to vector<8x196xf32>
    %c1 = arith.constant 1 : index
    %c0_41 = arith.constant 0 : index
    %c0_42 = arith.constant 0 : index
    %55 = vector.load %arg13[%c1, %c0_41, %c0_42] : memref<11x256x196xbf16, #tpu.memory_space<vmem>>, vector<1x256x196xbf16>
    %56 = vector.shape_cast %55 : vector<1x256x196xbf16> to vector<256x196xbf16>
    %cst_43 = arith.constant dense<0.000000e+00> : vector<8x196xf32>
    %57 = tpu.matmul %43, %56, %cst_43 {dimension_numbers = #tpu.dot_dimension_numbers<[1], [0], [0], [1], [0, 0, 1, 1], [], []>} : vector<8x256xbf16>, vector<256x196xbf16>, vector<8x196xf32> -> vector<8x196xf32>
    %c1_44 = arith.constant 1 : index
    %c0_45 = arith.constant 0 : index
    %c0_46 = arith.constant 0 : index
    %58 = vector.load %arg14[%c1_44, %c0_45, %c0_46] : memref<11x1x196xf32, #tpu.memory_space<vmem>>, vector<1x1x196xf32>
    %59 = vector.shape_cast %58 : vector<1x1x196xf32> to vector<1x196xf32>
    %60 = vector.broadcast %59 : vector<1x196xf32> to vector<8x196xf32>
    %61 = arith.addf %57, %60 : vector<8x196xf32>
    %c1_47 = arith.constant 1 : index
    %c0_48 = arith.constant 0 : index
    %c0_49 = arith.constant 0 : index
    %62 = vector.load %arg15[%c1_47, %c0_48, %c0_49] : memref<11x8x196xf32, #tpu.memory_space<vmem>>, vector<1x8x196xf32>
    %63 = vector.shape_cast %62 : vector<1x8x196xf32> to vector<8x196xf32>
    %64 = vector.shape_cast %61 : vector<8x196xf32> to vector<1x8x196xf32>
    tpu.vector_store %arg15[%c1_47, %c0_48, %c0_49], %64 {strides = array<i32>} : memref<11x8x196xf32, #tpu.memory_space<vmem>>, vector<1x8x196xf32>,
    %65 = arith.maximumf %50, %61 : vector<8x196xf32>
    %66 = arith.subf %50, %65 : vector<8x196xf32>
    %67 = math.exp %66 : vector<8x196xf32>
    %68 = arith.mulf %54, %67 : vector<8x196xf32>
    %69 = arith.subf %61, %65 : vector<8x196xf32>
    %70 = math.exp %69 : vector<8x196xf32>
    %71 = arith.addf %68, %70 : vector<8x196xf32>
    %c2 = arith.constant 2 : index
    %c0_50 = arith.constant 0 : index
    %c0_51 = arith.constant 0 : index
    %72 = vector.load %arg13[%c2, %c0_50, %c0_51] : memref<11x256x196xbf16, #tpu.memory_space<vmem>>, vector<1x256x196xbf16>
    %73 = vector.shape_cast %72 : vector<1x256x196xbf16> to vector<256x196xbf16>
    %cst_52 = arith.constant dense<0.000000e+00> : vector<8x196xf32>
    %74 = tpu.matmul %43, %73, %cst_52 {dimension_numbers = #tpu.dot_dimension_numbers<[1], [0], [0], [1], [0, 0, 1, 1], [], []>} : vector<8x256xbf16>, vector<256x196xbf16>, vector<8x196xf32> -> vector<8x196xf32>
    %c2_53 = arith.constant 2 : index
    %c0_54 = arith.constant 0 : index
    %c0_55 = arith.constant 0 : index
    %75 = vector.load %arg14[%c2_53, %c0_54, %c0_55] : memref<11x1x196xf32, #tpu.memory_space<vmem>>, vector<1x1x196xf32>
    %76 = vector.shape_cast %75 : vector<1x1x196xf32> to vector<1x196xf32>
    %77 = vector.broadcast %76 : vector<1x196xf32> to vector<8x196xf32>
    %78 = arith.addf %74, %77 : vector<8x196xf32>
    %c2_56 = arith.constant 2 : index
    %c0_57 = arith.constant 0 : index
    %c0_58 = arith.constant 0 : index
    %79 = vector.load %arg15[%c2_56, %c0_57, %c0_58] : memref<11x8x196xf32, #tpu.memory_space<vmem>>, vector<1x8x196xf32>
    %80 = vector.shape_cast %79 : vector<1x8x196xf32> to vector<8x196xf32>
    %81 = vector.shape_cast %78 : vector<8x196xf32> to vector<1x8x196xf32>
    tpu.vector_store %arg15[%c2_56, %c0_57, %c0_58], %81 {strides = array<i32>} : memref<11x8x196xf32, #tpu.memory_space<vmem>>, vector<1x8x196xf32>,
    %82 = arith.maximumf %65, %78 : vector<8x196xf32>
    %83 = arith.subf %65, %82 : vector<8x196xf32>
    %84 = math.exp %83 : vector<8x196xf32>
    %85 = arith.mulf %71, %84 : vector<8x196xf32>
    %86 = arith.subf %78, %82 : vector<8x196xf32>
    %87 = math.exp %86 : vector<8x196xf32>
    %88 = arith.addf %85, %87 : vector<8x196xf32>
    %c3 = arith.constant 3 : index
    %c0_59 = arith.constant 0 : index
    %c0_60 = arith.constant 0 : index
    %89 = vector.load %arg13[%c3, %c0_59, %c0_60] : memref<11x256x196xbf16, #tpu.memory_space<vmem>>, vector<1x256x196xbf16>
    %90 = vector.shape_cast %89 : vector<1x256x196xbf16> to vector<256x196xbf16>
    %cst_61 = arith.constant dense<0.000000e+00> : vector<8x196xf32>
    %91 = tpu.matmul %43, %90, %cst_61 {dimension_numbers = #tpu.dot_dimension_numbers<[1], [0], [0], [1], [0, 0, 1, 1], [], []>} : vector<8x256xbf16>, vector<256x196xbf16>, vector<8x196xf32> -> vector<8x196xf32>
    %c3_62 = arith.constant 3 : index
    %c0_63 = arith.constant 0 : index
    %c0_64 = arith.constant 0 : index
    %92 = vector.load %arg14[%c3_62, %c0_63, %c0_64] : memref<11x1x196xf32, #tpu.memory_space<vmem>>, vector<1x1x196xf32>
    %93 = vector.shape_cast %92 : vector<1x1x196xf32> to vector<1x196xf32>
    %94 = vector.broadcast %93 : vector<1x196xf32> to vector<8x196xf32>
    %95 = arith.addf %91, %94 : vector<8x196xf32>
    %c3_65 = arith.constant 3 : index
    %c0_66 = arith.constant 0 : index
    %c0_67 = arith.constant 0 : index
    %96 = vector.load %arg15[%c3_65, %c0_66, %c0_67] : memref<11x8x196xf32, #tpu.memory_space<vmem>>, vector<1x8x196xf32>
    %97 = vector.shape_cast %96 : vector<1x8x196xf32> to vector<8x196xf32>
    %98 = vector.shape_cast %95 : vector<8x196xf32> to vector<1x8x196xf32>
    tpu.vector_store %arg15[%c3_65, %c0_66, %c0_67], %98 {strides = array<i32>} : memref<11x8x196xf32, #tpu.memory_space<vmem>>, vector<1x8x196xf32>,
    %99 = arith.maximumf %82, %95 : vector<8x196xf32>
    %100 = arith.subf %82, %99 : vector<8x196xf32>
    %101 = math.exp %100 : vector<8x196xf32>
    %102 = arith.mulf %88, %101 : vector<8x196xf32>
    %103 = arith.subf %95, %99 : vector<8x196xf32>
    %104 = math.exp %103 : vector<8x196xf32>
    %105 = arith.addf %102, %104 : vector<8x196xf32>
    %c4 = arith.constant 4 : index
    %c0_68 = arith.constant 0 : index
    %c0_69 = arith.constant 0 : index
    %106 = vector.load %arg13[%c4, %c0_68, %c0_69] : memref<11x256x196xbf16, #tpu.memory_space<vmem>>, vector<1x256x196xbf16>
    %107 = vector.shape_cast %106 : vector<1x256x196xbf16> to vector<256x196xbf16>
    %cst_70 = arith.constant dense<0.000000e+00> : vector<8x196xf32>
    %108 = tpu.matmul %43, %107, %cst_70 {dimension_numbers = #tpu.dot_dimension_numbers<[1], [0], [0], [1], [0, 0, 1, 1], [], []>} : vector<8x256xbf16>, vector<256x196xbf16>, vector<8x196xf32> -> vector<8x196xf32>
    %c4_71 = arith.constant 4 : index
    %c0_72 = arith.constant 0 : index
    %c0_73 = arith.constant 0 : index
    %109 = vector.load %arg14[%c4_71, %c0_72, %c0_73] : memref<11x1x196xf32, #tpu.memory_space<vmem>>, vector<1x1x196xf32>
    %110 = vector.shape_cast %109 : vector<1x1x196xf32> to vector<1x196xf32>
    %111 = vector.broadcast %110 : vector<1x196xf32> to vector<8x196xf32>
    %112 = arith.addf %108, %111 : vector<8x196xf32>
    %c4_74 = arith.constant 4 : index
    %c0_75 = arith.constant 0 : index
    %c0_76 = arith.constant 0 : index
    %113 = vector.load %arg15[%c4_74, %c0_75, %c0_76] : memref<11x8x196xf32, #tpu.memory_space<vmem>>, vector<1x8x196xf32>
    %114 = vector.shape_cast %113 : vector<1x8x196xf32> to vector<8x196xf32>
    %115 = vector.shape_cast %112 : vector<8x196xf32> to vector<1x8x196xf32>
    tpu.vector_store %arg15[%c4_74, %c0_75, %c0_76], %115 {strides = array<i32>} : memref<11x8x196xf32, #tpu.memory_space<vmem>>, vector<1x8x196xf32>,
    %116 = arith.maximumf %99, %112 : vector<8x196xf32>
    %117 = arith.subf %99, %116 : vector<8x196xf32>
    %118 = math.exp %117 : vector<8x196xf32>
    %119 = arith.mulf %105, %118 : vector<8x196xf32>
    %120 = arith.subf %112, %116 : vector<8x196xf32>
    %121 = math.exp %120 : vector<8x196xf32>
    %122 = arith.addf %119, %121 : vector<8x196xf32>
    %c5 = arith.constant 5 : index
    %c0_77 = arith.constant 0 : index
    %c0_78 = arith.constant 0 : index
    %123 = vector.load %arg13[%c5, %c0_77, %c0_78] : memref<11x256x196xbf16, #tpu.memory_space<vmem>>, vector<1x256x196xbf16>
    %124 = vector.shape_cast %123 : vector<1x256x196xbf16> to vector<256x196xbf16>
    %cst_79 = arith.constant dense<0.000000e+00> : vector<8x196xf32>
    %125 = tpu.matmul %43, %124, %cst_79 {dimension_numbers = #tpu.dot_dimension_numbers<[1], [0], [0], [1], [0, 0, 1, 1], [], []>} : vector<8x256xbf16>, vector<256x196xbf16>, vector<8x196xf32> -> vector<8x196xf32>
    %c5_80 = arith.constant 5 : index
    %c0_81 = arith.constant 0 : index
    %c0_82 = arith.constant 0 : index
    %126 = vector.load %arg14[%c5_80, %c0_81, %c0_82] : memref<11x1x196xf32, #tpu.memory_space<vmem>>, vector<1x1x196xf32>
    %127 = vector.shape_cast %126 : vector<1x1x196xf32> to vector<1x196xf32>
    %128 = vector.broadcast %127 : vector<1x196xf32> to vector<8x196xf32>
    %129 = arith.addf %125, %128 : vector<8x196xf32>
    %c5_83 = arith.constant 5 : index
    %c0_84 = arith.constant 0 : index
    %c0_85 = arith.constant 0 : index
    %130 = vector.load %arg15[%c5_83, %c0_84, %c0_85] : memref<11x8x196xf32, #tpu.memory_space<vmem>>, vector<1x8x196xf32>
    %131 = vector.shape_cast %130 : vector<1x8x196xf32> to vector<8x196xf32>
    %132 = vector.shape_cast %129 : vector<8x196xf32> to vector<1x8x196xf32>
    tpu.vector_store %arg15[%c5_83, %c0_84, %c0_85], %132 {strides = array<i32>} : memref<11x8x196xf32, #tpu.memory_space<vmem>>, vector<1x8x196xf32>,
    %133 = arith.maximumf %116, %129 : vector<8x196xf32>
    %134 = arith.subf %116, %133 : vector<8x196xf32>
    %135 = math.exp %134 : vector<8x196xf32>
    %136 = arith.mulf %122, %135 : vector<8x196xf32>
    %137 = arith.subf %129, %133 : vector<8x196xf32>
    %138 = math.exp %137 : vector<8x196xf32>
    %139 = arith.addf %136, %138 : vector<8x196xf32>
    %c6 = arith.constant 6 : index
    %c0_86 = arith.constant 0 : index
    %c0_87 = arith.constant 0 : index
    %140 = vector.load %arg13[%c6, %c0_86, %c0_87] : memref<11x256x196xbf16, #tpu.memory_space<vmem>>, vector<1x256x196xbf16>
    %141 = vector.shape_cast %140 : vector<1x256x196xbf16> to vector<256x196xbf16>
    %cst_88 = arith.constant dense<0.000000e+00> : vector<8x196xf32>
    %142 = tpu.matmul %43, %141, %cst_88 {dimension_numbers = #tpu.dot_dimension_numbers<[1], [0], [0], [1], [0, 0, 1, 1], [], []>} : vector<8x256xbf16>, vector<256x196xbf16>, vector<8x196xf32> -> vector<8x196xf32>
    %c6_89 = arith.constant 6 : index
    %c0_90 = arith.constant 0 : index
    %c0_91 = arith.constant 0 : index
    %143 = vector.load %arg14[%c6_89, %c0_90, %c0_91] : memref<11x1x196xf32, #tpu.memory_space<vmem>>, vector<1x1x196xf32>
    %144 = vector.shape_cast %143 : vector<1x1x196xf32> to vector<1x196xf32>
    %145 = vector.broadcast %144 : vector<1x196xf32> to vector<8x196xf32>
    %146 = arith.addf %142, %145 : vector<8x196xf32>
    %c6_92 = arith.constant 6 : index
    %c0_93 = arith.constant 0 : index
    %c0_94 = arith.constant 0 : index
    %147 = vector.load %arg15[%c6_92, %c0_93, %c0_94] : memref<11x8x196xf32, #tpu.memory_space<vmem>>, vector<1x8x196xf32>
    %148 = vector.shape_cast %147 : vector<1x8x196xf32> to vector<8x196xf32>
    %149 = vector.shape_cast %146 : vector<8x196xf32> to vector<1x8x196xf32>
    tpu.vector_store %arg15[%c6_92, %c0_93, %c0_94], %149 {strides = array<i32>} : memref<11x8x196xf32, #tpu.memory_space<vmem>>, vector<1x8x196xf32>,
    %150 = arith.maximumf %133, %146 : vector<8x196xf32>
    %151 = arith.subf %133, %150 : vector<8x196xf32>
    %152 = math.exp %151 : vector<8x196xf32>
    %153 = arith.mulf %139, %152 : vector<8x196xf32>
    %154 = arith.subf %146, %150 : vector<8x196xf32>
    %155 = math.exp %154 : vector<8x196xf32>
    %156 = arith.addf %153, %155 : vector<8x196xf32>
    %c7 = arith.constant 7 : index
    %c0_95 = arith.constant 0 : index
    %c0_96 = arith.constant 0 : index
    %157 = vector.load %arg13[%c7, %c0_95, %c0_96] : memref<11x256x196xbf16, #tpu.memory_space<vmem>>, vector<1x256x196xbf16>
    %158 = vector.shape_cast %157 : vector<1x256x196xbf16> to vector<256x196xbf16>
    %cst_97 = arith.constant dense<0.000000e+00> : vector<8x196xf32>
    %159 = tpu.matmul %43, %158, %cst_97 {dimension_numbers = #tpu.dot_dimension_numbers<[1], [0], [0], [1], [0, 0, 1, 1], [], []>} : vector<8x256xbf16>, vector<256x196xbf16>, vector<8x196xf32> -> vector<8x196xf32>
    %c7_98 = arith.constant 7 : index
    %c0_99 = arith.constant 0 : index
    %c0_100 = arith.constant 0 : index
    %160 = vector.load %arg14[%c7_98, %c0_99, %c0_100] : memref<11x1x196xf32, #tpu.memory_space<vmem>>, vector<1x1x196xf32>
    %161 = vector.shape_cast %160 : vector<1x1x196xf32> to vector<1x196xf32>
    %162 = vector.broadcast %161 : vector<1x196xf32> to vector<8x196xf32>
    %163 = arith.addf %159, %162 : vector<8x196xf32>
    %c7_101 = arith.constant 7 : index
    %c0_102 = arith.constant 0 : index
    %c0_103 = arith.constant 0 : index
    %164 = vector.load %arg15[%c7_101, %c0_102, %c0_103] : memref<11x8x196xf32, #tpu.memory_space<vmem>>, vector<1x8x196xf32>
    %165 = vector.shape_cast %164 : vector<1x8x196xf32> to vector<8x196xf32>
    %166 = vector.shape_cast %163 : vector<8x196xf32> to vector<1x8x196xf32>
    tpu.vector_store %arg15[%c7_101, %c0_102, %c0_103], %166 {strides = array<i32>} : memref<11x8x196xf32, #tpu.memory_space<vmem>>, vector<1x8x196xf32>,
    %167 = arith.maximumf %150, %163 : vector<8x196xf32>
    %168 = arith.subf %150, %167 : vector<8x196xf32>
    %169 = math.exp %168 : vector<8x196xf32>
    %170 = arith.mulf %156, %169 : vector<8x196xf32>
    %171 = arith.subf %163, %167 : vector<8x196xf32>
    %172 = math.exp %171 : vector<8x196xf32>
    %173 = arith.addf %170, %172 : vector<8x196xf32>
    %c8 = arith.constant 8 : index
    %c0_104 = arith.constant 0 : index
    %c0_105 = arith.constant 0 : index
    %174 = vector.load %arg13[%c8, %c0_104, %c0_105] : memref<11x256x196xbf16, #tpu.memory_space<vmem>>, vector<1x256x196xbf16>
    %175 = vector.shape_cast %174 : vector<1x256x196xbf16> to vector<256x196xbf16>
    %cst_106 = arith.constant dense<0.000000e+00> : vector<8x196xf32>
    %176 = tpu.matmul %43, %175, %cst_106 {dimension_numbers = #tpu.dot_dimension_numbers<[1], [0], [0], [1], [0, 0, 1, 1], [], []>} : vector<8x256xbf16>, vector<256x196xbf16>, vector<8x196xf32> -> vector<8x196xf32>
    %c8_107 = arith.constant 8 : index
    %c0_108 = arith.constant 0 : index
    %c0_109 = arith.constant 0 : index
    %177 = vector.load %arg14[%c8_107, %c0_108, %c0_109] : memref<11x1x196xf32, #tpu.memory_space<vmem>>, vector<1x1x196xf32>
    %178 = vector.shape_cast %177 : vector<1x1x196xf32> to vector<1x196xf32>
    %179 = vector.broadcast %178 : vector<1x196xf32> to vector<8x196xf32>
    %180 = arith.addf %176, %179 : vector<8x196xf32>
    %c8_110 = arith.constant 8 : index
    %c0_111 = arith.constant 0 : index
    %c0_112 = arith.constant 0 : index
    %181 = vector.load %arg15[%c8_110, %c0_111, %c0_112] : memref<11x8x196xf32, #tpu.memory_space<vmem>>, vector<1x8x196xf32>
    %182 = vector.shape_cast %181 : vector<1x8x196xf32> to vector<8x196xf32>
    %183 = vector.shape_cast %180 : vector<8x196xf32> to vector<1x8x196xf32>
    tpu.vector_store %arg15[%c8_110, %c0_111, %c0_112], %183 {strides = array<i32>} : memref<11x8x196xf32, #tpu.memory_space<vmem>>, vector<1x8x196xf32>,
    %184 = arith.maximumf %167, %180 : vector<8x196xf32>
    %185 = arith.subf %167, %184 : vector<8x196xf32>
    %186 = math.exp %185 : vector<8x196xf32>
    %187 = arith.mulf %173, %186 : vector<8x196xf32>
    %188 = arith.subf %180, %184 : vector<8x196xf32>
    %189 = math.exp %188 : vector<8x196xf32>
    %190 = arith.addf %187, %189 : vector<8x196xf32>
    %c9 = arith.constant 9 : index
    %c0_113 = arith.constant 0 : index
    %c0_114 = arith.constant 0 : index
    %191 = vector.load %arg13[%c9, %c0_113, %c0_114] : memref<11x256x196xbf16, #tpu.memory_space<vmem>>, vector<1x256x196xbf16>
    %192 = vector.shape_cast %191 : vector<1x256x196xbf16> to vector<256x196xbf16>
    %cst_115 = arith.constant dense<0.000000e+00> : vector<8x196xf32>
    %193 = tpu.matmul %43, %192, %cst_115 {dimension_numbers = #tpu.dot_dimension_numbers<[1], [0], [0], [1], [0, 0, 1, 1], [], []>} : vector<8x256xbf16>, vector<256x196xbf16>, vector<8x196xf32> -> vector<8x196xf32>
    %c9_116 = arith.constant 9 : index
    %c0_117 = arith.constant 0 : index
    %c0_118 = arith.constant 0 : index
    %194 = vector.load %arg14[%c9_116, %c0_117, %c0_118] : memref<11x1x196xf32, #tpu.memory_space<vmem>>, vector<1x1x196xf32>
    %195 = vector.shape_cast %194 : vector<1x1x196xf32> to vector<1x196xf32>
    %196 = vector.broadcast %195 : vector<1x196xf32> to vector<8x196xf32>
    %197 = arith.addf %193, %196 : vector<8x196xf32>
    %c9_119 = arith.constant 9 : index
    %c0_120 = arith.constant 0 : index
    %c0_121 = arith.constant 0 : index
    %198 = vector.load %arg15[%c9_119, %c0_120, %c0_121] : memref<11x8x196xf32, #tpu.memory_space<vmem>>, vector<1x8x196xf32>
    %199 = vector.shape_cast %198 : vector<1x8x196xf32> to vector<8x196xf32>
    %200 = vector.shape_cast %197 : vector<8x196xf32> to vector<1x8x196xf32>
    tpu.vector_store %arg15[%c9_119, %c0_120, %c0_121], %200 {strides = array<i32>} : memref<11x8x196xf32, #tpu.memory_space<vmem>>, vector<1x8x196xf32>,
    %201 = arith.maximumf %184, %197 : vector<8x196xf32>
    %202 = arith.subf %184, %201 : vector<8x196xf32>
    %203 = math.exp %202 : vector<8x196xf32>
    %204 = arith.mulf %190, %203 : vector<8x196xf32>
    %205 = arith.subf %197, %201 : vector<8x196xf32>
    %206 = math.exp %205 : vector<8x196xf32>
    %207 = arith.addf %204, %206 : vector<8x196xf32>
    %c10 = arith.constant 10 : index
    %c0_122 = arith.constant 0 : index
    %c0_123 = arith.constant 0 : index
    %208 = vector.load %arg13[%c10, %c0_122, %c0_123] : memref<11x256x196xbf16, #tpu.memory_space<vmem>>, vector<1x256x196xbf16>
    %209 = vector.shape_cast %208 : vector<1x256x196xbf16> to vector<256x196xbf16>
    %cst_124 = arith.constant dense<0.000000e+00> : vector<8x196xf32>
    %210 = tpu.matmul %43, %209, %cst_124 {dimension_numbers = #tpu.dot_dimension_numbers<[1], [0], [0], [1], [0, 0, 1, 1], [], []>} : vector<8x256xbf16>, vector<256x196xbf16>, vector<8x196xf32> -> vector<8x196xf32>
    %c10_125 = arith.constant 10 : index
    %c0_126 = arith.constant 0 : index
    %c0_127 = arith.constant 0 : index
    %211 = vector.load %arg14[%c10_125, %c0_126, %c0_127] : memref<11x1x196xf32, #tpu.memory_space<vmem>>, vector<1x1x196xf32>
    %212 = vector.shape_cast %211 : vector<1x1x196xf32> to vector<1x196xf32>
    %213 = vector.broadcast %212 : vector<1x196xf32> to vector<8x196xf32>
    %214 = arith.addf %210, %213 : vector<8x196xf32>
    %c10_128 = arith.constant 10 : index
    %c0_129 = arith.constant 0 : index
    %c0_130 = arith.constant 0 : index
    %215 = vector.load %arg15[%c10_128, %c0_129, %c0_130] : memref<11x8x196xf32, #tpu.memory_space<vmem>>, vector<1x8x196xf32>
    %216 = vector.shape_cast %215 : vector<1x8x196xf32> to vector<8x196xf32>
    %217 = vector.shape_cast %214 : vector<8x196xf32> to vector<1x8x196xf32>
    tpu.vector_store %arg15[%c10_128, %c0_129, %c0_130], %217 {strides = array<i32>} : memref<11x8x196xf32, #tpu.memory_space<vmem>>, vector<1x8x196xf32>,
    %218 = arith.maximumf %201, %214 : vector<8x196xf32>
    %219 = arith.subf %201, %218 : vector<8x196xf32>
    %220 = math.exp %219 : vector<8x196xf32>
    %221 = arith.mulf %207, %220 : vector<8x196xf32>
    %222 = arith.subf %214, %218 : vector<8x196xf32>
    %223 = math.exp %222 : vector<8x196xf32>
    %224 = arith.addf %221, %223 : vector<8x196xf32>
    %225 = math.log %224 : vector<8x196xf32>
    %226 = arith.addf %218, %225 : vector<8x196xf32>
    %c0_131 = arith.constant 0 : index
    %c0_132 = arith.constant 0 : index
    %c0_133 = arith.constant 0 : index
    %227 = vector.load %arg15[%c0_131, %c0_132, %c0_133] : memref<11x8x196xf32, #tpu.memory_space<vmem>>, vector<1x8x196xf32>
    %228 = vector.shape_cast %227 : vector<1x8x196xf32> to vector<8x196xf32>
    %229 = arith.subf %228, %226 : vector<8x196xf32>
    %c0_134 = arith.constant 0 : index
    %c0_135 = arith.constant 0 : index
    %c0_136 = arith.constant 0 : index
    %230 = vector.load %arg15[%c0_134, %c0_135, %c0_136] : memref<11x8x196xf32, #tpu.memory_space<vmem>>, vector<1x8x196xf32>
    %231 = vector.shape_cast %230 : vector<1x8x196xf32> to vector<8x196xf32>
    %232 = vector.shape_cast %229 : vector<8x196xf32> to vector<1x8x196xf32>
    tpu.vector_store %arg15[%c0_134, %c0_135, %c0_136], %232 {strides = array<i32>} : memref<11x8x196xf32, #tpu.memory_space<vmem>>, vector<1x8x196xf32>,
    %c1_137 = arith.constant 1 : index
    %c0_138 = arith.constant 0 : index
    %c0_139 = arith.constant 0 : index
    %233 = vector.load %arg15[%c1_137, %c0_138, %c0_139] : memref<11x8x196xf32, #tpu.memory_space<vmem>>, vector<1x8x196xf32>
    %234 = vector.shape_cast %233 : vector<1x8x196xf32> to vector<8x196xf32>
    %235 = arith.subf %234, %226 : vector<8x196xf32>
    %c1_140 = arith.constant 1 : index
    %c0_141 = arith.constant 0 : index
    %c0_142 = arith.constant 0 : index
    %236 = vector.load %arg15[%c1_140, %c0_141, %c0_142] : memref<11x8x196xf32, #tpu.memory_space<vmem>>, vector<1x8x196xf32>
    %237 = vector.shape_cast %236 : vector<1x8x196xf32> to vector<8x196xf32>
    %238 = vector.shape_cast %235 : vector<8x196xf32> to vector<1x8x196xf32>
    tpu.vector_store %arg15[%c1_140, %c0_141, %c0_142], %238 {strides = array<i32>} : memref<11x8x196xf32, #tpu.memory_space<vmem>>, vector<1x8x196xf32>,
    %c2_143 = arith.constant 2 : index
    %c0_144 = arith.constant 0 : index
    %c0_145 = arith.constant 0 : index
    %239 = vector.load %arg15[%c2_143, %c0_144, %c0_145] : memref<11x8x196xf32, #tpu.memory_space<vmem>>, vector<1x8x196xf32>
    %240 = vector.shape_cast %239 : vector<1x8x196xf32> to vector<8x196xf32>
    %241 = arith.subf %240, %226 : vector<8x196xf32>
    %c2_146 = arith.constant 2 : index
    %c0_147 = arith.constant 0 : index
    %c0_148 = arith.constant 0 : index
    %242 = vector.load %arg15[%c2_146, %c0_147, %c0_148] : memref<11x8x196xf32, #tpu.memory_space<vmem>>, vector<1x8x196xf32>
    %243 = vector.shape_cast %242 : vector<1x8x196xf32> to vector<8x196xf32>
    %244 = vector.shape_cast %241 : vector<8x196xf32> to vector<1x8x196xf32>
    tpu.vector_store %arg15[%c2_146, %c0_147, %c0_148], %244 {strides = array<i32>} : memref<11x8x196xf32, #tpu.memory_space<vmem>>, vector<1x8x196xf32>,
    %c3_149 = arith.constant 3 : index
    %c0_150 = arith.constant 0 : index
    %c0_151 = arith.constant 0 : index
    %245 = vector.load %arg15[%c3_149, %c0_150, %c0_151] : memref<11x8x196xf32, #tpu.memory_space<vmem>>, vector<1x8x196xf32>
    %246 = vector.shape_cast %245 : vector<1x8x196xf32> to vector<8x196xf32>
    %247 = arith.subf %246, %226 : vector<8x196xf32>
    %c3_152 = arith.constant 3 : index
    %c0_153 = arith.constant 0 : index
    %c0_154 = arith.constant 0 : index
    %248 = vector.load %arg15[%c3_152, %c0_153, %c0_154] : memref<11x8x196xf32, #tpu.memory_space<vmem>>, vector<1x8x196xf32>
    %249 = vector.shape_cast %248 : vector<1x8x196xf32> to vector<8x196xf32>
    %250 = vector.shape_cast %247 : vector<8x196xf32> to vector<1x8x196xf32>
    tpu.vector_store %arg15[%c3_152, %c0_153, %c0_154], %250 {strides = array<i32>} : memref<11x8x196xf32, #tpu.memory_space<vmem>>, vector<1x8x196xf32>,
    %c4_155 = arith.constant 4 : index
    %c0_156 = arith.constant 0 : index
    %c0_157 = arith.constant 0 : index
    %251 = vector.load %arg15[%c4_155, %c0_156, %c0_157] : memref<11x8x196xf32, #tpu.memory_space<vmem>>, vector<1x8x196xf32>
    %252 = vector.shape_cast %251 : vector<1x8x196xf32> to vector<8x196xf32>
    %253 = arith.subf %252, %226 : vector<8x196xf32>
    %c4_158 = arith.constant 4 : index
    %c0_159 = arith.constant 0 : index
    %c0_160 = arith.constant 0 : index
    %254 = vector.load %arg15[%c4_158, %c0_159, %c0_160] : memref<11x8x196xf32, #tpu.memory_space<vmem>>, vector<1x8x196xf32>
    %255 = vector.shape_cast %254 : vector<1x8x196xf32> to vector<8x196xf32>
    %256 = vector.shape_cast %253 : vector<8x196xf32> to vector<1x8x196xf32>
    tpu.vector_store %arg15[%c4_158, %c0_159, %c0_160], %256 {strides = array<i32>} : memref<11x8x196xf32, #tpu.memory_space<vmem>>, vector<1x8x196xf32>,
    %c5_161 = arith.constant 5 : index
    %c0_162 = arith.constant 0 : index
    %c0_163 = arith.constant 0 : index
    %257 = vector.load %arg15[%c5_161, %c0_162, %c0_163] : memref<11x8x196xf32, #tpu.memory_space<vmem>>, vector<1x8x196xf32>
    %258 = vector.shape_cast %257 : vector<1x8x196xf32> to vector<8x196xf32>
    %259 = arith.subf %258, %226 : vector<8x196xf32>
    %c5_164 = arith.constant 5 : index
    %c0_165 = arith.constant 0 : index
    %c0_166 = arith.constant 0 : index
    %260 = vector.load %arg15[%c5_164, %c0_165, %c0_166] : memref<11x8x196xf32, #tpu.memory_space<vmem>>, vector<1x8x196xf32>
    %261 = vector.shape_cast %260 : vector<1x8x196xf32> to vector<8x196xf32>
    %262 = vector.shape_cast %259 : vector<8x196xf32> to vector<1x8x196xf32>
    tpu.vector_store %arg15[%c5_164, %c0_165, %c0_166], %262 {strides = array<i32>} : memref<11x8x196xf32, #tpu.memory_space<vmem>>, vector<1x8x196xf32>,
    %c6_167 = arith.constant 6 : index
    %c0_168 = arith.constant 0 : index
    %c0_169 = arith.constant 0 : index
    %263 = vector.load %arg15[%c6_167, %c0_168, %c0_169] : memref<11x8x196xf32, #tpu.memory_space<vmem>>, vector<1x8x196xf32>
    %264 = vector.shape_cast %263 : vector<1x8x196xf32> to vector<8x196xf32>
    %265 = arith.subf %264, %226 : vector<8x196xf32>
    %c6_170 = arith.constant 6 : index
    %c0_171 = arith.constant 0 : index
    %c0_172 = arith.constant 0 : index
    %266 = vector.load %arg15[%c6_170, %c0_171, %c0_172] : memref<11x8x196xf32, #tpu.memory_space<vmem>>, vector<1x8x196xf32>
    %267 = vector.shape_cast %266 : vector<1x8x196xf32> to vector<8x196xf32>
    %268 = vector.shape_cast %265 : vector<8x196xf32> to vector<1x8x196xf32>
    tpu.vector_store %arg15[%c6_170, %c0_171, %c0_172], %268 {strides = array<i32>} : memref<11x8x196xf32, #tpu.memory_space<vmem>>, vector<1x8x196xf32>,
    %c7_173 = arith.constant 7 : index
    %c0_174 = arith.constant 0 : index
    %c0_175 = arith.constant 0 : index
    %269 = vector.load %arg15[%c7_173, %c0_174, %c0_175] : memref<11x8x196xf32, #tpu.memory_space<vmem>>, vector<1x8x196xf32>
    %270 = vector.shape_cast %269 : vector<1x8x196xf32> to vector<8x196xf32>
    %271 = arith.subf %270, %226 : vector<8x196xf32>
    %c7_176 = arith.constant 7 : index
    %c0_177 = arith.constant 0 : index
    %c0_178 = arith.constant 0 : index
    %272 = vector.load %arg15[%c7_176, %c0_177, %c0_178] : memref<11x8x196xf32, #tpu.memory_space<vmem>>, vector<1x8x196xf32>
    %273 = vector.shape_cast %272 : vector<1x8x196xf32> to vector<8x196xf32>
    %274 = vector.shape_cast %271 : vector<8x196xf32> to vector<1x8x196xf32>
    tpu.vector_store %arg15[%c7_176, %c0_177, %c0_178], %274 {strides = array<i32>} : memref<11x8x196xf32, #tpu.memory_space<vmem>>, vector<1x8x196xf32>,
    %c8_179 = arith.constant 8 : index
    %c0_180 = arith.constant 0 : index
    %c0_181 = arith.constant 0 : index
    %275 = vector.load %arg15[%c8_179, %c0_180, %c0_181] : memref<11x8x196xf32, #tpu.memory_space<vmem>>, vector<1x8x196xf32>
    %276 = vector.shape_cast %275 : vector<1x8x196xf32> to vector<8x196xf32>
    %277 = arith.subf %276, %226 : vector<8x196xf32>
    %c8_182 = arith.constant 8 : index
    %c0_183 = arith.constant 0 : index
    %c0_184 = arith.constant 0 : index
    %278 = vector.load %arg15[%c8_182, %c0_183, %c0_184] : memref<11x8x196xf32, #tpu.memory_space<vmem>>, vector<1x8x196xf32>
    %279 = vector.shape_cast %278 : vector<1x8x196xf32> to vector<8x196xf32>
    %280 = vector.shape_cast %277 : vector<8x196xf32> to vector<1x8x196xf32>
    tpu.vector_store %arg15[%c8_182, %c0_183, %c0_184], %280 {strides = array<i32>} : memref<11x8x196xf32, #tpu.memory_space<vmem>>, vector<1x8x196xf32>,
    %c9_185 = arith.constant 9 : index
    %c0_186 = arith.constant 0 : index
    %c0_187 = arith.constant 0 : index
    %281 = vector.load %arg15[%c9_185, %c0_186, %c0_187] : memref<11x8x196xf32, #tpu.memory_space<vmem>>, vector<1x8x196xf32>
    %282 = vector.shape_cast %281 : vector<1x8x196xf32> to vector<8x196xf32>
    %283 = arith.subf %282, %226 : vector<8x196xf32>
    %c9_188 = arith.constant 9 : index
    %c0_189 = arith.constant 0 : index
    %c0_190 = arith.constant 0 : index
    %284 = vector.load %arg15[%c9_188, %c0_189, %c0_190] : memref<11x8x196xf32, #tpu.memory_space<vmem>>, vector<1x8x196xf32>
    %285 = vector.shape_cast %284 : vector<1x8x196xf32> to vector<8x196xf32>
    %286 = vector.shape_cast %283 : vector<8x196xf32> to vector<1x8x196xf32>
    tpu.vector_store %arg15[%c9_188, %c0_189, %c0_190], %286 {strides = array<i32>} : memref<11x8x196xf32, #tpu.memory_space<vmem>>, vector<1x8x196xf32>,
    %c10_191 = arith.constant 10 : index
    %c0_192 = arith.constant 0 : index
    %c0_193 = arith.constant 0 : index
    %287 = vector.load %arg15[%c10_191, %c0_192, %c0_193] : memref<11x8x196xf32, #tpu.memory_space<vmem>>, vector<1x8x196xf32>
    %288 = vector.shape_cast %287 : vector<1x8x196xf32> to vector<8x196xf32>
    %289 = arith.subf %288, %226 : vector<8x196xf32>
    %c10_194 = arith.constant 10 : index
    %c0_195 = arith.constant 0 : index
    %c0_196 = arith.constant 0 : index
    %290 = vector.load %arg15[%c10_194, %c0_195, %c0_196] : memref<11x8x196xf32, #tpu.memory_space<vmem>>, vector<1x8x196xf32>
    %291 = vector.shape_cast %290 : vector<1x8x196xf32> to vector<8x196xf32>
    %292 = vector.shape_cast %289 : vector<8x196xf32> to vector<1x8x196xf32>
    tpu.vector_store %arg15[%c10_194, %c0_195, %c0_196], %292 {strides = array<i32>} : memref<11x8x196xf32, #tpu.memory_space<vmem>>, vector<1x8x196xf32>,
    return
  }
  func.func @transform_0(%arg0: i32) -> (i32, i32) {
    %c0_i32 = arith.constant 0 : i32
    %c0_i32_0 = arith.constant 0 : i32
    return %arg0, %c0_i32 : i32, i32
  }
  func.func @transform_1(%arg0: i32) -> (i32, i32) {
    %c0_i32 = arith.constant 0 : i32
    %c0_i32_0 = arith.constant 0 : i32
    return %arg0, %c0_i32 : i32, i32
  }
  func.func @transform_2(%arg0: i32) -> (i32, i32) {
    %c0_i32 = arith.constant 0 : i32
    %c0_i32_0 = arith.constant 0 : i32
    %c0_i32_1 = arith.constant 0 : i32
    return %c0_i32, %c0_i32_0 : i32, i32
  }
  func.func @transform_3(%arg0: i32) -> (i32, i32) {
    %c0_i32 = arith.constant 0 : i32
    %c0_i32_0 = arith.constant 0 : i32
    %c0_i32_1 = arith.constant 0 : i32
    return %c0_i32, %c0_i32_0 : i32, i32
  }
  func.func @transform_4(%arg0: i32) -> (i32, i32) {
    %c0_i32 = arith.constant 0 : i32
    %c0_i32_0 = arith.constant 0 : i32
    %c0_i32_1 = arith.constant 0 : i32
    return %c0_i32, %c0_i32_0 : i32, i32
  }
  func.func @transform_5(%arg0: i32) -> (i32, i32) {
    %c0_i32 = arith.constant 0 : i32
    %c0_i32_0 = arith.constant 0 : i32
    %c0_i32_1 = arith.constant 0 : i32
    return %c0_i32, %c0_i32_0 : i32, i32
  }
  func.func @transform_6(%arg0: i32) -> (i32, i32) {
    %c0_i32 = arith.constant 0 : i32
    %c0_i32_0 = arith.constant 0 : i32
    %c0_i32_1 = arith.constant 0 : i32
    return %c0_i32, %c0_i32_0 : i32, i32
  }
  func.func @transform_7(%arg0: i32) -> (i32, i32) {
    %c0_i32 = arith.constant 0 : i32
    %c0_i32_0 = arith.constant 0 : i32
    %c0_i32_1 = arith.constant 0 : i32
    return %c0_i32, %c0_i32_0 : i32, i32
  }
  func.func @transform_8(%arg0: i32) -> (i32, i32) {
    %c0_i32 = arith.constant 0 : i32
    %c0_i32_0 = arith.constant 0 : i32
    %c0_i32_1 = arith.constant 0 : i32
    return %c0_i32, %c0_i32_0 : i32, i32
  }
  func.func @transform_9(%arg0: i32) -> (i32, i32) {
    %c0_i32 = arith.constant 0 : i32
    %c0_i32_0 = arith.constant 0 : i32
    %c0_i32_1 = arith.constant 0 : i32
    return %c0_i32, %c0_i32_0 : i32, i32
  }
  func.func @transform_10(%arg0: i32) -> (i32, i32) {
    %c0_i32 = arith.constant 0 : i32
    %c0_i32_0 = arith.constant 0 : i32
    %c0_i32_1 = arith.constant 0 : i32
    return %c0_i32, %c0_i32_0 : i32, i32
  }
  func.func @transform_11(%arg0: i32) -> (i32, i32) {
    %c0_i32 = arith.constant 0 : i32
    %c0_i32_0 = arith.constant 0 : i32
    %c0_i32_1 = arith.constant 0 : i32
    return %c0_i32, %c0_i32_0 : i32, i32
  }
  func.func @transform_12(%arg0: i32) -> (i32, i32, i32) {
    %c0_i32 = arith.constant 0 : i32
    %c0_i32_0 = arith.constant 0 : i32
    %c0_i32_1 = arith.constant 0 : i32
    %c0_i32_2 = arith.constant 0 : i32
    return %c0_i32, %c0_i32_0, %c0_i32_1 : i32, i32, i32
  }
  func.func @transform_13(%arg0: i32) -> (i32, i32, i32) {
    %c0_i32 = arith.constant 0 : i32
    %c0_i32_0 = arith.constant 0 : i32
    %c0_i32_1 = arith.constant 0 : i32
    %c0_i32_2 = arith.constant 0 : i32
    return %c0_i32, %c0_i32_0, %c0_i32_1 : i32, i32, i32
  }
  func.func @transform_14(%arg0: i32) -> (i32, i32, i32) {
    %c0_i32 = arith.constant 0 : i32
    %c0_i32_0 = arith.constant 0 : i32
    %c0_i32_1 = arith.constant 0 : i32
    return %c0_i32, %arg0, %c0_i32_0 : i32, i32, i32
  }
  func.func @transform_15(%arg0: i32) -> (i32, i32) {
    %c0_i32 = arith.constant 0 : i32
    %c0_i32_0 = arith.constant 0 : i32
    return %arg0, %c0_i32 : i32, i32
  }
}

</mosaic_0001>

<llo_original>
// kernel: vae_mario_forward.1
$region0: #{vae_mario_forward.1}
  #allocation0 [shape = 'u32[]', space=smem, size = 0x4, offset = 0x4, fixed_abs, tag = 'smem constant byte address 0x4 - core index']
  #allocation1 [shape = 'u32[144,128]{1,0:T(1,128)}', space=vmem, size = 0x12000, scoped, tag = 'internal scratch']
  %s0 = inlined_call_operand.vmem [shape: bf16[8,2176], index: 0, kind: input, shape index: {}]
  %s1 = inlined_call_operand.vmem [shape: f32[8,32], index: 1, kind: input, shape index: {}]
  %s2 = inlined_call_operand.vmem [shape: bf16[2176,256], index: 2, kind: input, shape index: {}]
  %s3 = inlined_call_operand.vmem [shape: f32[1,256], index: 3, kind: input, shape index: {}]
  %s4 = inlined_call_operand.vmem [shape: bf16[256,128], index: 4, kind: input, shape index: {}]
  %s5 = inlined_call_operand.vmem [shape: f32[1,128], index: 5, kind: input, shape index: {}]
  %s6 = inlined_call_operand.vmem [shape: bf16[128,64], index: 6, kind: input, shape index: {}]
  %s7 = inlined_call_operand.vmem [shape: f32[1,64], index: 7, kind: input, shape index: {}]
  %s8 = inlined_call_operand.vmem [shape: bf16[32,128], index: 8, kind: input, shape index: {}]
  %s9 = inlined_call_operand.vmem [shape: f32[1,128], index: 9, kind: input, shape index: {}]
  %s10 = inlined_call_operand.vmem [shape: bf16[128,256], index: 10, kind: input, shape index: {}]
  %s11 = inlined_call_operand.vmem [shape: f32[1,256], index: 11, kind: input, shape index: {}]
  %s12 = inlined_call_operand.vmem [shape: bf16[11,256,196], index: 12, kind: input, shape index: {}]
  %s13 = inlined_call_operand.vmem [shape: f32[11,1,196], index: 13, kind: input, shape index: {}]
  %s14 = inlined_call_operand.vmem [shape: f32[11,8,196], index: 14, kind: output, shape index: {0}]
  %s15 = inlined_call_operand.vmem [shape: f32[8,64], index: 15, kind: output, shape index: {1}]
  %16 = xla_tuple %s14, %s15
  %s17 = sld [smem:[#allocation0]]
  $region74: #{vae_mario_forward.1} parent=0
    _
  %s19 = ssub.s32 1, %s17
  %s20 = scalar_select 0, %s19, %s17
  // Predicated region
  $region2: #{vae_mario_forward.1} parent=0 // pred_check
    _
  $region3: #{vae_mario_forward.1} parent=0 // pred_check_branch
    %22 = sbr.rel (0) target = $region5
  $region4: #{vae_mario_forward.1} parent=0 // pred_region
    _
  $region5: #{vae_mario_forward.1} parent=0 // pred_fallthru
    _
  // Predicated region
  $region6: #{vae_mario_forward.1} parent=0 // pred_check
    _
  $region7: #{vae_mario_forward.1} parent=0 // pred_check_branch
    %24 = sbr.rel (0) target = $region9
  $region8: #{vae_mario_forward.1} parent=0 // pred_region
    _
  $region9: #{vae_mario_forward.1} parent=0 // pred_fallthru
    _
  // Predicated region
  $region10: #{vae_mario_forward.1} parent=0 // pred_check
    _
  $region11: #{vae_mario_forward.1} parent=0 // pred_check_branch
    %26 = sbr.rel (0) target = $region13
  $region12: #{vae_mario_forward.1} parent=0 // pred_region
    _
  $region13: #{vae_mario_forward.1} parent=0 // pred_fallthru
    _
  // Predicated region
  $region14: #{vae_mario_forward.1} parent=0 // pred_check
    _
  $region15: #{vae_mario_forward.1} parent=0 // pred_check_branch
    %28 = sbr.rel (0) target = $region17
  $region16: #{vae_mario_forward.1} parent=0 // pred_region
    _
  $region17: #{vae_mario_forward.1} parent=0 // pred_fallthru
    _
  // Predicated region
  $region18: #{vae_mario_forward.1} parent=0 // pred_check
    _
  $region19: #{vae_mario_forward.1} parent=0 // pred_check_branch
    %30 = sbr.rel (0) target = $region21
  $region20: #{vae_mario_forward.1} parent=0 // pred_region
    _
  $region21: #{vae_mario_forward.1} parent=0 // pred_fallthru
    _
  // Predicated region
  $region22: #{vae_mario_forward.1} parent=0 // pred_check
    _
  $region23: #{vae_mario_forward.1} parent=0 // pred_check_branch
    %32 = sbr.rel (0) target = $region25
  $region24: #{vae_mario_forward.1} parent=0 // pred_region
    _
  $region25: #{vae_mario_forward.1} parent=0 // pred_fallthru
    _
  // Predicated region
  $region26: #{vae_mario_forward.1} parent=0 // pred_check
    _
  $region27: #{vae_mario_forward.1} parent=0 // pred_check_branch
    %34 = sbr.rel (0) target = $region29
  $region28: #{vae_mario_forward.1} parent=0 // pred_region
    _
  $region29: #{vae_mario_forward.1} parent=0 // pred_fallthru
    _
  // Predicated region
  $region30: #{vae_mario_forward.1} parent=0 // pred_check
    _
  $region31: #{vae_mario_forward.1} parent=0 // pred_check_branch
    %36 = sbr.rel (0) target = $region33
  $region32: #{vae_mario_forward.1} parent=0 // pred_region
    _
  $region33: #{vae_mario_forward.1} parent=0 // pred_fallthru
    _
  // Predicated region
  $region34: #{vae_mario_forward.1} parent=0 // pred_check
    _
  $region35: #{vae_mario_forward.1} parent=0 // pred_check_branch
    %38 = sbr.rel (0) target = $region37
  $region36: #{vae_mario_forward.1} parent=0 // pred_region
    _
  $region37: #{vae_mario_forward.1} parent=0 // pred_fallthru
    _
  // Predicated region
  $region38: #{vae_mario_forward.1} parent=0 // pred_check
    _
  $region39: #{vae_mario_forward.1} parent=0 // pred_check_branch
    %40 = sbr.rel (0) target = $region41
  $region40: #{vae_mario_forward.1} parent=0 // pred_region
    _
  $region41: #{vae_mario_forward.1} parent=0 // pred_fallthru
    _
  // Predicated region
  $region42: #{vae_mario_forward.1} parent=0 // pred_check
    _
  $region43: #{vae_mario_forward.1} parent=0 // pred_check_branch
    %42 = sbr.rel (0) target = $region45
  $region44: #{vae_mario_forward.1} parent=0 // pred_region
    _
  $region45: #{vae_mario_forward.1} parent=0 // pred_fallthru
    _
  // Predicated region
  $region46: #{vae_mario_forward.1} parent=0 // pred_check
    _
  $region47: #{vae_mario_forward.1} parent=0 // pred_check_branch
    %44 = sbr.rel (0) target = $region49
  $region48: #{vae_mario_forward.1} parent=0 // pred_region
    _
  $region49: #{vae_mario_forward.1} parent=0 // pred_fallthru
    _
  // Predicated region
  $region50: #{vae_mario_forward.1} parent=0 // pred_check
    _
  $region51: #{vae_mario_forward.1} parent=0 // pred_check_branch
    %46 = sbr.rel (0) target = $region53
  $region52: #{vae_mario_forward.1} parent=0 // pred_region
    _
  $region53: #{vae_mario_forward.1} parent=0 // pred_fallthru
    _
  // Predicated region
  $region54: #{vae_mario_forward.1} parent=0 // pred_check
    _
  $region55: #{vae_mario_forward.1} parent=0 // pred_check_branch
    %48 = sbr.rel (0) target = $region57
  $region56: #{vae_mario_forward.1} parent=0 // pred_region
    _
  $region57: #{vae_mario_forward.1} parent=0 // pred_fallthru
    _
  %v50 = vld [vmem:[%s0] sm:$0xff]
  %v51 = vld [vmem:[%s0 + $0x8] sm:$0xff]
  %v52 = vld [vmem:[%s0 + $0x10] sm:$0xff]
  %v53 = vld [vmem:[%s0 + $0x18] sm:$0xff]
  %v54 = vld [vmem:[%s0 + $0x20] sm:$0xff]
  %v55 = vld [vmem:[%s0 + $0x28] sm:$0xff]
  %v56 = vld [vmem:[%s0 + $0x30] sm:$0xff]
  %v57 = vld [vmem:[%s0 + $0x38] sm:$0xff]
  %v58 = vld [vmem:[%s0 + $0x40] sm:$0xf]
  %v59 = vld [vmem:[%s2] sm:$0xff]
  %v60 = vld [vmem:[%s2 + $0x8] sm:$0xff]
  %v61 = vld [vmem:[%s2 + $0x10] sm:$0xff]
  %v62 = vld [vmem:[%s2 + $0x18] sm:$0xff]
  %v63 = vld [vmem:[%s2 + $0x20] sm:$0xff]
  %v64 = vld [vmem:[%s2 + $0x28] sm:$0xff]
  %v65 = vld [vmem:[%s2 + $0x30] sm:$0xff]
  %v66 = vld [vmem:[%s2 + $0x38] sm:$0xff]
  %v67 = vld [vmem:[%s2 + $0x40] sm:$0xff]
  %v68 = vld [vmem:[%s2 + $0x48] sm:$0xff]
  %v69 = vld [vmem:[%s2 + $0x50] sm:$0xff]
  %v70 = vld [vmem:[%s2 + $0x58] sm:$0xff]
  %v71 = vld [vmem:[%s2 + $0x60] sm:$0xff]
  %v72 = vld [vmem:[%s2 + $0x68] sm:$0xff]
  %v73 = vld [vmem:[%s2 + $0x70] sm:$0xff]
  %v74 = vld [vmem:[%s2 + $0x78] sm:$0xff]
  %v75 = vld [vmem:[%s2 + $0x80] sm:$0xff]
  %v76 = vld [vmem:[%s2 + $0x88] sm:$0xff]
  %v77 = vld [vmem:[%s2 + $0x90] sm:$0xff]
  %v78 = vld [vmem:[%s2 + $0x98] sm:$0xff]
  %v79 = vld [vmem:[%s2 + $0xa0] sm:$0xff]
  %v80 = vld [vmem:[%s2 + $0xa8] sm:$0xff]
  %v81 = vld [vmem:[%s2 + $0xb0] sm:$0xff]
  %v82 = vld [vmem:[%s2 + $0xb8] sm:$0xff]
  %v83 = vld [vmem:[%s2 + $0xc0] sm:$0xff]
  %v84 = vld [vmem:[%s2 + $0xc8] sm:$0xff]
  %v85 = vld [vmem:[%s2 + $0xd0] sm:$0xff]
  %v86 = vld [vmem:[%s2 + $0xd8] sm:$0xff]
  %v87 = vld [vmem:[%s2 + $0xe0] sm:$0xff]
  %v88 = vld [vmem:[%s2 + $0xe8] sm:$0xff]
  %v89 = vld [vmem:[%s2 + $0xf0] sm:$0xff]
  %v90 = vld [vmem:[%s2 + $0xf8] sm:$0xff]
  %v91 = vld [vmem:[%s2 + $0x100] sm:$0xff]
  %v92 = vld [vmem:[%s2 + $0x108] sm:$0xff]
  %v93 = vld [vmem:[%s2 + $0x110] sm:$0xff]
  %v94 = vld [vmem:[%s2 + $0x118] sm:$0xff]
  %v95 = vld [vmem:[%s2 + $0x120] sm:$0xff]
  %v96 = vld [vmem:[%s2 + $0x128] sm:$0xff]
  %v97 = vld [vmem:[%s2 + $0x130] sm:$0xff]
  %v98 = vld [vmem:[%s2 + $0x138] sm:$0xff]
  %v99 = vld [vmem:[%s2 + $0x140] sm:$0xff]
  %v100 = vld [vmem:[%s2 + $0x148] sm:$0xff]
  %v101 = vld [vmem:[%s2 + $0x150] sm:$0xff]
  %v102 = vld [vmem:[%s2 + $0x158] sm:$0xff]
  %v103 = vld [vmem:[%s2 + $0x160] sm:$0xff]
  %v104 = vld [vmem:[%s2 + $0x168] sm:$0xff]
  %v105 = vld [vmem:[%s2 + $0x170] sm:$0xff]
  %v106 = vld [vmem:[%s2 + $0x178] sm:$0xff]
  %v107 = vld [vmem:[%s2 + $0x180] sm:$0xff]
  %v108 = vld [vmem:[%s2 + $0x188] sm:$0xff]
  %v109 = vld [vmem:[%s2 + $0x190] sm:$0xff]
  %v110 = vld [vmem:[%s2 + $0x198] sm:$0xff]
  %v111 = vld [vmem:[%s2 + $0x1a0] sm:$0xff]
  %v112 = vld [vmem:[%s2 + $0x1a8] sm:$0xff]
  %v113 = vld [vmem:[%s2 + $0x1b0] sm:$0xff]
  %v114 = vld [vmem:[%s2 + $0x1b8] sm:$0xff]
  %v115 = vld [vmem:[%s2 + $0x1c0] sm:$0xff]
  %v116 = vld [vmem:[%s2 + $0x1c8] sm:$0xff]
  %v117 = vld [vmem:[%s2 + $0x1d0] sm:$0xff]
  %v118 = vld [vmem:[%s2 + $0x1d8] sm:$0xff]
  %v119 = vld [vmem:[%s2 + $0x1e0] sm:$0xff]
  %v120 = vld [vmem:[%s2 + $0x1e8] sm:$0xff]
  %v121 = vld [vmem:[%s2 + $0x1f0] sm:$0xff]
  %v122 = vld [vmem:[%s2 + $0x1f8] sm:$0xff]
  %v123 = vld [vmem:[%s2 + $0x200] sm:$0xff]
  %v124 = vld [vmem:[%s2 + $0x208] sm:$0xff]
  %v125 = vld [vmem:[%s2 + $0x210] sm:$0xff]
  %v126 = vld [vmem:[%s2 + $0x218] sm:$0xff]
  %v127 = vld [vmem:[%s2 + $0x220] sm:$0xff]
  %v128 = vld [vmem:[%s2 + $0x228] sm:$0xff]
  %v129 = vld [vmem:[%s2 + $0x230] sm:$0xff]
  %v130 = vld [vmem:[%s2 + $0x238] sm:$0xff]
  %v131 = vld [vmem:[%s2 + $0x240] sm:$0xff]
  %v132 = vld [vmem:[%s2 + $0x248] sm:$0xff]
  %v133 = vld [vmem:[%s2 + $0x250] sm:$0xff]
  %v134 = vld [vmem:[%s2 + $0x258] sm:$0xff]
  %v135 = vld [vmem:[%s2 + $0x260] sm:$0xff]
  %v136 = vld [vmem:[%s2 + $0x268] sm:$0xff]
  %v137 = vld [vmem:[%s2 + $0x270] sm:$0xff]
  %v138 = vld [vmem:[%s2 + $0x278] sm:$0xff]
  %v139 = vld [vmem:[%s2 + $0x280] sm:$0xff]
  %v140 = vld [vmem:[%s2 + $0x288] sm:$0xff]
  %v141 = vld [vmem:[%s2 + $0x290] sm:$0xff]
  %v142 = vld [vmem:[%s2 + $0x298] sm:$0xff]
  %v143 = vld [vmem:[%s2 + $0x2a0] sm:$0xff]
  %v144 = vld [vmem:[%s2 + $0x2a8] sm:$0xff]
  %v145 = vld [vmem:[%s2 + $0x2b0] sm:$0xff]
  %v146 = vld [vmem:[%s2 + $0x2b8] sm:$0xff]
  %v147 = vld [vmem:[%s2 + $0x2c0] sm:$0xff]
  %v148 = vld [vmem:[%s2 + $0x2c8] sm:$0xff]
  %v149 = vld [vmem:[%s2 + $0x2d0] sm:$0xff]
  %v150 = vld [vmem:[%s2 + $0x2d8] sm:$0xff]
  %v151 = vld [vmem:[%s2 + $0x2e0] sm:$0xff]
  %v152 = vld [vmem:[%s2 + $0x2e8] sm:$0xff]
  %v153 = vld [vmem:[%s2 + $0x2f0] sm:$0xff]
  %v154 = vld [vmem:[%s2 + $0x2f8] sm:$0xff]
  %v155 = vld [vmem:[%s2 + $0x300] sm:$0xff]
  %v156 = vld [vmem:[%s2 + $0x308] sm:$0xff]
  %v157 = vld [vmem:[%s2 + $0x310] sm:$0xff]
  %v158 = vld [vmem:[%s2 + $0x318] sm:$0xff]
  %v159 = vld [vmem:[%s2 + $0x320] sm:$0xff]
  %v160 = vld [vmem:[%s2 + $0x328] sm:$0xff]
  %v161 = vld [vmem:[%s2 + $0x330] sm:$0xff]
  %v162 = vld [vmem:[%s2 + $0x338] sm:$0xff]
  %v163 = vld [vmem:[%s2 + $0x340] sm:$0xff]
  %v164 = vld [vmem:[%s2 + $0x348] sm:$0xff]
  %v165 = vld [vmem:[%s2 + $0x350] sm:$0xff]
  %v166 = vld [vmem:[%s2 + $0x358] sm:$0xff]
  %v167 = vld [vmem:[%s2 + $0x360] sm:$0xff]
  %v168 = vld [vmem:[%s2 + $0x368] sm:$0xff]
  %v169 = vld [vmem:[%s2 + $0x370] sm:$0xff]
  %v170 = vld [vmem:[%s2 + $0x378] sm:$0xff]
  %v171 = vld [vmem:[%s2 + $0x380] sm:$0xff]
  %v172 = vld [vmem:[%s2 + $0x388] sm:$0xff]
  %v173 = vld [vmem:[%s2 + $0x390] sm:$0xff]
  %v174 = vld [vmem:[%s2 + $0x398] sm:$0xff]
  %v175 = vld [vmem:[%s2 + $0x3a0] sm:$0xff]
  %v176 = vld [vmem:[%s2 + $0x3a8] sm:$0xff]
  %v177 = vld [vmem:[%s2 + $0x3b0] sm:$0xff]
  %v178 = vld [vmem:[%s2 + $0x3b8] sm:$0xff]
  %v179 = vld [vmem:[%s2 + $0x3c0] sm:$0xff]
  %v180 = vld [vmem:[%s2 + $0x3c8] sm:$0xff]
  %v181 = vld [vmem:[%s2 + $0x3d0] sm:$0xff]
  %v182 = vld [vmem:[%s2 + $0x3d8] sm:$0xff]
  %v183 = vld [vmem:[%s2 + $0x3e0] sm:$0xff]
  %v184 = vld [vmem:[%s2 + $0x3e8] sm:$0xff]
  %v185 = vld [vmem:[%s2 + $0x3f0] sm:$0xff]
  %v186 = vld [vmem:[%s2 + $0x3f8] sm:$0xff]
  %v187 = vld [vmem:[%s2 + $0x400] sm:$0xff]
  %v188 = vld [vmem:[%s2 + $0x408] sm:$0xff]
  %v189 = vld [vmem:[%s2 + $0x410] sm:$0xff]
  %v190 = vld [vmem:[%s2 + $0x418] sm:$0xff]
  %v191 = vld [vmem:[%s2 + $0x420] sm:$0xff]
  %v192 = vld [vmem:[%s2 + $0x428] sm:$0xff]
  %v193 = vld [vmem:[%s2 + $0x430] sm:$0xff]
  %v194 = vld [vmem:[%s2 + $0x438] sm:$0xff]
  %v195 = vld [vmem:[%s2 + $0x440] sm:$0xff]
  %v196 = vld [vmem:[%s2 + $0x448] sm:$0xff]
  %v197 = vld [vmem:[%s2 + $0x450] sm:$0xff]
  %v198 = vld [vmem:[%s2 + $0x458] sm:$0xff]
  %v199 = vld [vmem:[%s2 + $0x460] sm:$0xff]
  %v200 = vld [vmem:[%s2 + $0x468] sm:$0xff]
  %v201 = vld [vmem:[%s2 + $0x470] sm:$0xff]
  %v202 = vld [vmem:[%s2 + $0x478] sm:$0xff]
  %v203 = vld [vmem:[%s2 + $0x480] sm:$0xff]
  %v204 = vld [vmem:[%s2 + $0x488] sm:$0xff]
  %v205 = vld [vmem:[%s2 + $0x490] sm:$0xff]
  %v206 = vld [vmem:[%s2 + $0x498] sm:$0xff]
  %v207 = vld [vmem:[%s2 + $0x4a0] sm:$0xff]
  %v208 = vld [vmem:[%s2 + $0x4a8] sm:$0xff]
  %v209 = vld [vmem:[%s2 + $0x4b0] sm:$0xff]
  %v210 = vld [vmem:[%s2 + $0x4b8] sm:$0xff]
  %v211 = vld [vmem:[%s2 + $0x4c0] sm:$0xff]
  %v212 = vld [vmem:[%s2 + $0x4c8] sm:$0xff]
  %v213 = vld [vmem:[%s2 + $0x4d0] sm:$0xff]
  %v214 = vld [vmem:[%s2 + $0x4d8] sm:$0xff]
  %v215 = vld [vmem:[%s2 + $0x4e0] sm:$0xff]
  %v216 = vld [vmem:[%s2 + $0x4e8] sm:$0xff]
  %v217 = vld [vmem:[%s2 + $0x4f0] sm:$0xff]
  %v218 = vld [vmem:[%s2 + $0x4f8] sm:$0xff]
  %v219 = vld [vmem:[%s2 + $0x500] sm:$0xff]
  %v220 = vld [vmem:[%s2 + $0x508] sm:$0xff]
  %v221 = vld [vmem:[%s2 + $0x510] sm:$0xff]
  %v222 = vld [vmem:[%s2 + $0x518] sm:$0xff]
  %v223 = vld [vmem:[%s2 + $0x520] sm:$0xff]
  %v224 = vld [vmem:[%s2 + $0x528] sm:$0xff]
  %v225 = vld [vmem:[%s2 + $0x530] sm:$0xff]
  %v226 = vld [vmem:[%s2 + $0x538] sm:$0xff]
  %v227 = vld [vmem:[%s2 + $0x540] sm:$0xff]
  %v228 = vld [vmem:[%s2 + $0x548] sm:$0xff]
  %v229 = vld [vmem:[%s2 + $0x550] sm:$0xff]
  %v230 = vld [vmem:[%s2 + $0x558] sm:$0xff]
  %v231 = vld [vmem:[%s2 + $0x560] sm:$0xff]
  %v232 = vld [vmem:[%s2 + $0x568] sm:$0xff]
  %v233 = vld [vmem:[%s2 + $0x570] sm:$0xff]
  %v234 = vld [vmem:[%s2 + $0x578] sm:$0xff]
  %v235 = vld [vmem:[%s2 + $0x580] sm:$0xff]
  %v236 = vld [vmem:[%s2 + $0x588] sm:$0xff]
  %v237 = vld [vmem:[%s2 + $0x590] sm:$0xff]
  %v238 = vld [vmem:[%s2 + $0x598] sm:$0xff]
  %v239 = vld [vmem:[%s2 + $0x5a0] sm:$0xff]
  %v240 = vld [vmem:[%s2 + $0x5a8] sm:$0xff]
  %v241 = vld [vmem:[%s2 + $0x5b0] sm:$0xff]
  %v242 = vld [vmem:[%s2 + $0x5b8] sm:$0xff]
  %v243 = vld [vmem:[%s2 + $0x5c0] sm:$0xff]
  %v244 = vld [vmem:[%s2 + $0x5c8] sm:$0xff]
  %v245 = vld [vmem:[%s2 + $0x5d0] sm:$0xff]
  %v246 = vld [vmem:[%s2 + $0x5d8] sm:$0xff]
  %v247 = vld [vmem:[%s2 + $0x5e0] sm:$0xff]
  %v248 = vld [vmem:[%s2 + $0x5e8] sm:$0xff]
  %v249 = vld [vmem:[%s2 + $0x5f0] sm:$0xff]
  %v250 = vld [vmem:[%s2 + $0x5f8] sm:$0xff]
  %v251 = vld [vmem:[%s2 + $0x600] sm:$0xff]
  %v252 = vld [vmem:[%s2 + $0x608] sm:$0xff]
  %v253 = vld [vmem:[%s2 + $0x610] sm:$0xff]
  %v254 = vld [vmem:[%s2 + $0x618] sm:$0xff]
  %v255 = vld [vmem:[%s2 + $0x620] sm:$0xff]
  %v256 = vld [vmem:[%s2 + $0x628] sm:$0xff]
  %v257 = vld [vmem:[%s2 + $0x630] sm:$0xff]
  %v258 = vld [vmem:[%s2 + $0x638] sm:$0xff]
  %v259 = vld [vmem:[%s2 + $0x640] sm:$0xff]
  %v260 = vld [vmem:[%s2 + $0x648] sm:$0xff]
  %v261 = vld [vmem:[%s2 + $0x650] sm:$0xff]
  %v262 = vld [vmem:[%s2 + $0x658] sm:$0xff]
  %v263 = vld [vmem:[%s2 + $0x660] sm:$0xff]
  %v264 = vld [vmem:[%s2 + $0x668] sm:$0xff]
  %v265 = vld [vmem:[%s2 + $0x670] sm:$0xff]
  %v266 = vld [vmem:[%s2 + $0x678] sm:$0xff]
  %v267 = vld [vmem:[%s2 + $0x680] sm:$0xff]
  %v268 = vld [vmem:[%s2 + $0x688] sm:$0xff]
  %v269 = vld [vmem:[%s2 + $0x690] sm:$0xff]
  %v270 = vld [vmem:[%s2 + $0x698] sm:$0xff]
  %v271 = vld [vmem:[%s2 + $0x6a0] sm:$0xff]
  %v272 = vld [vmem:[%s2 + $0x6a8] sm:$0xff]
  %v273 = vld [vmem:[%s2 + $0x6b0] sm:$0xff]
  %v274 = vld [vmem:[%s2 + $0x6b8] sm:$0xff]
  %v275 = vld [vmem:[%s2 + $0x6c0] sm:$0xff]
  %v276 = vld [vmem:[%s2 + $0x6c8] sm:$0xff]
  %v277 = vld [vmem:[%s2 + $0x6d0] sm:$0xff]
  %v278 = vld [vmem:[%s2 + $0x6d8] sm:$0xff]
  %v279 = vld [vmem:[%s2 + $0x6e0] sm:$0xff]
  %v280 = vld [vmem:[%s2 + $0x6e8] sm:$0xff]
  %v281 = vld [vmem:[%s2 + $0x6f0] sm:$0xff]
  %v282 = vld [vmem:[%s2 + $0x6f8] sm:$0xff]
  %v283 = vld [vmem:[%s2 + $0x700] sm:$0xff]
  %v284 = vld [vmem:[%s2 + $0x708] sm:$0xff]
  %v285 = vld [vmem:[%s2 + $0x710] sm:$0xff]
  %v286 = vld [vmem:[%s2 + $0x718] sm:$0xff]
  %v287 = vld [vmem:[%s2 + $0x720] sm:$0xff]
  %v288 = vld [vmem:[%s2 + $0x728] sm:$0xff]
  %v289 = vld [vmem:[%s2 + $0x730] sm:$0xff]
  %v290 = vld [vmem:[%s2 + $0x738] sm:$0xff]
  %v291 = vld [vmem:[%s2 + $0x740] sm:$0xff]
  %v292 = vld [vmem:[%s2 + $0x748] sm:$0xff]
  %v293 = vld [vmem:[%s2 + $0x750] sm:$0xff]
  %v294 = vld [vmem:[%s2 + $0x758] sm:$0xff]
  %v295 = vld [vmem:[%s2 + $0x760] sm:$0xff]
  %v296 = vld [vmem:[%s2 + $0x768] sm:$0xff]
  %v297 = vld [vmem:[%s2 + $0x770] sm:$0xff]
  %v298 = vld [vmem:[%s2 + $0x778] sm:$0xff]
  %v299 = vld [vmem:[%s2 + $0x780] sm:$0xff]
  %v300 = vld [vmem:[%s2 + $0x788] sm:$0xff]
  %v301 = vld [vmem:[%s2 + $0x790] sm:$0xff]
  %v302 = vld [vmem:[%s2 + $0x798] sm:$0xff]
  %v303 = vld [vmem:[%s2 + $0x7a0] sm:$0xff]
  %v304 = vld [vmem:[%s2 + $0x7a8] sm:$0xff]
  %v305 = vld [vmem:[%s2 + $0x7b0] sm:$0xff]
  %v306 = vld [vmem:[%s2 + $0x7b8] sm:$0xff]
  %v307 = vld [vmem:[%s2 + $0x7c0] sm:$0xff]
  %v308 = vld [vmem:[%s2 + $0x7c8] sm:$0xff]
  %v309 = vld [vmem:[%s2 + $0x7d0] sm:$0xff]
  %v310 = vld [vmem:[%s2 + $0x7d8] sm:$0xff]
  %v311 = vld [vmem:[%s2 + $0x7e0] sm:$0xff]
  %v312 = vld [vmem:[%s2 + $0x7e8] sm:$0xff]
  %v313 = vld [vmem:[%s2 + $0x7f0] sm:$0xff]
  %v314 = vld [vmem:[%s2 + $0x7f8] sm:$0xff]
  %v315 = vld [vmem:[%s2 + $0x800] sm:$0xff]
  %v316 = vld [vmem:[%s2 + $0x808] sm:$0xff]
  %v317 = vld [vmem:[%s2 + $0x810] sm:$0xff]
  %v318 = vld [vmem:[%s2 + $0x818] sm:$0xff]
  %v319 = vld [vmem:[%s2 + $0x820] sm:$0xff]
  %v320 = vld [vmem:[%s2 + $0x828] sm:$0xff]
  %v321 = vld [vmem:[%s2 + $0x830] sm:$0xff]
  %v322 = vld [vmem:[%s2 + $0x838] sm:$0xff]
  %v323 = vld [vmem:[%s2 + $0x840] sm:$0xff]
  %v324 = vld [vmem:[%s2 + $0x848] sm:$0xff]
  %v325 = vld [vmem:[%s2 + $0x850] sm:$0xff]
  %v326 = vld [vmem:[%s2 + $0x858] sm:$0xff]
  %v327 = vld [vmem:[%s2 + $0x860] sm:$0xff]
  %v328 = vld [vmem:[%s2 + $0x868] sm:$0xff]
  %v329 = vld [vmem:[%s2 + $0x870] sm:$0xff]
  %v330 = vld [vmem:[%s2 + $0x878] sm:$0xff]
  %v331 = vld [vmem:[%s3] sm:$0x3]
  %v333 = vlaneseq
  %v334 = vshrl.u32 %v333, 7
  %v335 = vsub.s32 0, %v334
  %v336 = vrot.slane %v331, %v335
  %v337 = vlaneseq
  %v338 = vshrl.u32 %v337, 7
  %v339 = vsub.s32 1, %v338
  %v340 = vrot.slane %v331, %v339
  %v352 = vunpack.c.l.b16 %v50
  %v353 = vunpack.c.h.b16 %v50
  %v354 = vunpack.c.l.b16 %v51
  %v355 = vunpack.c.h.b16 %v51
  %v356 = vunpack.c.l.b16 %v52
  %v357 = vunpack.c.h.b16 %v52
  %v358 = vunpack.c.l.b16 %v53
  %v359 = vunpack.c.h.b16 %v53
  %v360 = vunpack.c.l.b16 %v54
  %v361 = vunpack.c.h.b16 %v54
  %v362 = vunpack.c.l.b16 %v55
  %v363 = vunpack.c.h.b16 %v55
  %v364 = vunpack.c.l.b16 %v56
  %v365 = vunpack.c.h.b16 %v56
  %v366 = vunpack.c.l.b16 %v57
  %v367 = vunpack.c.h.b16 %v57
  %v368 = vunpack.c.l.b16 %v58
  %v369 = vpack.c.b16 %v352, %v352
  %v370 = vpack.c.b16 %v353, %v353
  %v371 = vpack.c.b16 %v354, %v354
  %v372 = vpack.c.b16 %v355, %v355
  %v373 = vpack.c.b16 %v356, %v356
  %v374 = vpack.c.b16 %v357, %v357
  %v375 = vpack.c.b16 %v358, %v358
  %v376 = vpack.c.b16 %v359, %v359
  %v377 = vpack.c.b16 %v360, %v360
  %v378 = vpack.c.b16 %v361, %v361
  %v379 = vpack.c.b16 %v362, %v362
  %v380 = vpack.c.b16 %v363, %v363
  %v381 = vpack.c.b16 %v364, %v364
  %v382 = vpack.c.b16 %v365, %v365
  %v383 = vpack.c.b16 %v366, %v366
  %v384 = vpack.c.b16 %v367, %v367
  %v385 = vpack.c.b16 %v368, %v368
  %v675 = vunpack.c.l.b16 %v59
  %v676 = vunpack.c.h.b16 %v59
  %v677 = vunpack.c.l.b16 %v60
  %v678 = vunpack.c.h.b16 %v60
  %v679 = vunpack.c.l.b16 %v61
  %v680 = vunpack.c.h.b16 %v61
  %v681 = vunpack.c.l.b16 %v62
  %v682 = vunpack.c.h.b16 %v62
  %v683 = vunpack.c.l.b16 %v63
  %v684 = vunpack.c.h.b16 %v63
  %v685 = vunpack.c.l.b16 %v64
  %v686 = vunpack.c.h.b16 %v64
  %v687 = vunpack.c.l.b16 %v65
  %v688 = vunpack.c.h.b16 %v65
  %v689 = vunpack.c.l.b16 %v66
  %v690 = vunpack.c.h.b16 %v66
  %v691 = vunpack.c.l.b16 %v67
  %v692 = vunpack.c.h.b16 %v67
  %v693 = vunpack.c.l.b16 %v68
  %v694 = vunpack.c.h.b16 %v68
  %v695 = vunpack.c.l.b16 %v69
  %v696 = vunpack.c.h.b16 %v69
  %v697 = vunpack.c.l.b16 %v70
  %v698 = vunpack.c.h.b16 %v70
  %v699 = vunpack.c.l.b16 %v71
  %v700 = vunpack.c.h.b16 %v71
  %v701 = vunpack.c.l.b16 %v72
  %v702 = vunpack.c.h.b16 %v72
  %v703 = vunpack.c.l.b16 %v73
  %v704 = vunpack.c.h.b16 %v73
  %v705 = vunpack.c.l.b16 %v74
  %v706 = vunpack.c.h.b16 %v74
  %v707 = vunpack.c.l.b16 %v75
  %v708 = vunpack.c.h.b16 %v75
  %v709 = vunpack.c.l.b16 %v76
  %v710 = vunpack.c.h.b16 %v76
  %v711 = vunpack.c.l.b16 %v77
  %v712 = vunpack.c.h.b16 %v77
  %v713 = vunpack.c.l.b16 %v78
  %v714 = vunpack.c.h.b16 %v78
  %v715 = vunpack.c.l.b16 %v79
  %v716 = vunpack.c.h.b16 %v79
  %v717 = vunpack.c.l.b16 %v80
  %v718 = vunpack.c.h.b16 %v80
  %v719 = vunpack.c.l.b16 %v81
  %v720 = vunpack.c.h.b16 %v81
  %v721 = vunpack.c.l.b16 %v82
  %v722 = vunpack.c.h.b16 %v82
  %v723 = vunpack.c.l.b16 %v83
  %v724 = vunpack.c.h.b16 %v83
  %v725 = vunpack.c.l.b16 %v84
  %v726 = vunpack.c.h.b16 %v84
  %v727 = vunpack.c.l.b16 %v85
  %v728 = vunpack.c.h.b16 %v85
  %v729 = vunpack.c.l.b16 %v86
  %v730 = vunpack.c.h.b16 %v86
  %v731 = vunpack.c.l.b16 %v87
  %v732 = vunpack.c.h.b16 %v87
  %v733 = vunpack.c.l.b16 %v88
  %v734 = vunpack.c.h.b16 %v88
  %v735 = vunpack.c.l.b16 %v89
  %v736 = vunpack.c.h.b16 %v89
  %v737 = vunpack.c.l.b16 %v90
  %v738 = vunpack.c.h.b16 %v90
  %v739 = vunpack.c.l.b16 %v91
  %v740 = vunpack.c.h.b16 %v91
  %v741 = vunpack.c.l.b16 %v92
  %v742 = vunpack.c.h.b16 %v92
  %v743 = vunpack.c.l.b16 %v93
  %v744 = vunpack.c.h.b16 %v93
  %v745 = vunpack.c.l.b16 %v94
  %v746 = vunpack.c.h.b16 %v94
  %v747 = vunpack.c.l.b16 %v95
  %v748 = vunpack.c.h.b16 %v95
  %v749 = vunpack.c.l.b16 %v96
  %v750 = vunpack.c.h.b16 %v96
  %v751 = vunpack.c.l.b16 %v97
  %v752 = vunpack.c.h.b16 %v97
  %v753 = vunpack.c.l.b16 %v98
  %v754 = vunpack.c.h.b16 %v98
  %v755 = vunpack.c.l.b16 %v99
  %v756 = vunpack.c.h.b16 %v99
  %v757 = vunpack.c.l.b16 %v100
  %v758 = vunpack.c.h.b16 %v100
  %v759 = vunpack.c.l.b16 %v101
  %v760 = vunpack.c.h.b16 %v101
  %v761 = vunpack.c.l.b16 %v102
  %v762 = vunpack.c.h.b16 %v102
  %v763 = vunpack.c.l.b16 %v103
  %v764 = vunpack.c.h.b16 %v103
  %v765 = vunpack.c.l.b16 %v104
  %v766 = vunpack.c.h.b16 %v104
  %v767 = vunpack.c.l.b16 %v105
  %v768 = vunpack.c.h.b16 %v105
  %v769 = vunpack.c.l.b16 %v106
  %v770 = vunpack.c.h.b16 %v106
  %v771 = vunpack.c.l.b16 %v107
  %v772 = vunpack.c.h.b16 %v107
  %v773 = vunpack.c.l.b16 %v108
  %v774 = vunpack.c.h.b16 %v108
  %v775 = vunpack.c.l.b16 %v109
  %v776 = vunpack.c.h.b16 %v109
  %v777 = vunpack.c.l.b16 %v110
  %v778 = vunpack.c.h.b16 %v110
  %v779 = vunpack.c.l.b16 %v111
  %v780 = vunpack.c.h.b16 %v111
  %v781 = vunpack.c.l.b16 %v112
  %v782 = vunpack.c.h.b16 %v112
  %v783 = vunpack.c.l.b16 %v113
  %v784 = vunpack.c.h.b16 %v113
  %v785 = vunpack.c.l.b16 %v114
  %v786 = vunpack.c.h.b16 %v114
  %v787 = vunpack.c.l.b16 %v115
  %v788 = vunpack.c.h.b16 %v115
  %v789 = vunpack.c.l.b16 %v116
  %v790 = vunpack.c.h.b16 %v116
  %v791 = vunpack.c.l.b16 %v117
  %v792 = vunpack.c.h.b16 %v117
  %v793 = vunpack.c.l.b16 %v118
  %v794 = vunpack.c.h.b16 %v118
  %v795 = vunpack.c.l.b16 %v119
  %v796 = vunpack.c.h.b16 %v119
  %v797 = vunpack.c.l.b16 %v120
  %v798 = vunpack.c.h.b16 %v120
  %v799 = vunpack.c.l.b16 %v121
  %v800 = vunpack.c.h.b16 %v121
  %v801 = vunpack.c.l.b16 %v122
  %v802 = vunpack.c.h.b16 %v122
  %v803 = vunpack.c.l.b16 %v123
  %v804 = vunpack.c.h.b16 %v123
  %v805 = vunpack.c.l.b16 %v124
  %v806 = vunpack.c.h.b16 %v124
  %v807 = vunpack.c.l.b16 %v125
  %v808 = vunpack.c.h.b16 %v125
  %v809 = vunpack.c.l.b16 %v126
  %v810 = vunpack.c.h.b16 %v126
  %v811 = vunpack.c.l.b16 %v127
  %v812 = vunpack.c.h.b16 %v127
  %v813 = vunpack.c.l.b16 %v128
  %v814 = vunpack.c.h.b16 %v128
  %v815 = vunpack.c.l.b16 %v129
  %v816 = vunpack.c.h.b16 %v129
  %v817 = vunpack.c.l.b16 %v130
  %v818 = vunpack.c.h.b16 %v130
  %v819 = vunpack.c.l.b16 %v131
  %v820 = vunpack.c.h.b16 %v131
  %v821 = vunpack.c.l.b16 %v132
  %v822 = vunpack.c.h.b16 %v132
  %v823 = vunpack.c.l.b16 %v133
  %v824 = vunpack.c.h.b16 %v133
  %v825 = vunpack.c.l.b16 %v134
  %v826 = vunpack.c.h.b16 %v134
  %v827 = vunpack.c.l.b16 %v135
  %v828 = vunpack.c.h.b16 %v135
  %v829 = vunpack.c.l.b16 %v136
  %v830 = vunpack.c.h.b16 %v136
  %v831 = vunpack.c.l.b16 %v137
  %v832 = vunpack.c.h.b16 %v137
  %v833 = vunpack.c.l.b16 %v138
  %v834 = vunpack.c.h.b16 %v138
  %v835 = vunpack.c.l.b16 %v139
  %v836 = vunpack.c.h.b16 %v139
  %v837 = vunpack.c.l.b16 %v140
  %v838 = vunpack.c.h.b16 %v140
  %v839 = vunpack.c.l.b16 %v141
  %v840 = vunpack.c.h.b16 %v141
  %v841 = vunpack.c.l.b16 %v142
  %v842 = vunpack.c.h.b16 %v142
  %v843 = vunpack.c.l.b16 %v143
  %v844 = vunpack.c.h.b16 %v143
  %v845 = vunpack.c.l.b16 %v144
  %v846 = vunpack.c.h.b16 %v144
  %v847 = vunpack.c.l.b16 %v145
  %v848 = vunpack.c.h.b16 %v145
  %v849 = vunpack.c.l.b16 %v146
  %v850 = vunpack.c.h.b16 %v146
  %v851 = vunpack.c.l.b16 %v147
  %v852 = vunpack.c.h.b16 %v147
  %v853 = vunpack.c.l.b16 %v148
  %v854 = vunpack.c.h.b16 %v148
  %v855 = vunpack.c.l.b16 %v149
  %v856 = vunpack.c.h.b16 %v149
  %v857 = vunpack.c.l.b16 %v150
  %v858 = vunpack.c.h.b16 %v150
  %v859 = vunpack.c.l.b16 %v151
  %v860 = vunpack.c.h.b16 %v151
  %v861 = vunpack.c.l.b16 %v152
  %v862 = vunpack.c.h.b16 %v152
  %v863 = vunpack.c.l.b16 %v153
  %v864 = vunpack.c.h.b16 %v153
  %v865 = vunpack.c.l.b16 %v154
  %v866 = vunpack.c.h.b16 %v154
  %v867 = vunpack.c.l.b16 %v155
  %v868 = vunpack.c.h.b16 %v155
  %v869 = vunpack.c.l.b16 %v156
  %v870 = vunpack.c.h.b16 %v156
  %v871 = vunpack.c.l.b16 %v157
  %v872 = vunpack.c.h.b16 %v157
  %v873 = vunpack.c.l.b16 %v158
  %v874 = vunpack.c.h.b16 %v158
  %v875 = vunpack.c.l.b16 %v159
  %v876 = vunpack.c.h.b16 %v159
  %v877 = vunpack.c.l.b16 %v160
  %v878 = vunpack.c.h.b16 %v160
  %v879 = vunpack.c.l.b16 %v161
  %v880 = vunpack.c.h.b16 %v161
  %v881 = vunpack.c.l.b16 %v162
  %v882 = vunpack.c.h.b16 %v162
  %v883 = vunpack.c.l.b16 %v163
  %v884 = vunpack.c.h.b16 %v163
  %v885 = vunpack.c.l.b16 %v164
  %v886 = vunpack.c.h.b16 %v164
  %v887 = vunpack.c.l.b16 %v165
  %v888 = vunpack.c.h.b16 %v165
  %v889 = vunpack.c.l.b16 %v166
  %v890 = vunpack.c.h.b16 %v166
  %v891 = vunpack.c.l.b16 %v167
  %v892 = vunpack.c.h.b16 %v167
  %v893 = vunpack.c.l.b16 %v168
  %v894 = vunpack.c.h.b16 %v168
  %v895 = vunpack.c.l.b16 %v169
  %v896 = vunpack.c.h.b16 %v169
  %v897 = vunpack.c.l.b16 %v170
  %v898 = vunpack.c.h.b16 %v170
  %v899 = vunpack.c.l.b16 %v171
  %v900 = vunpack.c.h.b16 %v171
  %v901 = vunpack.c.l.b16 %v172
  %v902 = vunpack.c.h.b16 %v172
  %v903 = vunpack.c.l.b16 %v173
  %v904 = vunpack.c.h.b16 %v173
  %v905 = vunpack.c.l.b16 %v174
  %v906 = vunpack.c.h.b16 %v174
  %v907 = vunpack.c.l.b16 %v175
  %v908 = vunpack.c.h.b16 %v175
  %v909 = vunpack.c.l.b16 %v176
  %v910 = vunpack.c.h.b16 %v176
  %v911 = vunpack.c.l.b16 %v177
  %v912 = vunpack.c.h.b16 %v177
  %v913 = vunpack.c.l.b16 %v178
  %v914 = vunpack.c.h.b16 %v178
  %v915 = vunpack.c.l.b16 %v179
  %v916 = vunpack.c.h.b16 %v179
  %v917 = vunpack.c.l.b16 %v180
  %v918 = vunpack.c.h.b16 %v180
  %v919 = vunpack.c.l.b16 %v181
  %v920 = vunpack.c.h.b16 %v181
  %v921 = vunpack.c.l.b16 %v182
  %v922 = vunpack.c.h.b16 %v182
  %v923 = vunpack.c.l.b16 %v183
  %v924 = vunpack.c.h.b16 %v183
  %v925 = vunpack.c.l.b16 %v184
  %v926 = vunpack.c.h.b16 %v184
  %v927 = vunpack.c.l.b16 %v185
  %v928 = vunpack.c.h.b16 %v185
  %v929 = vunpack.c.l.b16 %v186
  %v930 = vunpack.c.h.b16 %v186
  %v931 = vunpack.c.l.b16 %v187
  %v932 = vunpack.c.h.b16 %v187
  %v933 = vunpack.c.l.b16 %v188
  %v934 = vunpack.c.h.b16 %v188
  %v935 = vunpack.c.l.b16 %v189
  %v936 = vunpack.c.h.b16 %v189
  %v937 = vunpack.c.l.b16 %v190
  %v938 = vunpack.c.h.b16 %v190
  %v939 = vunpack.c.l.b16 %v191
  %v940 = vunpack.c.h.b16 %v191
  %v941 = vunpack.c.l.b16 %v192
  %v942 = vunpack.c.h.b16 %v192
  %v943 = vunpack.c.l.b16 %v193
  %v944 = vunpack.c.h.b16 %v193
  %v945 = vunpack.c.l.b16 %v194
  %v946 = vunpack.c.h.b16 %v194
  %v947 = vunpack.c.l.b16 %v195
  %v948 = vunpack.c.h.b16 %v195
  %v949 = vunpack.c.l.b16 %v196
  %v950 = vunpack.c.h.b16 %v196
  %v951 = vunpack.c.l.b16 %v197
  %v952 = vunpack.c.h.b16 %v197
  %v953 = vunpack.c.l.b16 %v198
  %v954 = vunpack.c.h.b16 %v198
  %v955 = vunpack.c.l.b16 %v199
  %v956 = vunpack.c.h.b16 %v199
  %v957 = vunpack.c.l.b16 %v200
  %v958 = vunpack.c.h.b16 %v200
  %v959 = vunpack.c.l.b16 %v201
  %v960 = vunpack.c.h.b16 %v201
  %v961 = vunpack.c.l.b16 %v202
  %v962 = vunpack.c.h.b16 %v202
  %v963 = vunpack.c.l.b16 %v203
  %v964 = vunpack.c.h.b16 %v203
  %v965 = vunpack.c.l.b16 %v204
  %v966 = vunpack.c.h.b16 %v204
  %v967 = vunpack.c.l.b16 %v205
  %v968 = vunpack.c.h.b16 %v205
  %v969 = vunpack.c.l.b16 %v206
  %v970 = vunpack.c.h.b16 %v206
  %v971 = vunpack.c.l.b16 %v207
  %v972 = vunpack.c.h.b16 %v207
  %v973 = vunpack.c.l.b16 %v208
  %v974 = vunpack.c.h.b16 %v208
  %v975 = vunpack.c.l.b16 %v209
  %v976 = vunpack.c.h.b16 %v209
  %v977 = vunpack.c.l.b16 %v210
  %v978 = vunpack.c.h.b16 %v210
  %v979 = vunpack.c.l.b16 %v211
  %v980 = vunpack.c.h.b16 %v211
  %v981 = vunpack.c.l.b16 %v212
  %v982 = vunpack.c.h.b16 %v212
  %v983 = vunpack.c.l.b16 %v213
  %v984 = vunpack.c.h.b16 %v213
  %v985 = vunpack.c.l.b16 %v214
  %v986 = vunpack.c.h.b16 %v214
  %v987 = vunpack.c.l.b16 %v215
  %v988 = vunpack.c.h.b16 %v215
  %v989 = vunpack.c.l.b16 %v216
  %v990 = vunpack.c.h.b16 %v216
  %v991 = vunpack.c.l.b16 %v217
  %v992 = vunpack.c.h.b16 %v217
  %v993 = vunpack.c.l.b16 %v218
  %v994 = vunpack.c.h.b16 %v218
  %v995 = vunpack.c.l.b16 %v219
  %v996 = vunpack.c.h.b16 %v219
  %v997 = vunpack.c.l.b16 %v220
  %v998 = vunpack.c.h.b16 %v220
  %v999 = vunpack.c.l.b16 %v221
  %v1000 = vunpack.c.h.b16 %v221
  %v1001 = vunpack.c.l.b16 %v222
  %v1002 = vunpack.c.h.b16 %v222
  %v1003 = vunpack.c.l.b16 %v223
  %v1004 = vunpack.c.h.b16 %v223
  %v1005 = vunpack.c.l.b16 %v224
  %v1006 = vunpack.c.h.b16 %v224
  %v1007 = vunpack.c.l.b16 %v225
  %v1008 = vunpack.c.h.b16 %v225
  %v1009 = vunpack.c.l.b16 %v226
  %v1010 = vunpack.c.h.b16 %v226
  %v1011 = vunpack.c.l.b16 %v227
  %v1012 = vunpack.c.h.b16 %v227
  %v1013 = vunpack.c.l.b16 %v228
  %v1014 = vunpack.c.h.b16 %v228
  %v1015 = vunpack.c.l.b16 %v229
  %v1016 = vunpack.c.h.b16 %v229
  %v1017 = vunpack.c.l.b16 %v230
  %v1018 = vunpack.c.h.b16 %v230
  %v1019 = vunpack.c.l.b16 %v231
  %v1020 = vunpack.c.h.b16 %v231
  %v1021 = vunpack.c.l.b16 %v232
  %v1022 = vunpack.c.h.b16 %v232
  %v1023 = vunpack.c.l.b16 %v233
  %v1024 = vunpack.c.h.b16 %v233
  %v1025 = vunpack.c.l.b16 %v234
  %v1026 = vunpack.c.h.b16 %v234
  %v1027 = vunpack.c.l.b16 %v235
  %v1028 = vunpack.c.h.b16 %v235
  %v1029 = vunpack.c.l.b16 %v236
  %v1030 = vunpack.c.h.b16 %v236
  %v1031 = vunpack.c.l.b16 %v237
  %v1032 = vunpack.c.h.b16 %v237
  %v1033 = vunpack.c.l.b16 %v238
  %v1034 = vunpack.c.h.b16 %v238
  %v1035 = vunpack.c.l.b16 %v239
  %v1036 = vunpack.c.h.b16 %v239
  %v1037 = vunpack.c.l.b16 %v240
  %v1038 = vunpack.c.h.b16 %v240
  %v1039 = vunpack.c.l.b16 %v241
  %v1040 = vunpack.c.h.b16 %v241
  %v1041 = vunpack.c.l.b16 %v242
  %v1042 = vunpack.c.h.b16 %v242
  %v1043 = vunpack.c.l.b16 %v243
  %v1044 = vunpack.c.h.b16 %v243
  %v1045 = vunpack.c.l.b16 %v244
  %v1046 = vunpack.c.h.b16 %v244
  %v1047 = vunpack.c.l.b16 %v245
  %v1048 = vunpack.c.h.b16 %v245
  %v1049 = vunpack.c.l.b16 %v246
  %v1050 = vunpack.c.h.b16 %v246
  %v1051 = vunpack.c.l.b16 %v247
  %v1052 = vunpack.c.h.b16 %v247
  %v1053 = vunpack.c.l.b16 %v248
  %v1054 = vunpack.c.h.b16 %v248
  %v1055 = vunpack.c.l.b16 %v249
  %v1056 = vunpack.c.h.b16 %v249
  %v1057 = vunpack.c.l.b16 %v250
  %v1058 = vunpack.c.h.b16 %v250
  %v1059 = vunpack.c.l.b16 %v251
  %v1060 = vunpack.c.h.b16 %v251
  %v1061 = vunpack.c.l.b16 %v252
  %v1062 = vunpack.c.h.b16 %v252
  %v1063 = vunpack.c.l.b16 %v253
  %v1064 = vunpack.c.h.b16 %v253
  %v1065 = vunpack.c.l.b16 %v254
  %v1066 = vunpack.c.h.b16 %v254
  %v1067 = vunpack.c.l.b16 %v255
  %v1068 = vunpack.c.h.b16 %v255
  %v1069 = vunpack.c.l.b16 %v256
  %v1070 = vunpack.c.h.b16 %v256
  %v1071 = vunpack.c.l.b16 %v257
  %v1072 = vunpack.c.h.b16 %v257
  %v1073 = vunpack.c.l.b16 %v258
  %v1074 = vunpack.c.h.b16 %v258
  %v1075 = vunpack.c.l.b16 %v259
  %v1076 = vunpack.c.h.b16 %v259
  %v1077 = vunpack.c.l.b16 %v260
  %v1078 = vunpack.c.h.b16 %v260
  %v1079 = vunpack.c.l.b16 %v261
  %v1080 = vunpack.c.h.b16 %v261
  %v1081 = vunpack.c.l.b16 %v262
  %v1082 = vunpack.c.h.b16 %v262
  %v1083 = vunpack.c.l.b16 %v263
  %v1084 = vunpack.c.h.b16 %v263
  %v1085 = vunpack.c.l.b16 %v264
  %v1086 = vunpack.c.h.b16 %v264
  %v1087 = vunpack.c.l.b16 %v265
  %v1088 = vunpack.c.h.b16 %v265
  %v1089 = vunpack.c.l.b16 %v266
  %v1090 = vunpack.c.h.b16 %v266
  %v1091 = vunpack.c.l.b16 %v267
  %v1092 = vunpack.c.h.b16 %v267
  %v1093 = vunpack.c.l.b16 %v268
  %v1094 = vunpack.c.h.b16 %v268
  %v1095 = vunpack.c.l.b16 %v269
  %v1096 = vunpack.c.h.b16 %v269
  %v1097 = vunpack.c.l.b16 %v270
  %v1098 = vunpack.c.h.b16 %v270
  %v1099 = vunpack.c.l.b16 %v271
  %v1100 = vunpack.c.h.b16 %v271
  %v1101 = vunpack.c.l.b16 %v272
  %v1102 = vunpack.c.h.b16 %v272
  %v1103 = vunpack.c.l.b16 %v273
  %v1104 = vunpack.c.h.b16 %v273
  %v1105 = vunpack.c.l.b16 %v274
  %v1106 = vunpack.c.h.b16 %v274
  %v1107 = vunpack.c.l.b16 %v275
  %v1108 = vunpack.c.h.b16 %v275
  %v1109 = vunpack.c.l.b16 %v276
  %v1110 = vunpack.c.h.b16 %v276
  %v1111 = vunpack.c.l.b16 %v277
  %v1112 = vunpack.c.h.b16 %v277
  %v1113 = vunpack.c.l.b16 %v278
  %v1114 = vunpack.c.h.b16 %v278
  %v1115 = vunpack.c.l.b16 %v279
  %v1116 = vunpack.c.h.b16 %v279
  %v1117 = vunpack.c.l.b16 %v280
  %v1118 = vunpack.c.h.b16 %v280
  %v1119 = vunpack.c.l.b16 %v281
  %v1120 = vunpack.c.h.b16 %v281
  %v1121 = vunpack.c.l.b16 %v282
  %v1122 = vunpack.c.h.b16 %v282
  %v1123 = vunpack.c.l.b16 %v283
  %v1124 = vunpack.c.h.b16 %v283
  %v1125 = vunpack.c.l.b16 %v284
  %v1126 = vunpack.c.h.b16 %v284
  %v1127 = vunpack.c.l.b16 %v285
  %v1128 = vunpack.c.h.b16 %v285
  %v1129 = vunpack.c.l.b16 %v286
  %v1130 = vunpack.c.h.b16 %v286
  %v1131 = vunpack.c.l.b16 %v287
  %v1132 = vunpack.c.h.b16 %v287
  %v1133 = vunpack.c.l.b16 %v288
  %v1134 = vunpack.c.h.b16 %v288
  %v1135 = vunpack.c.l.b16 %v289
  %v1136 = vunpack.c.h.b16 %v289
  %v1137 = vunpack.c.l.b16 %v290
  %v1138 = vunpack.c.h.b16 %v290
  %v1139 = vunpack.c.l.b16 %v291
  %v1140 = vunpack.c.h.b16 %v291
  %v1141 = vunpack.c.l.b16 %v292
  %v1142 = vunpack.c.h.b16 %v292
  %v1143 = vunpack.c.l.b16 %v293
  %v1144 = vunpack.c.h.b16 %v293
  %v1145 = vunpack.c.l.b16 %v294
  %v1146 = vunpack.c.h.b16 %v294
  %v1147 = vunpack.c.l.b16 %v295
  %v1148 = vunpack.c.h.b16 %v295
  %v1149 = vunpack.c.l.b16 %v296
  %v1150 = vunpack.c.h.b16 %v296
  %v1151 = vunpack.c.l.b16 %v297
  %v1152 = vunpack.c.h.b16 %v297
  %v1153 = vunpack.c.l.b16 %v298
  %v1154 = vunpack.c.h.b16 %v298
  %v1155 = vunpack.c.l.b16 %v299
  %v1156 = vunpack.c.h.b16 %v299
  %v1157 = vunpack.c.l.b16 %v300
  %v1158 = vunpack.c.h.b16 %v300
  %v1159 = vunpack.c.l.b16 %v301
  %v1160 = vunpack.c.h.b16 %v301
  %v1161 = vunpack.c.l.b16 %v302
  %v1162 = vunpack.c.h.b16 %v302
  %v1163 = vunpack.c.l.b16 %v303
  %v1164 = vunpack.c.h.b16 %v303
  %v1165 = vunpack.c.l.b16 %v304
  %v1166 = vunpack.c.h.b16 %v304
  %v1167 = vunpack.c.l.b16 %v305
  %v1168 = vunpack.c.h.b16 %v305
  %v1169 = vunpack.c.l.b16 %v306
  %v1170 = vunpack.c.h.b16 %v306
  %v1171 = vunpack.c.l.b16 %v307
  %v1172 = vunpack.c.h.b16 %v307
  %v1173 = vunpack.c.l.b16 %v308
  %v1174 = vunpack.c.h.b16 %v308
  %v1175 = vunpack.c.l.b16 %v309
  %v1176 = vunpack.c.h.b16 %v309
  %v1177 = vunpack.c.l.b16 %v310
  %v1178 = vunpack.c.h.b16 %v310
  %v1179 = vunpack.c.l.b16 %v311
  %v1180 = vunpack.c.h.b16 %v311
  %v1181 = vunpack.c.l.b16 %v312
  %v1182 = vunpack.c.h.b16 %v312
  %v1183 = vunpack.c.l.b16 %v313
  %v1184 = vunpack.c.h.b16 %v313
  %v1185 = vunpack.c.l.b16 %v314
  %v1186 = vunpack.c.h.b16 %v314
  %v1187 = vunpack.c.l.b16 %v315
  %v1188 = vunpack.c.h.b16 %v315
  %v1189 = vunpack.c.l.b16 %v316
  %v1190 = vunpack.c.h.b16 %v316
  %v1191 = vunpack.c.l.b16 %v317
  %v1192 = vunpack.c.h.b16 %v317
  %v1193 = vunpack.c.l.b16 %v318
  %v1194 = vunpack.c.h.b16 %v318
  %v1195 = vunpack.c.l.b16 %v319
  %v1196 = vunpack.c.h.b16 %v319
  %v1197 = vunpack.c.l.b16 %v320
  %v1198 = vunpack.c.h.b16 %v320
  %v1199 = vunpack.c.l.b16 %v321
  %v1200 = vunpack.c.h.b16 %v321
  %v1201 = vunpack.c.l.b16 %v322
  %v1202 = vunpack.c.h.b16 %v322
  %v1203 = vunpack.c.l.b16 %v323
  %v1204 = vunpack.c.h.b16 %v323
  %v1205 = vunpack.c.l.b16 %v324
  %v1206 = vunpack.c.h.b16 %v324
  %v1207 = vunpack.c.l.b16 %v325
  %v1208 = vunpack.c.h.b16 %v325
  %v1209 = vunpack.c.l.b16 %v326
  %v1210 = vunpack.c.h.b16 %v326
  %v1211 = vunpack.c.l.b16 %v327
  %v1212 = vunpack.c.h.b16 %v327
  %v1213 = vunpack.c.l.b16 %v328
  %v1214 = vunpack.c.h.b16 %v328
  %v1215 = vunpack.c.l.b16 %v329
  %v1216 = vunpack.c.h.b16 %v329
  %v1217 = vunpack.c.l.b16 %v330
  %v1218 = vunpack.c.h.b16 %v330
  %v1219 = vpack.c.b16 %v677, %v675
  %v1220 = vpack.c.b16 %v678, %v676
  %v1221 = vpack.c.b16 %v681, %v679
  %v1222 = vpack.c.b16 %v682, %v680
  %v1223 = vpack.c.b16 %v685, %v683
  %v1224 = vpack.c.b16 %v686, %v684
  %v1225 = vpack.c.b16 %v689, %v687
  %v1226 = vpack.c.b16 %v690, %v688
  %v1227 = vpack.c.b16 %v693, %v691
  %v1228 = vpack.c.b16 %v694, %v692
  %v1229 = vpack.c.b16 %v697, %v695
  %v1230 = vpack.c.b16 %v698, %v696
  %v1231 = vpack.c.b16 %v701, %v699
  %v1232 = vpack.c.b16 %v702, %v700
  %v1233 = vpack.c.b16 %v705, %v703
  %v1234 = vpack.c.b16 %v706, %v704
  %v1235 = vpack.c.b16 %v709, %v707
  %v1236 = vpack.c.b16 %v710, %v708
  %v1237 = vpack.c.b16 %v713, %v711
  %v1238 = vpack.c.b16 %v714, %v712
  %v1239 = vpack.c.b16 %v717, %v715
  %v1240 = vpack.c.b16 %v718, %v716
  %v1241 = vpack.c.b16 %v721, %v719
  %v1242 = vpack.c.b16 %v722, %v720
  %v1243 = vpack.c.b16 %v725, %v723
  %v1244 = vpack.c.b16 %v726, %v724
  %v1245 = vpack.c.b16 %v729, %v727
  %v1246 = vpack.c.b16 %v730, %v728
  %v1247 = vpack.c.b16 %v733, %v731
  %v1248 = vpack.c.b16 %v734, %v732
  %v1249 = vpack.c.b16 %v737, %v735
  %v1250 = vpack.c.b16 %v738, %v736
  %v1251 = vpack.c.b16 %v741, %v739
  %v1252 = vpack.c.b16 %v742, %v740
  %v1253 = vpack.c.b16 %v745, %v743
  %v1254 = vpack.c.b16 %v746, %v744
  %v1255 = vpack.c.b16 %v749, %v747
  %v1256 = vpack.c.b16 %v750, %v748
  %v1257 = vpack.c.b16 %v753, %v751
  %v1258 = vpack.c.b16 %v754, %v752
  %v1259 = vpack.c.b16 %v757, %v755
  %v1260 = vpack.c.b16 %v758, %v756
  %v1261 = vpack.c.b16 %v761, %v759
  %v1262 = vpack.c.b16 %v762, %v760
  %v1263 = vpack.c.b16 %v765, %v763
  %v1264 = vpack.c.b16 %v766, %v764
  %v1265 = vpack.c.b16 %v769, %v767
  %v1266 = vpack.c.b16 %v770, %v768
  %v1267 = vpack.c.b16 %v773, %v771
  %v1268 = vpack.c.b16 %v774, %v772
  %v1269 = vpack.c.b16 %v777, %v775
  %v1270 = vpack.c.b16 %v778, %v776
  %v1271 = vpack.c.b16 %v781, %v779
  %v1272 = vpack.c.b16 %v782, %v780
  %v1273 = vpack.c.b16 %v785, %v783
  %v1274 = vpack.c.b16 %v786, %v784
  %v1275 = vpack.c.b16 %v789, %v787
  %v1276 = vpack.c.b16 %v790, %v788
  %v1277 = vpack.c.b16 %v793, %v791
  %v1278 = vpack.c.b16 %v794, %v792
  %v1279 = vpack.c.b16 %v797, %v795
  %v1280 = vpack.c.b16 %v798, %v796
  %v1281 = vpack.c.b16 %v801, %v799
  %v1282 = vpack.c.b16 %v802, %v800
  %v1283 = vpack.c.b16 %v805, %v803
  %v1284 = vpack.c.b16 %v806, %v804
  %v1285 = vpack.c.b16 %v809, %v807
  %v1286 = vpack.c.b16 %v810, %v808
  %v1287 = vpack.c.b16 %v813, %v811
  %v1288 = vpack.c.b16 %v814, %v812
  %v1289 = vpack.c.b16 %v817, %v815
  %v1290 = vpack.c.b16 %v818, %v816
  %v1291 = vpack.c.b16 %v821, %v819
  %v1292 = vpack.c.b16 %v822, %v820
  %v1293 = vpack.c.b16 %v825, %v823
  %v1294 = vpack.c.b16 %v826, %v824
  %v1295 = vpack.c.b16 %v829, %v827
  %v1296 = vpack.c.b16 %v830, %v828
  %v1297 = vpack.c.b16 %v833, %v831
  %v1298 = vpack.c.b16 %v834, %v832
  %v1299 = vpack.c.b16 %v837, %v835
  %v1300 = vpack.c.b16 %v838, %v836
  %v1301 = vpack.c.b16 %v841, %v839
  %v1302 = vpack.c.b16 %v842, %v840
  %v1303 = vpack.c.b16 %v845, %v843
  %v1304 = vpack.c.b16 %v846, %v844
  %v1305 = vpack.c.b16 %v849, %v847
  %v1306 = vpack.c.b16 %v850, %v848
  %v1307 = vpack.c.b16 %v853, %v851
  %v1308 = vpack.c.b16 %v854, %v852
  %v1309 = vpack.c.b16 %v857, %v855
  %v1310 = vpack.c.b16 %v858, %v856
  %v1311 = vpack.c.b16 %v861, %v859
  %v1312 = vpack.c.b16 %v862, %v860
  %v1313 = vpack.c.b16 %v865, %v863
  %v1314 = vpack.c.b16 %v866, %v864
  %v1315 = vpack.c.b16 %v869, %v867
  %v1316 = vpack.c.b16 %v870, %v868
  %v1317 = vpack.c.b16 %v873, %v871
  %v1318 = vpack.c.b16 %v874, %v872
  %v1319 = vpack.c.b16 %v877, %v875
  %v1320 = vpack.c.b16 %v878, %v876
  %v1321 = vpack.c.b16 %v881, %v879
  %v1322 = vpack.c.b16 %v882, %v880
  %v1323 = vpack.c.b16 %v885, %v883
  %v1324 = vpack.c.b16 %v886, %v884
  %v1325 = vpack.c.b16 %v889, %v887
  %v1326 = vpack.c.b16 %v890, %v888
  %v1327 = vpack.c.b16 %v893, %v891
  %v1328 = vpack.c.b16 %v894, %v892
  %v1329 = vpack.c.b16 %v897, %v895
  %v1330 = vpack.c.b16 %v898, %v896
  %v1331 = vpack.c.b16 %v901, %v899
  %v1332 = vpack.c.b16 %v902, %v900
  %v1333 = vpack.c.b16 %v905, %v903
  %v1334 = vpack.c.b16 %v906, %v904
  %v1335 = vpack.c.b16 %v909, %v907
  %v1336 = vpack.c.b16 %v910, %v908
  %v1337 = vpack.c.b16 %v913, %v911
  %v1338 = vpack.c.b16 %v914, %v912
  %v1339 = vpack.c.b16 %v917, %v915
  %v1340 = vpack.c.b16 %v918, %v916
  %v1341 = vpack.c.b16 %v921, %v919
  %v1342 = vpack.c.b16 %v922, %v920
  %v1343 = vpack.c.b16 %v925, %v923
  %v1344 = vpack.c.b16 %v926, %v924
  %v1345 = vpack.c.b16 %v929, %v927
  %v1346 = vpack.c.b16 %v930, %v928
  %v1347 = vpack.c.b16 %v933, %v931
  %v1348 = vpack.c.b16 %v934, %v932
  %v1349 = vpack.c.b16 %v937, %v935
  %v1350 = vpack.c.b16 %v938, %v936
  %v1351 = vpack.c.b16 %v941, %v939
  %v1352 = vpack.c.b16 %v942, %v940
  %v1353 = vpack.c.b16 %v945, %v943
  %v1354 = vpack.c.b16 %v946, %v944
  %v1355 = vpack.c.b16 %v949, %v947
  %v1356 = vpack.c.b16 %v950, %v948
  %v1357 = vpack.c.b16 %v953, %v951
  %v1358 = vpack.c.b16 %v954, %v952
  %v1359 = vpack.c.b16 %v957, %v955
  %v1360 = vpack.c.b16 %v958, %v956
  %v1361 = vpack.c.b16 %v961, %v959
  %v1362 = vpack.c.b16 %v962, %v960
  %v1363 = vpack.c.b16 %v965, %v963
  %v1364 = vpack.c.b16 %v966, %v964
  %v1365 = vpack.c.b16 %v969, %v967
  %v1366 = vpack.c.b16 %v970, %v968
  %v1367 = vpack.c.b16 %v973, %v971
  %v1368 = vpack.c.b16 %v974, %v972
  %v1369 = vpack.c.b16 %v977, %v975
  %v1370 = vpack.c.b16 %v978, %v976
  %v1371 = vpack.c.b16 %v981, %v979
  %v1372 = vpack.c.b16 %v982, %v980
  %v1373 = vpack.c.b16 %v985, %v983
  %v1374 = vpack.c.b16 %v986, %v984
  %v1375 = vpack.c.b16 %v989, %v987
  %v1376 = vpack.c.b16 %v990, %v988
  %v1377 = vpack.c.b16 %v993, %v991
  %v1378 = vpack.c.b16 %v994, %v992
  %v1379 = vpack.c.b16 %v997, %v995
  %v1380 = vpack.c.b16 %v998, %v996
  %v1381 = vpack.c.b16 %v1001, %v999
  %v1382 = vpack.c.b16 %v1002, %v1000
  %v1383 = vpack.c.b16 %v1005, %v1003
  %v1384 = vpack.c.b16 %v1006, %v1004
  %v1385 = vpack.c.b16 %v1009, %v1007
  %v1386 = vpack.c.b16 %v1010, %v1008
  %v1387 = vpack.c.b16 %v1013, %v1011
  %v1388 = vpack.c.b16 %v1014, %v1012
  %v1389 = vpack.c.b16 %v1017, %v1015
  %v1390 = vpack.c.b16 %v1018, %v1016
  %v1391 = vpack.c.b16 %v1021, %v1019
  %v1392 = vpack.c.b16 %v1022, %v1020
  %v1393 = vpack.c.b16 %v1025, %v1023
  %v1394 = vpack.c.b16 %v1026, %v1024
  %v1395 = vpack.c.b16 %v1029, %v1027
  %v1396 = vpack.c.b16 %v1030, %v1028
  %v1397 = vpack.c.b16 %v1033, %v1031
  %v1398 = vpack.c.b16 %v1034, %v1032
  %v1399 = vpack.c.b16 %v1037, %v1035
  %v1400 = vpack.c.b16 %v1038, %v1036
  %v1401 = vpack.c.b16 %v1041, %v1039
  %v1402 = vpack.c.b16 %v1042, %v1040
  %v1403 = vpack.c.b16 %v1045, %v1043
  %v1404 = vpack.c.b16 %v1046, %v1044
  %v1405 = vpack.c.b16 %v1049, %v1047
  %v1406 = vpack.c.b16 %v1050, %v1048
  %v1407 = vpack.c.b16 %v1053, %v1051
  %v1408 = vpack.c.b16 %v1054, %v1052
  %v1409 = vpack.c.b16 %v1057, %v1055
  %v1410 = vpack.c.b16 %v1058, %v1056
  %v1411 = vpack.c.b16 %v1061, %v1059
  %v1412 = vpack.c.b16 %v1062, %v1060
  %v1413 = vpack.c.b16 %v1065, %v1063
  %v1414 = vpack.c.b16 %v1066, %v1064
  %v1415 = vpack.c.b16 %v1069, %v1067
  %v1416 = vpack.c.b16 %v1070, %v1068
  %v1417 = vpack.c.b16 %v1073, %v1071
  %v1418 = vpack.c.b16 %v1074, %v1072
  %v1419 = vpack.c.b16 %v1077, %v1075
  %v1420 = vpack.c.b16 %v1078, %v1076
  %v1421 = vpack.c.b16 %v1081, %v1079
  %v1422 = vpack.c.b16 %v1082, %v1080
  %v1423 = vpack.c.b16 %v1085, %v1083
  %v1424 = vpack.c.b16 %v1086, %v1084
  %v1425 = vpack.c.b16 %v1089, %v1087
  %v1426 = vpack.c.b16 %v1090, %v1088
  %v1427 = vpack.c.b16 %v1093, %v1091
  %v1428 = vpack.c.b16 %v1094, %v1092
  %v1429 = vpack.c.b16 %v1097, %v1095
  %v1430 = vpack.c.b16 %v1098, %v1096
  %v1431 = vpack.c.b16 %v1101, %v1099
  %v1432 = vpack.c.b16 %v1102, %v1100
  %v1433 = vpack.c.b16 %v1105, %v1103
  %v1434 = vpack.c.b16 %v1106, %v1104
  %v1435 = vpack.c.b16 %v1109, %v1107
  %v1436 = vpack.c.b16 %v1110, %v1108
  %v1437 = vpack.c.b16 %v1113, %v1111
  %v1438 = vpack.c.b16 %v1114, %v1112
  %v1439 = vpack.c.b16 %v1117, %v1115
  %v1440 = vpack.c.b16 %v1118, %v1116
  %v1441 = vpack.c.b16 %v1121, %v1119
  %v1442 = vpack.c.b16 %v1122, %v1120
  %v1443 = vpack.c.b16 %v1125, %v1123
  %v1444 = vpack.c.b16 %v1126, %v1124
  %v1445 = vpack.c.b16 %v1129, %v1127
  %v1446 = vpack.c.b16 %v1130, %v1128
  %v1447 = vpack.c.b16 %v1133, %v1131
  %v1448 = vpack.c.b16 %v1134, %v1132
  %v1449 = vpack.c.b16 %v1137, %v1135
  %v1450 = vpack.c.b16 %v1138, %v1136
  %v1451 = vpack.c.b16 %v1141, %v1139
  %v1452 = vpack.c.b16 %v1142, %v1140
  %v1453 = vpack.c.b16 %v1145, %v1143
  %v1454 = vpack.c.b16 %v1146, %v1144
  %v1455 = vpack.c.b16 %v1149, %v1147
  %v1456 = vpack.c.b16 %v1150, %v1148
  %v1457 = vpack.c.b16 %v1153, %v1151
  %v1458 = vpack.c.b16 %v1154, %v1152
  %v1459 = vpack.c.b16 %v1157, %v1155
  %v1460 = vpack.c.b16 %v1158, %v1156
  %v1461 = vpack.c.b16 %v1161, %v1159
  %v1462 = vpack.c.b16 %v1162, %v1160
  %v1463 = vpack.c.b16 %v1165, %v1163
  %v1464 = vpack.c.b16 %v1166, %v1164
  %v1465 = vpack.c.b16 %v1169, %v1167
  %v1466 = vpack.c.b16 %v1170, %v1168
  %v1467 = vpack.c.b16 %v1173, %v1171
  %v1468 = vpack.c.b16 %v1174, %v1172
  %v1469 = vpack.c.b16 %v1177, %v1175
  %v1470 = vpack.c.b16 %v1178, %v1176
  %v1471 = vpack.c.b16 %v1181, %v1179
  %v1472 = vpack.c.b16 %v1182, %v1180
  %v1473 = vpack.c.b16 %v1185, %v1183
  %v1474 = vpack.c.b16 %v1186, %v1184
  %v1475 = vpack.c.b16 %v1189, %v1187
  %v1476 = vpack.c.b16 %v1190, %v1188
  %v1477 = vpack.c.b16 %v1193, %v1191
  %v1478 = vpack.c.b16 %v1194, %v1192
  %v1479 = vpack.c.b16 %v1197, %v1195
  %v1480 = vpack.c.b16 %v1198, %v1196
  %v1481 = vpack.c.b16 %v1201, %v1199
  %v1482 = vpack.c.b16 %v1202, %v1200
  %v1483 = vpack.c.b16 %v1205, %v1203
  %v1484 = vpack.c.b16 %v1206, %v1204
  %v1485 = vpack.c.b16 %v1209, %v1207
  %v1486 = vpack.c.b16 %v1210, %v1208
  %v1487 = vpack.c.b16 %v1213, %v1211
  %v1488 = vpack.c.b16 %v1214, %v1212
  %v1489 = vpack.c.b16 %v1217, %v1215
  %v1490 = vpack.c.b16 %v1218, %v1216
  %1763 = vmatprep.subr.bf16.mxu0 %v1220
  %1764 = vmatpush1.bf16.msra.mxu0 %v1219
  %1765 = vmatprep.subr.bf16.mxu0 %v1222
  %1766 = vmatpush1.bf16.msra.mxu0 %v1221
  %1767 = vmatprep.subr.bf16.mxu0 %v1224
  %1768 = vmatpush1.bf16.msra.mxu0 %v1223
  %1769 = vmatprep.subr.bf16.mxu0 %v1226
  %1770 = vmatpush1.bf16.msra.mxu0 %v1225
  %1771 = vmatprep.subr.bf16.mxu0 %v1228
  %1772 = vmatpush1.bf16.msra.mxu0 %v1227
  %1773 = vmatprep.subr.bf16.mxu0 %v1230
  %1774 = vmatpush1.bf16.msra.mxu0 %v1229
  %1775 = vmatprep.subr.bf16.mxu0 %v1232
  %1776 = vmatpush1.bf16.msra.mxu0 %v1231
  %1777 = vmatprep.subr.bf16.mxu0 %v1234
  %1778 = vmatpush1.bf16.msra.mxu0 %v1233
  %1779 = vmatprep.subr.bf16.mxu0 %v1236
  %1780 = vmatpush1.bf16.msra.mxu0 %v1235
  %1781 = vmatprep.subr.bf16.mxu0 %v1238
  %1782 = vmatpush1.bf16.msra.mxu0 %v1237
  %1783 = vmatprep.subr.bf16.mxu0 %v1240
  %1784 = vmatpush1.bf16.msra.mxu0 %v1239
  %1785 = vmatprep.subr.bf16.mxu0 %v1242
  %1786 = vmatpush1.bf16.msra.mxu0 %v1241
  %1787 = vmatprep.subr.bf16.mxu0 %v1244
  %1788 = vmatpush1.bf16.msra.mxu0 %v1243
  %1789 = vmatprep.subr.bf16.mxu0 %v1246
  %1790 = vmatpush1.bf16.msra.mxu0 %v1245
  %1791 = vmatprep.subr.bf16.mxu0 %v1248
  %1792 = vmatpush1.bf16.msra.mxu0 %v1247
  %1793 = vmatprep.subr.bf16.mxu0 %v1250
  %1794 = vmatpush1.bf16.msra.mxu0 %v1249
  %1795 = vmatprep.mubr.bf16.mxu0 %v370
  %1796 = vmatmul.mubr.bf16.gmra.mrb[0].mxu0 %v369
  %v1797 = vpop.f32.mrb[0].mxu0
  %v1798 = vadd.f32 %v336, %v1797
  %v1799 = vpop.f32.mrb[0].mxu0
  %v1800 = vadd.f32 %v340, %v1799
  %v1801 = vpop.f32.mrb[0].mxu0
  %v1802 = vpop.f32.mrb[0].mxu0
  %1803 = vdwg.mxu0
  %1804 = vmatprep.subr.bf16.mxu0 %v1252
  %1805 = vmatpush1.bf16.msra.mxu0 %v1251
  %1806 = vmatprep.subr.bf16.mxu0 %v1254
  %1807 = vmatpush1.bf16.msra.mxu0 %v1253
  %1808 = vmatprep.subr.bf16.mxu0 %v1256
  %1809 = vmatpush1.bf16.msra.mxu0 %v1255
  %1810 = vmatprep.subr.bf16.mxu0 %v1258
  %1811 = vmatpush1.bf16.msra.mxu0 %v1257
  %1812 = vmatprep.subr.bf16.mxu0 %v1260
  %1813 = vmatpush1.bf16.msra.mxu0 %v1259
  %1814 = vmatprep.subr.bf16.mxu0 %v1262
  %1815 = vmatpush1.bf16.msra.mxu0 %v1261
  %1816 = vmatprep.subr.bf16.mxu0 %v1264
  %1817 = vmatpush1.bf16.msra.mxu0 %v1263
  %1818 = vmatprep.subr.bf16.mxu0 %v1266
  %1819 = vmatpush1.bf16.msra.mxu0 %v1265
  %1820 = vmatprep.subr.bf16.mxu0 %v1268
  %1821 = vmatpush1.bf16.msra.mxu0 %v1267
  %1822 = vmatprep.subr.bf16.mxu0 %v1270
  %1823 = vmatpush1.bf16.msra.mxu0 %v1269
  %1824 = vmatprep.subr.bf16.mxu0 %v1272
  %1825 = vmatpush1.bf16.msra.mxu0 %v1271
  %1826 = vmatprep.subr.bf16.mxu0 %v1274
  %1827 = vmatpush1.bf16.msra.mxu0 %v1273
  %1828 = vmatprep.subr.bf16.mxu0 %v1276
  %1829 = vmatpush1.bf16.msra.mxu0 %v1275
  %1830 = vmatprep.subr.bf16.mxu0 %v1278
  %1831 = vmatpush1.bf16.msra.mxu0 %v1277
  %1832 = vmatprep.subr.bf16.mxu0 %v1280
  %1833 = vmatpush1.bf16.msra.mxu0 %v1279
  %1834 = vmatprep.subr.bf16.mxu0 %v1282
  %1835 = vmatpush1.bf16.msra.mxu0 %v1281
  %1836 = vmatprep.mubr.bf16.mxu0 %v372
  %1837 = vmatmul.mubr.bf16.gmra.mrb[0].mxu0 %v371
  %v1838 = vpop.f32.mrb[0].mxu0
  %v1839 = vadd.f32 %v1798, %v1838
  %v1840 = vpop.f32.mrb[0].mxu0
  %v1841 = vadd.f32 %v1800, %v1840
  %v1842 = vpop.f32.mrb[0].mxu0
  %v1843 = vpop.f32.mrb[0].mxu0
  %1844 = vdwg.mxu0
  %1845 = vmatprep.subr.bf16.mxu0 %v1284
  %1846 = vmatpush1.bf16.msra.mxu0 %v1283
  %1847 = vmatprep.subr.bf16.mxu0 %v1286
  %1848 = vmatpush1.bf16.msra.mxu0 %v1285
  %1849 = vmatprep.subr.bf16.mxu0 %v1288
  %1850 = vmatpush1.bf16.msra.mxu0 %v1287
  %1851 = vmatprep.subr.bf16.mxu0 %v1290
  %1852 = vmatpush1.bf16.msra.mxu0 %v1289
  %1853 = vmatprep.subr.bf16.mxu0 %v1292
  %1854 = vmatpush1.bf16.msra.mxu0 %v1291
  %1855 = vmatprep.subr.bf16.mxu0 %v1294
  %1856 = vmatpush1.bf16.msra.mxu0 %v1293
  %1857 = vmatprep.subr.bf16.mxu0 %v1296
  %1858 = vmatpush1.bf16.msra.mxu0 %v1295
  %1859 = vmatprep.subr.bf16.mxu0 %v1298
  %1860 = vmatpush1.bf16.msra.mxu0 %v1297
  %1861 = vmatprep.subr.bf16.mxu0 %v1300
  %1862 = vmatpush1.bf16.msra.mxu0 %v1299
  %1863 = vmatprep.subr.bf16.mxu0 %v1302
  %1864 = vmatpush1.bf16.msra.mxu0 %v1301
  %1865 = vmatprep.subr.bf16.mxu0 %v1304
  %1866 = vmatpush1.bf16.msra.mxu0 %v1303
  %1867 = vmatprep.subr.bf16.mxu0 %v1306
  %1868 = vmatpush1.bf16.msra.mxu0 %v1305
  %1869 = vmatprep.subr.bf16.mxu0 %v1308
  %1870 = vmatpush1.bf16.msra.mxu0 %v1307
  %1871 = vmatprep.subr.bf16.mxu0 %v1310
  %1872 = vmatpush1.bf16.msra.mxu0 %v1309
  %1873 = vmatprep.subr.bf16.mxu0 %v1312
  %1874 = vmatpush1.bf16.msra.mxu0 %v1311
  %1875 = vmatprep.subr.bf16.mxu0 %v1314
  %1876 = vmatpush1.bf16.msra.mxu0 %v1313
  %1877 = vmatprep.mubr.bf16.mxu0 %v374
  %1878 = vmatmul.mubr.bf16.gmra.mrb[0].mxu0 %v373
  %v1879 = vpop.f32.mrb[0].mxu0
  %v1880 = vadd.f32 %v1839, %v1879
  %v1881 = vpop.f32.mrb[0].mxu0
  %v1882 = vadd.f32 %v1841, %v1881
  %v1883 = vpop.f32.mrb[0].mxu0
  %v1884 = vpop.f32.mrb[0].mxu0
  %1885 = vdwg.mxu0
  %1886 = vmatprep.subr.bf16.mxu0 %v1316
  %1887 = vmatpush1.bf16.msra.mxu0 %v1315
  %1888 = vmatprep.subr.bf16.mxu0 %v1318
  %1889 = vmatpush1.bf16.msra.mxu0 %v1317
  %1890 = vmatprep.subr.bf16.mxu0 %v1320
  %1891 = vmatpush1.bf16.msra.mxu0 %v1319
  %1892 = vmatprep.subr.bf16.mxu0 %v1322
  %1893 = vmatpush1.bf16.msra.mxu0 %v1321
  %1894 = vmatprep.subr.bf16.mxu0 %v1324
  %1895 = vmatpush1.bf16.msra.mxu0 %v1323
  %1896 = vmatprep.subr.bf16.mxu0 %v1326
  %1897 = vmatpush1.bf16.msra.mxu0 %v1325
  %1898 = vmatprep.subr.bf16.mxu0 %v1328
  %1899 = vmatpush1.bf16.msra.mxu0 %v1327
  %1900 = vmatprep.subr.bf16.mxu0 %v1330
  %1901 = vmatpush1.bf16.msra.mxu0 %v1329
  %1902 = vmatprep.subr.bf16.mxu0 %v1332
  %1903 = vmatpush1.bf16.msra.mxu0 %v1331
  %1904 = vmatprep.subr.bf16.mxu0 %v1334
  %1905 = vmatpush1.bf16.msra.mxu0 %v1333
  %1906 = vmatprep.subr.bf16.mxu0 %v1336
  %1907 = vmatpush1.bf16.msra.mxu0 %v1335
  %1908 = vmatprep.subr.bf16.mxu0 %v1338
  %1909 = vmatpush1.bf16.msra.mxu0 %v1337
  %1910 = vmatprep.subr.bf16.mxu0 %v1340
  %1911 = vmatpush1.bf16.msra.mxu0 %v1339
  %1912 = vmatprep.subr.bf16.mxu0 %v1342
  %1913 = vmatpush1.bf16.msra.mxu0 %v1341
  %1914 = vmatprep.subr.bf16.mxu0 %v1344
  %1915 = vmatpush1.bf16.msra.mxu0 %v1343
  %1916 = vmatprep.subr.bf16.mxu0 %v1346
  %1917 = vmatpush1.bf16.msra.mxu0 %v1345
  %1918 = vmatprep.mubr.bf16.mxu0 %v376
  %1919 = vmatmul.mubr.bf16.gmra.mrb[0].mxu0 %v375
  %v1920 = vpop.f32.mrb[0].mxu0
  %v1921 = vadd.f32 %v1880, %v1920
  %v1922 = vpop.f32.mrb[0].mxu0
  %v1923 = vadd.f32 %v1882, %v1922
  %v1924 = vpop.f32.mrb[0].mxu0
  %v1925 = vpop.f32.mrb[0].mxu0
  %1926 = vdwg.mxu0
  %1927 = vmatprep.subr.bf16.mxu0 %v1348
  %1928 = vmatpush1.bf16.msra.mxu0 %v1347
  %1929 = vmatprep.subr.bf16.mxu0 %v1350
  %1930 = vmatpush1.bf16.msra.mxu0 %v1349
  %1931 = vmatprep.subr.bf16.mxu0 %v1352
  %1932 = vmatpush1.bf16.msra.mxu0 %v1351
  %1933 = vmatprep.subr.bf16.mxu0 %v1354
  %1934 = vmatpush1.bf16.msra.mxu0 %v1353
  %1935 = vmatprep.subr.bf16.mxu0 %v1356
  %1936 = vmatpush1.bf16.msra.mxu0 %v1355
  %1937 = vmatprep.subr.bf16.mxu0 %v1358
  %1938 = vmatpush1.bf16.msra.mxu0 %v1357
  %1939 = vmatprep.subr.bf16.mxu0 %v1360
  %1940 = vmatpush1.bf16.msra.mxu0 %v1359
  %1941 = vmatprep.subr.bf16.mxu0 %v1362
  %1942 = vmatpush1.bf16.msra.mxu0 %v1361
  %1943 = vmatprep.subr.bf16.mxu0 %v1364
  %1944 = vmatpush1.bf16.msra.mxu0 %v1363
  %1945 = vmatprep.subr.bf16.mxu0 %v1366
  %1946 = vmatpush1.bf16.msra.mxu0 %v1365
  %1947 = vmatprep.subr.bf16.mxu0 %v1368
  %1948 = vmatpush1.bf16.msra.mxu0 %v1367
  %1949 = vmatprep.subr.bf16.mxu0 %v1370
  %1950 = vmatpush1.bf16.msra.mxu0 %v1369
  %1951 = vmatprep.subr.bf16.mxu0 %v1372
  %1952 = vmatpush1.bf16.msra.mxu0 %v1371
  %1953 = vmatprep.subr.bf16.mxu0 %v1374
  %1954 = vmatpush1.bf16.msra.mxu0 %v1373
  %1955 = vmatprep.subr.bf16.mxu0 %v1376
  %1956 = vmatpush1.bf16.msra.mxu0 %v1375
  %1957 = vmatprep.subr.bf16.mxu0 %v1378
  %1958 = vmatpush1.bf16.msra.mxu0 %v1377
  %1959 = vmatprep.mubr.bf16.mxu0 %v378
  %1960 = vmatmul.mubr.bf16.gmra.mrb[0].mxu0 %v377
  %v1961 = vpop.f32.mrb[0].mxu0
  %v1962 = vadd.f32 %v1921, %v1961
  %v1963 = vpop.f32.mrb[0].mxu0
  %v1964 = vadd.f32 %v1923, %v1963
  %v1965 = vpop.f32.mrb[0].mxu0
  %v1966 = vpop.f32.mrb[0].mxu0
  %1967 = vdwg.mxu0
  %1968 = vmatprep.subr.bf16.mxu0 %v1380
  %1969 = vmatpush1.bf16.msra.mxu0 %v1379
  %1970 = vmatprep.subr.bf16.mxu0 %v1382
  %1971 = vmatpush1.bf16.msra.mxu0 %v1381
  %1972 = vmatprep.subr.bf16.mxu0 %v1384
  %1973 = vmatpush1.bf16.msra.mxu0 %v1383
  %1974 = vmatprep.subr.bf16.mxu0 %v1386
  %1975 = vmatpush1.bf16.msra.mxu0 %v1385
  %1976 = vmatprep.subr.bf16.mxu0 %v1388
  %1977 = vmatpush1.bf16.msra.mxu0 %v1387
  %1978 = vmatprep.subr.bf16.mxu0 %v1390
  %1979 = vmatpush1.bf16.msra.mxu0 %v1389
  %1980 = vmatprep.subr.bf16.mxu0 %v1392
  %1981 = vmatpush1.bf16.msra.mxu0 %v1391
  %1982 = vmatprep.subr.bf16.mxu0 %v1394
  %1983 = vmatpush1.bf16.msra.mxu0 %v1393
  %1984 = vmatprep.subr.bf16.mxu0 %v1396
  %1985 = vmatpush1.bf16.msra.mxu0 %v1395
  %1986 = vmatprep.subr.bf16.mxu0 %v1398
  %1987 = vmatpush1.bf16.msra.mxu0 %v1397
  %1988 = vmatprep.subr.bf16.mxu0 %v1400
  %1989 = vmatpush1.bf16.msra.mxu0 %v1399
  %1990 = vmatprep.subr.bf16.mxu0 %v1402
  %1991 = vmatpush1.bf16.msra.mxu0 %v1401
  %1992 = vmatprep.subr.bf16.mxu0 %v1404
  %1993 = vmatpush1.bf16.msra.mxu0 %v1403
  %1994 = vmatprep.subr.bf16.mxu0 %v1406
  %1995 = vmatpush1.bf16.msra.mxu0 %v1405
  %1996 = vmatprep.subr.bf16.mxu0 %v1408
  %1997 = vmatpush1.bf16.msra.mxu0 %v1407
  %1998 = vmatprep.subr.bf16.mxu0 %v1410
  %1999 = vmatpush1.bf16.msra.mxu0 %v1409
  %2000 = vmatprep.mubr.bf16.mxu0 %v380
  %2001 = vmatmul.mubr.bf16.gmra.mrb[0].mxu0 %v379
  %v2002 = vpop.f32.mrb[0].mxu0
  %v2003 = vadd.f32 %v1962, %v2002
  %v2004 = vpop.f32.mrb[0].mxu0
  %v2005 = vadd.f32 %v1964, %v2004
  %v2006 = vpop.f32.mrb[0].mxu0
  %v2007 = vpop.f32.mrb[0].mxu0
  %2008 = vdwg.mxu0
  %2009 = vmatprep.subr.bf16.mxu0 %v1412
  %2010 = vmatpush1.bf16.msra.mxu0 %v1411
  %2011 = vmatprep.subr.bf16.mxu0 %v1414
  %2012 = vmatpush1.bf16.msra.mxu0 %v1413
  %2013 = vmatprep.subr.bf16.mxu0 %v1416
  %2014 = vmatpush1.bf16.msra.mxu0 %v1415
  %2015 = vmatprep.subr.bf16.mxu0 %v1418
  %2016 = vmatpush1.bf16.msra.mxu0 %v1417
  %2017 = vmatprep.subr.bf16.mxu0 %v1420
  %2018 = vmatpush1.bf16.msra.mxu0 %v1419
  %2019 = vmatprep.subr.bf16.mxu0 %v1422
  %2020 = vmatpush1.bf16.msra.mxu0 %v1421
  %2021 = vmatprep.subr.bf16.mxu0 %v1424
  %2022 = vmatpush1.bf16.msra.mxu0 %v1423
  %2023 = vmatprep.subr.bf16.mxu0 %v1426
  %2024 = vmatpush1.bf16.msra.mxu0 %v1425
  %2025 = vmatprep.subr.bf16.mxu0 %v1428
  %2026 = vmatpush1.bf16.msra.mxu0 %v1427
  %2027 = vmatprep.subr.bf16.mxu0 %v1430
  %2028 = vmatpush1.bf16.msra.mxu0 %v1429
  %2029 = vmatprep.subr.bf16.mxu0 %v1432
  %2030 = vmatpush1.bf16.msra.mxu0 %v1431
  %2031 = vmatprep.subr.bf16.mxu0 %v1434
  %2032 = vmatpush1.bf16.msra.mxu0 %v1433
  %2033 = vmatprep.subr.bf16.mxu0 %v1436
  %2034 = vmatpush1.bf16.msra.mxu0 %v1435
  %2035 = vmatprep.subr.bf16.mxu0 %v1438
  %2036 = vmatpush1.bf16.msra.mxu0 %v1437
  %2037 = vmatprep.subr.bf16.mxu0 %v1440
  %2038 = vmatpush1.bf16.msra.mxu0 %v1439
  %2039 = vmatprep.subr.bf16.mxu0 %v1442
  %2040 = vmatpush1.bf16.msra.mxu0 %v1441
  %2041 = vmatprep.mubr.bf16.mxu0 %v382
  %2042 = vmatmul.mubr.bf16.gmra.mrb[0].mxu0 %v381
  %v2043 = vpop.f32.mrb[0].mxu0
  %v2044 = vadd.f32 %v2003, %v2043
  %v2045 = vpop.f32.mrb[0].mxu0
  %v2046 = vadd.f32 %v2005, %v2045
  %v2047 = vpop.f32.mrb[0].mxu0
  %v2048 = vpop.f32.mrb[0].mxu0
  %2049 = vdwg.mxu0
  %2050 = vmatprep.subr.bf16.mxu0 %v1444
  %2051 = vmatpush1.bf16.msra.mxu0 %v1443
  %2052 = vmatprep.subr.bf16.mxu0 %v1446
  %2053 = vmatpush1.bf16.msra.mxu0 %v1445
  %2054 = vmatprep.subr.bf16.mxu0 %v1448
  %2055 = vmatpush1.bf16.msra.mxu0 %v1447
  %2056 = vmatprep.subr.bf16.mxu0 %v1450
  %2057 = vmatpush1.bf16.msra.mxu0 %v1449
  %2058 = vmatprep.subr.bf16.mxu0 %v1452
  %2059 = vmatpush1.bf16.msra.mxu0 %v1451
  %2060 = vmatprep.subr.bf16.mxu0 %v1454
  %2061 = vmatpush1.bf16.msra.mxu0 %v1453
  %2062 = vmatprep.subr.bf16.mxu0 %v1456
  %2063 = vmatpush1.bf16.msra.mxu0 %v1455
  %2064 = vmatprep.subr.bf16.mxu0 %v1458
  %2065 = vmatpush1.bf16.msra.mxu0 %v1457
  %2066 = vmatprep.subr.bf16.mxu0 %v1460
  %2067 = vmatpush1.bf16.msra.mxu0 %v1459
  %2068 = vmatprep.subr.bf16.mxu0 %v1462
  %2069 = vmatpush1.bf16.msra.mxu0 %v1461
  %2070 = vmatprep.subr.bf16.mxu0 %v1464
  %2071 = vmatpush1.bf16.msra.mxu0 %v1463
  %2072 = vmatprep.subr.bf16.mxu0 %v1466
  %2073 = vmatpush1.bf16.msra.mxu0 %v1465
  %2074 = vmatprep.subr.bf16.mxu0 %v1468
  %2075 = vmatpush1.bf16.msra.mxu0 %v1467
  %2076 = vmatprep.subr.bf16.mxu0 %v1470
  %2077 = vmatpush1.bf16.msra.mxu0 %v1469
  %2078 = vmatprep.subr.bf16.mxu0 %v1472
  %2079 = vmatpush1.bf16.msra.mxu0 %v1471
  %2080 = vmatprep.subr.bf16.mxu0 %v1474
  %2081 = vmatpush1.bf16.msra.mxu0 %v1473
  %2082 = vmatprep.mubr.bf16.mxu0 %v384
  %2083 = vmatmul.mubr.bf16.gmra.mrb[0].mxu0 %v383
  %v2084 = vpop.f32.mrb[0].mxu0
  %v2085 = vadd.f32 %v2044, %v2084
  %v2086 = vpop.f32.mrb[0].mxu0
  %v2087 = vadd.f32 %v2046, %v2086
  %v2088 = vpop.f32.mrb[0].mxu0
  %v2089 = vpop.f32.mrb[0].mxu0
  %2090 = vdwg.mxu0
  %2091 = vmatprep.subr.bf16.mxu0 %v1476
  %2092 = vmatpush1.bf16.msra.mxu0 %v1475
  %2093 = vmatprep.subr.bf16.mxu0 %v1478
  %2094 = vmatpush1.bf16.msra.mxu0 %v1477
  %2095 = vmatprep.subr.bf16.mxu0 %v1480
  %2096 = vmatpush1.bf16.msra.mxu0 %v1479
  %2097 = vmatprep.subr.bf16.mxu0 %v1482
  %2098 = vmatpush1.bf16.msra.mxu0 %v1481
  %2099 = vmatprep.subr.bf16.mxu0 %v1484
  %2100 = vmatpush1.bf16.msra.mxu0 %v1483
  %2101 = vmatprep.subr.bf16.mxu0 %v1486
  %2102 = vmatpush1.bf16.msra.mxu0 %v1485
  %2103 = vmatprep.subr.bf16.mxu0 %v1488
  %2104 = vmatpush1.bf16.msra.mxu0 %v1487
  %2105 = vmatprep.subr.bf16.mxu0 %v1490
  %2106 = vmatpush1.bf16.msra.mxu0 %v1489
  %2107 = vmatprep.subr.bf16.mxu0 0
  %2108 = vmatpush1.bf16.msra.mxu0 0
  %2109 = vmatprep.subr.bf16.mxu0 0
  %2110 = vmatpush1.bf16.msra.mxu0 0
  %2111 = vmatprep.subr.bf16.mxu0 0
  %2112 = vmatpush1.bf16.msra.mxu0 0
  %2113 = vmatprep.subr.bf16.mxu0 0
  %2114 = vmatpush1.bf16.msra.mxu0 0
  %2115 = vmatprep.subr.bf16.mxu0 0
  %2116 = vmatpush1.bf16.msra.mxu0 0
  %2117 = vmatprep.subr.bf16.mxu0 0
  %2118 = vmatpush1.bf16.msra.mxu0 0
  %2119 = vmatprep.subr.bf16.mxu0 0
  %2120 = vmatpush1.bf16.msra.mxu0 0
  %2121 = vmatprep.subr.bf16.mxu0 0
  %2122 = vmatpush1.bf16.msra.mxu0 0
  %2123 = vmatprep.mubr.bf16.mxu0 0
  %2124 = vmatmul.mubr.bf16.gmra.mrb[0].mxu0 %v385
  %v2125 = vpop.f32.mrb[0].mxu0
  %v2126 = vadd.f32 %v2085, %v2125
  %v2127 = vpop.f32.mrb[0].mxu0
  %v2128 = vadd.f32 %v2087, %v2127
  %v2129 = vpop.f32.mrb[0].mxu0
  %v2130 = vpop.f32.mrb[0].mxu0
  %2131 = vdwg.mxu0
  %v2132 = vtanh.pop %v2126
  %v2133 = vtanh.pop %v2128
  %v2134 = vpack.c.bf16 %v2132, %v2132
  %v2135 = vpack.c.bf16 %v2133, %v2133
  %v2136 = vld [vmem:[%s4] sm:$0xf]
  %v2137 = vld [vmem:[%s4 + $0x4] sm:$0xf]
  %v2138 = vld [vmem:[%s4 + $0x8] sm:$0xf]
  %v2139 = vld [vmem:[%s4 + $0xc] sm:$0xf]
  %v2140 = vld [vmem:[%s4 + $0x10] sm:$0xf]
  %v2141 = vld [vmem:[%s4 + $0x14] sm:$0xf]
  %v2142 = vld [vmem:[%s4 + $0x18] sm:$0xf]
  %v2143 = vld [vmem:[%s4 + $0x1c] sm:$0xf]
  %v2144 = vld [vmem:[%s4 + $0x20] sm:$0xf]
  %v2145 = vld [vmem:[%s4 + $0x24] sm:$0xf]
  %v2146 = vld [vmem:[%s4 + $0x28] sm:$0xf]
  %v2147 = vld [vmem:[%s4 + $0x2c] sm:$0xf]
  %v2148 = vld [vmem:[%s4 + $0x30] sm:$0xf]
  %v2149 = vld [vmem:[%s4 + $0x34] sm:$0xf]
  %v2150 = vld [vmem:[%s4 + $0x38] sm:$0xf]
  %v2151 = vld [vmem:[%s4 + $0x3c] sm:$0xf]
  %v2152 = vld [vmem:[%s4 + $0x40] sm:$0xf]
  %v2153 = vld [vmem:[%s4 + $0x44] sm:$0xf]
  %v2154 = vld [vmem:[%s4 + $0x48] sm:$0xf]
  %v2155 = vld [vmem:[%s4 + $0x4c] sm:$0xf]
  %v2156 = vld [vmem:[%s4 + $0x50] sm:$0xf]
  %v2157 = vld [vmem:[%s4 + $0x54] sm:$0xf]
  %v2158 = vld [vmem:[%s4 + $0x58] sm:$0xf]
  %v2159 = vld [vmem:[%s4 + $0x5c] sm:$0xf]
  %v2160 = vld [vmem:[%s4 + $0x60] sm:$0xf]
  %v2161 = vld [vmem:[%s4 + $0x64] sm:$0xf]
  %v2162 = vld [vmem:[%s4 + $0x68] sm:$0xf]
  %v2163 = vld [vmem:[%s4 + $0x6c] sm:$0xf]
  %v2164 = vld [vmem:[%s4 + $0x70] sm:$0xf]
  %v2165 = vld [vmem:[%s4 + $0x74] sm:$0xf]
  %v2166 = vld [vmem:[%s4 + $0x78] sm:$0xf]
  %v2167 = vld [vmem:[%s4 + $0x7c] sm:$0xf]
  %v2168 = vld [vmem:[%s5] sm:$0x1]
  %v2170 = vlaneseq
  %v2171 = vshrl.u32 %v2170, 7
  %v2172 = vsub.s32 0, %v2171
  %v2173 = vrot.slane %v2168, %v2172
  %v2207 = vunpack.c.l.b16 %v2136
  %v2208 = vunpack.c.l.b16 %v2137
  %v2209 = vunpack.c.l.b16 %v2138
  %v2210 = vunpack.c.l.b16 %v2139
  %v2211 = vunpack.c.l.b16 %v2140
  %v2212 = vunpack.c.l.b16 %v2141
  %v2213 = vunpack.c.l.b16 %v2142
  %v2214 = vunpack.c.l.b16 %v2143
  %v2215 = vunpack.c.l.b16 %v2144
  %v2216 = vunpack.c.l.b16 %v2145
  %v2217 = vunpack.c.l.b16 %v2146
  %v2218 = vunpack.c.l.b16 %v2147
  %v2219 = vunpack.c.l.b16 %v2148
  %v2220 = vunpack.c.l.b16 %v2149
  %v2221 = vunpack.c.l.b16 %v2150
  %v2222 = vunpack.c.l.b16 %v2151
  %v2223 = vunpack.c.l.b16 %v2152
  %v2224 = vunpack.c.l.b16 %v2153
  %v2225 = vunpack.c.l.b16 %v2154
  %v2226 = vunpack.c.l.b16 %v2155
  %v2227 = vunpack.c.l.b16 %v2156
  %v2228 = vunpack.c.l.b16 %v2157
  %v2229 = vunpack.c.l.b16 %v2158
  %v2230 = vunpack.c.l.b16 %v2159
  %v2231 = vunpack.c.l.b16 %v2160
  %v2232 = vunpack.c.l.b16 %v2161
  %v2233 = vunpack.c.l.b16 %v2162
  %v2234 = vunpack.c.l.b16 %v2163
  %v2235 = vunpack.c.l.b16 %v2164
  %v2236 = vunpack.c.l.b16 %v2165
  %v2237 = vunpack.c.l.b16 %v2166
  %v2238 = vunpack.c.l.b16 %v2167
  %v2239 = vpack.c.b16 %v2208, %v2207
  %v2240 = vpack.c.b16 %v2210, %v2209
  %v2241 = vpack.c.b16 %v2212, %v2211
  %v2242 = vpack.c.b16 %v2214, %v2213
  %v2243 = vpack.c.b16 %v2216, %v2215
  %v2244 = vpack.c.b16 %v2218, %v2217
  %v2245 = vpack.c.b16 %v2220, %v2219
  %v2246 = vpack.c.b16 %v2222, %v2221
  %v2247 = vpack.c.b16 %v2224, %v2223
  %v2248 = vpack.c.b16 %v2226, %v2225
  %v2249 = vpack.c.b16 %v2228, %v2227
  %v2250 = vpack.c.b16 %v2230, %v2229
  %v2251 = vpack.c.b16 %v2232, %v2231
  %v2252 = vpack.c.b16 %v2234, %v2233
  %v2253 = vpack.c.b16 %v2236, %v2235
  %v2254 = vpack.c.b16 %v2238, %v2237
  %2271 = vmatprep.subr.bf16.mxu0 0
  %2272 = vmatpush1.bf16.msra.mxu0 %v2239
  %2273 = vmatprep.subr.bf16.mxu0 0
  %2274 = vmatpush1.bf16.msra.mxu0 %v2240
  %2275 = vmatprep.subr.bf16.mxu0 0
  %2276 = vmatpush1.bf16.msra.mxu0 %v2241
  %2277 = vmatprep.subr.bf16.mxu0 0
  %2278 = vmatpush1.bf16.msra.mxu0 %v2242
  %2279 = vmatprep.subr.bf16.mxu0 0
  %2280 = vmatpush1.bf16.msra.mxu0 %v2243
  %2281 = vmatprep.subr.bf16.mxu0 0
  %2282 = vmatpush1.bf16.msra.mxu0 %v2244
  %2283 = vmatprep.subr.bf16.mxu0 0
  %2284 = vmatpush1.bf16.msra.mxu0 %v2245
  %2285 = vmatprep.subr.bf16.mxu0 0
  %2286 = vmatpush1.bf16.msra.mxu0 %v2246
  %2287 = vmatprep.subr.bf16.mxu0 0
  %2288 = vmatpush1.bf16.msra.mxu0 %v2247
  %2289 = vmatprep.subr.bf16.mxu0 0
  %2290 = vmatpush1.bf16.msra.mxu0 %v2248
  %2291 = vmatprep.subr.bf16.mxu0 0
  %2292 = vmatpush1.bf16.msra.mxu0 %v2249
  %2293 = vmatprep.subr.bf16.mxu0 0
  %2294 = vmatpush1.bf16.msra.mxu0 %v2250
  %2295 = vmatprep.subr.bf16.mxu0 0
  %2296 = vmatpush1.bf16.msra.mxu0 %v2251
  %2297 = vmatprep.subr.bf16.mxu0 0
  %2298 = vmatpush1.bf16.msra.mxu0 %v2252
  %2299 = vmatprep.subr.bf16.mxu0 0
  %2300 = vmatpush1.bf16.msra.mxu0 %v2253
  %2301 = vmatprep.subr.bf16.mxu0 0
  %2302 = vmatpush1.bf16.msra.mxu0 %v2254
  %2303 = vmatprep.mubr.bf16.mxu0 %v2135
  %2304 = vmatmul.mubr.bf16.gmra.mrb[0].mxu0 %v2134
  %v2305 = vpop.f32.mrb[0].mxu0
  %v2306 = vadd.f32 %v2173, %v2305
  %v2307 = vpop.f32.mrb[0].mxu0
  %v2308 = vpop.f32.mrb[0].mxu0
  %v2309 = vpop.f32.mrb[0].mxu0
  %2310 = vdwg.mxu0
  %v2311 = vtanh.pop %v2306
  %v2312 = vpack.c.bf16 %v2311, %v2311
  %v2313 = vld [vmem:[%s6] sm:$0xf]
  %v2314 = vld [vmem:[%s6 + $0x4] sm:$0xf]
  %v2315 = vld [vmem:[%s6 + $0x8] sm:$0xf]
  %v2316 = vld [vmem:[%s6 + $0xc] sm:$0xf]
  %v2317 = vld [vmem:[%s6 + $0x10] sm:$0xf]
  %v2318 = vld [vmem:[%s6 + $0x14] sm:$0xf]
  %v2319 = vld [vmem:[%s6 + $0x18] sm:$0xf]
  %v2320 = vld [vmem:[%s6 + $0x1c] sm:$0xf]
  %v2321 = vld [vmem:[%s6 + $0x20] sm:$0xf]
  %v2322 = vld [vmem:[%s6 + $0x24] sm:$0xf]
  %v2323 = vld [vmem:[%s6 + $0x28] sm:$0xf]
  %v2324 = vld [vmem:[%s6 + $0x2c] sm:$0xf]
  %v2325 = vld [vmem:[%s6 + $0x30] sm:$0xf]
  %v2326 = vld [vmem:[%s6 + $0x34] sm:$0xf]
  %v2327 = vld [vmem:[%s6 + $0x38] sm:$0xf]
  %v2328 = vld [vmem:[%s6 + $0x3c] sm:$0xf]
  %v2329 = vld [vmem:[%s7] sm:$0x1]
  %v2331 = vlaneseq
  %v2332 = vshrl.u32 %v2331, 7
  %v2333 = vsub.s32 0, %v2332
  %v2334 = vrot.slane %v2329, %v2333
  %v2352 = vunpack.c.l.b16 %v2313
  %v2353 = vunpack.c.l.b16 %v2314
  %v2354 = vunpack.c.l.b16 %v2315
  %v2355 = vunpack.c.l.b16 %v2316
  %v2356 = vunpack.c.l.b16 %v2317
  %v2357 = vunpack.c.l.b16 %v2318
  %v2358 = vunpack.c.l.b16 %v2319
  %v2359 = vunpack.c.l.b16 %v2320
  %v2360 = vunpack.c.l.b16 %v2321
  %v2361 = vunpack.c.l.b16 %v2322
  %v2362 = vunpack.c.l.b16 %v2323
  %v2363 = vunpack.c.l.b16 %v2324
  %v2364 = vunpack.c.l.b16 %v2325
  %v2365 = vunpack.c.l.b16 %v2326
  %v2366 = vunpack.c.l.b16 %v2327
  %v2367 = vunpack.c.l.b16 %v2328
  %v2368 = vpack.c.b16 %v2353, %v2352
  %v2369 = vpack.c.b16 %v2355, %v2354
  %v2370 = vpack.c.b16 %v2357, %v2356
  %v2371 = vpack.c.b16 %v2359, %v2358
  %v2372 = vpack.c.b16 %v2361, %v2360
  %v2373 = vpack.c.b16 %v2363, %v2362
  %v2374 = vpack.c.b16 %v2365, %v2364
  %v2375 = vpack.c.b16 %v2367, %v2366
  %2384 = vmatprep.subr.bf16.mxu0 0
  %2385 = vmatpush1.bf16.msra.mxu0 %v2368
  %2386 = vmatprep.subr.bf16.mxu0 0
  %2387 = vmatpush1.bf16.msra.mxu0 %v2369
  %2388 = vmatprep.subr.bf16.mxu0 0
  %2389 = vmatpush1.bf16.msra.mxu0 %v2370
  %2390 = vmatprep.subr.bf16.mxu0 0
  %2391 = vmatpush1.bf16.msra.mxu0 %v2371
  %2392 = vmatprep.subr.bf16.mxu0 0
  %2393 = vmatpush1.bf16.msra.mxu0 %v2372
  %2394 = vmatprep.subr.bf16.mxu0 0
  %2395 = vmatpush1.bf16.msra.mxu0 %v2373
  %2396 = vmatprep.subr.bf16.mxu0 0
  %2397 = vmatpush1.bf16.msra.mxu0 %v2374
  %2398 = vmatprep.subr.bf16.mxu0 0
  %2399 = vmatpush1.bf16.msra.mxu0 %v2375
  %2400 = vmatprep.subr.bf16.mxu0 0
  %2401 = vmatpush1.bf16.msra.mxu0 0
  %2402 = vmatprep.subr.bf16.mxu0 0
  %2403 = vmatpush1.bf16.msra.mxu0 0
  %2404 = vmatprep.subr.bf16.mxu0 0
  %2405 = vmatpush1.bf16.msra.mxu0 0
  %2406 = vmatprep.subr.bf16.mxu0 0
  %2407 = vmatpush1.bf16.msra.mxu0 0
  %2408 = vmatprep.subr.bf16.mxu0 0
  %2409 = vmatpush1.bf16.msra.mxu0 0
  %2410 = vmatprep.subr.bf16.mxu0 0
  %2411 = vmatpush1.bf16.msra.mxu0 0
  %2412 = vmatprep.subr.bf16.mxu0 0
  %2413 = vmatpush1.bf16.msra.mxu0 0
  %2414 = vmatprep.subr.bf16.mxu0 0
  %2415 = vmatpush1.bf16.msra.mxu0 0
  %2416 = vmatprep.mubr.bf16.mxu0 0
  %2417 = vmatmul.mubr.bf16.gmra.mrb[0].mxu0 %v2312
  %v2418 = vpop.f32.mrb[0].mxu0
  %v2419 = vadd.f32 %v2334, %v2418
  %v2420 = vpop.f32.mrb[0].mxu0
  %v2421 = vpop.f32.mrb[0].mxu0
  %v2422 = vpop.f32.mrb[0].mxu0
  %2423 = vdwg.mxu0
  %vm2424 = vcmask 523264
  %2425 = vst.msk [vmem:[%s15] sm:$0xff] %vm2424, %v2419
  %v2426 = vld [vmem:[%s1] sm:$0xff]
  %v2427 = vmul.f32 %v2419, 0.5
  %v2428 = vmul.f32 %v2427, 1.442695
  %v2429 = vpow.pop %v2428
  %2431 = vrot.lane.b32.xlu0 %v2429, 96
  %v2432 = vpop.permute.xlu0 %2431
  %v2434 = vmul.f32 %v2426, %v2432
  %v2435 = vadd.f32 %v2419, %v2434
  %v2436 = vpack.c.bf16 %v2435, %v2435
  %v2437 = vld [vmem:[%s8] sm:$0xf]
  %v2438 = vld [vmem:[%s8 + $0x4] sm:$0xf]
  %v2439 = vld [vmem:[%s8 + $0x8] sm:$0xf]
  %v2440 = vld [vmem:[%s8 + $0xc] sm:$0xf]
  %v2441 = vld [vmem:[%s9] sm:$0x1]
  %v2443 = vlaneseq
  %v2444 = vshrl.u32 %v2443, 7
  %v2445 = vsub.s32 0, %v2444
  %v2446 = vrot.slane %v2441, %v2445
  %v2452 = vunpack.c.l.b16 %v2437
  %v2453 = vunpack.c.l.b16 %v2438
  %v2454 = vunpack.c.l.b16 %v2439
  %v2455 = vunpack.c.l.b16 %v2440
  %v2456 = vpack.c.b16 %v2453, %v2452
  %v2457 = vpack.c.b16 %v2455, %v2454
  %vm2460 = vcmask 261120
  %v2462 = vsel %vm2460, %v2436, 0
  %2464 = vmatprep.subr.bf16.mxu0 0
  %2465 = vmatpush1.bf16.msra.mxu0 %v2456
  %2466 = vmatprep.subr.bf16.mxu0 0
  %2467 = vmatpush1.bf16.msra.mxu0 %v2457
  %2468 = vmatprep.subr.bf16.mxu0 0
  %2469 = vmatpush1.bf16.msra.mxu0 0
  %2470 = vmatprep.subr.bf16.mxu0 0
  %2471 = vmatpush1.bf16.msra.mxu0 0
  %2472 = vmatprep.subr.bf16.mxu0 0
  %2473 = vmatpush1.bf16.msra.mxu0 0
  %2474 = vmatprep.subr.bf16.mxu0 0
  %2475 = vmatpush1.bf16.msra.mxu0 0
  %2476 = vmatprep.subr.bf16.mxu0 0
  %2477 = vmatpush1.bf16.msra.mxu0 0
  %2478 = vmatprep.subr.bf16.mxu0 0
  %2479 = vmatpush1.bf16.msra.mxu0 0
  %2480 = vmatprep.subr.bf16.mxu0 0
  %2481 = vmatpush1.bf16.msra.mxu0 0
  %2482 = vmatprep.subr.bf16.mxu0 0
  %2483 = vmatpush1.bf16.msra.mxu0 0
  %2484 = vmatprep.subr.bf16.mxu0 0
  %2485 = vmatpush1.bf16.msra.mxu0 0
  %2486 = vmatprep.subr.bf16.mxu0 0
  %2487 = vmatpush1.bf16.msra.mxu0 0
  %2488 = vmatprep.subr.bf16.mxu0 0
  %2489 = vmatpush1.bf16.msra.mxu0 0
  %2490 = vmatprep.subr.bf16.mxu0 0
  %2491 = vmatpush1.bf16.msra.mxu0 0
  %2492 = vmatprep.subr.bf16.mxu0 0
  %2493 = vmatpush1.bf16.msra.mxu0 0
  %2494 = vmatprep.subr.bf16.mxu0 0
  %2495 = vmatpush1.bf16.msra.mxu0 0
  %2496 = vmatprep.mubr.bf16.mxu0 0
  %2497 = vmatmul.mubr.bf16.gmra.mrb[0].mxu0 %v2462
  %v2498 = vpop.f32.mrb[0].mxu0
  %v2499 = vadd.f32 %v2446, %v2498
  %v2500 = vpop.f32.mrb[0].mxu0
  %v2501 = vpop.f32.mrb[0].mxu0
  %v2502 = vpop.f32.mrb[0].mxu0
  %2503 = vdwg.mxu0
  %v2504 = vtanh.pop %v2499
  %v2505 = vpack.c.bf16 %v2504, %v2504
  %v2506 = vld [vmem:[%s10] sm:$0xff]
  %v2507 = vld [vmem:[%s10 + $0x8] sm:$0xff]
  %v2508 = vld [vmem:[%s10 + $0x10] sm:$0xff]
  %v2509 = vld [vmem:[%s10 + $0x18] sm:$0xff]
  %v2510 = vld [vmem:[%s10 + $0x20] sm:$0xff]
  %v2511 = vld [vmem:[%s10 + $0x28] sm:$0xff]
  %v2512 = vld [vmem:[%s10 + $0x30] sm:$0xff]
  %v2513 = vld [vmem:[%s10 + $0x38] sm:$0xff]
  %v2514 = vld [vmem:[%s10 + $0x40] sm:$0xff]
  %v2515 = vld [vmem:[%s10 + $0x48] sm:$0xff]
  %v2516 = vld [vmem:[%s10 + $0x50] sm:$0xff]
  %v2517 = vld [vmem:[%s10 + $0x58] sm:$0xff]
  %v2518 = vld [vmem:[%s10 + $0x60] sm:$0xff]
  %v2519 = vld [vmem:[%s10 + $0x68] sm:$0xff]
  %v2520 = vld [vmem:[%s10 + $0x70] sm:$0xff]
  %v2521 = vld [vmem:[%s10 + $0x78] sm:$0xff]
  %v2522 = vld [vmem:[%s11] sm:$0x3]
  %v2524 = vlaneseq
  %v2525 = vshrl.u32 %v2524, 7
  %v2526 = vsub.s32 0, %v2525
  %v2527 = vrot.slane %v2522, %v2526
  %v2528 = vlaneseq
  %v2529 = vshrl.u32 %v2528, 7
  %v2530 = vsub.s32 1, %v2529
  %v2531 = vrot.slane %v2522, %v2530
  %v2550 = vunpack.c.l.b16 %v2506
  %v2551 = vunpack.c.h.b16 %v2506
  %v2552 = vunpack.c.l.b16 %v2507
  %v2553 = vunpack.c.h.b16 %v2507
  %v2554 = vunpack.c.l.b16 %v2508
  %v2555 = vunpack.c.h.b16 %v2508
  %v2556 = vunpack.c.l.b16 %v2509
  %v2557 = vunpack.c.h.b16 %v2509
  %v2558 = vunpack.c.l.b16 %v2510
  %v2559 = vunpack.c.h.b16 %v2510
  %v2560 = vunpack.c.l.b16 %v2511
  %v2561 = vunpack.c.h.b16 %v2511
  %v2562 = vunpack.c.l.b16 %v2512
  %v2563 = vunpack.c.h.b16 %v2512
  %v2564 = vunpack.c.l.b16 %v2513
  %v2565 = vunpack.c.h.b16 %v2513
  %v2566 = vunpack.c.l.b16 %v2514
  %v2567 = vunpack.c.h.b16 %v2514
  %v2568 = vunpack.c.l.b16 %v2515
  %v2569 = vunpack.c.h.b16 %v2515
  %v2570 = vunpack.c.l.b16 %v2516
  %v2571 = vunpack.c.h.b16 %v2516
  %v2572 = vunpack.c.l.b16 %v2517
  %v2573 = vunpack.c.h.b16 %v2517
  %v2574 = vunpack.c.l.b16 %v2518
  %v2575 = vunpack.c.h.b16 %v2518
  %v2576 = vunpack.c.l.b16 %v2519
  %v2577 = vunpack.c.h.b16 %v2519
  %v2578 = vunpack.c.l.b16 %v2520
  %v2579 = vunpack.c.h.b16 %v2520
  %v2580 = vunpack.c.l.b16 %v2521
  %v2581 = vunpack.c.h.b16 %v2521
  %v2582 = vpack.c.b16 %v2552, %v2550
  %v2583 = vpack.c.b16 %v2553, %v2551
  %v2584 = vpack.c.b16 %v2556, %v2554
  %v2585 = vpack.c.b16 %v2557, %v2555
  %v2586 = vpack.c.b16 %v2560, %v2558
  %v2587 = vpack.c.b16 %v2561, %v2559
  %v2588 = vpack.c.b16 %v2564, %v2562
  %v2589 = vpack.c.b16 %v2565, %v2563
  %v2590 = vpack.c.b16 %v2568, %v2566
  %v2591 = vpack.c.b16 %v2569, %v2567
  %v2592 = vpack.c.b16 %v2572, %v2570
  %v2593 = vpack.c.b16 %v2573, %v2571
  %v2594 = vpack.c.b16 %v2576, %v2574
  %v2595 = vpack.c.b16 %v2577, %v2575
  %v2596 = vpack.c.b16 %v2580, %v2578
  %v2597 = vpack.c.b16 %v2581, %v2579
  %2614 = vmatprep.subr.bf16.mxu0 %v2583
  %2615 = vmatpush1.bf16.msra.mxu0 %v2582
  %2616 = vmatprep.subr.bf16.mxu0 %v2585
  %2617 = vmatpush1.bf16.msra.mxu0 %v2584
  %2618 = vmatprep.subr.bf16.mxu0 %v2587
  %2619 = vmatpush1.bf16.msra.mxu0 %v2586
  %2620 = vmatprep.subr.bf16.mxu0 %v2589
  %2621 = vmatpush1.bf16.msra.mxu0 %v2588
  %2622 = vmatprep.subr.bf16.mxu0 %v2591
  %2623 = vmatpush1.bf16.msra.mxu0 %v2590
  %2624 = vmatprep.subr.bf16.mxu0 %v2593
  %2625 = vmatpush1.bf16.msra.mxu0 %v2592
  %2626 = vmatprep.subr.bf16.mxu0 %v2595
  %2627 = vmatpush1.bf16.msra.mxu0 %v2594
  %2628 = vmatprep.subr.bf16.mxu0 %v2597
  %2629 = vmatpush1.bf16.msra.mxu0 %v2596
  %2630 = vmatprep.subr.bf16.mxu0 0
  %2631 = vmatpush1.bf16.msra.mxu0 0
  %2632 = vmatprep.subr.bf16.mxu0 0
  %2633 = vmatpush1.bf16.msra.mxu0 0
  %2634 = vmatprep.subr.bf16.mxu0 0
  %2635 = vmatpush1.bf16.msra.mxu0 0
  %2636 = vmatprep.subr.bf16.mxu0 0
  %2637 = vmatpush1.bf16.msra.mxu0 0
  %2638 = vmatprep.subr.bf16.mxu0 0
  %2639 = vmatpush1.bf16.msra.mxu0 0
  %2640 = vmatprep.subr.bf16.mxu0 0
  %2641 = vmatpush1.bf16.msra.mxu0 0
  %2642 = vmatprep.subr.bf16.mxu0 0
  %2643 = vmatpush1.bf16.msra.mxu0 0
  %2644 = vmatprep.subr.bf16.mxu0 0
  %2645 = vmatpush1.bf16.msra.mxu0 0
  %2646 = vmatprep.mubr.bf16.mxu0 0
  %2647 = vmatmul.mubr.bf16.gmra.mrb[0].mxu0 %v2505
  %v2648 = vpop.f32.mrb[0].mxu0
  %v2649 = vadd.f32 %v2527, %v2648
  %v2650 = vpop.f32.mrb[0].mxu0
  %v2651 = vadd.f32 %v2531, %v2650
  %v2652 = vpop.f32.mrb[0].mxu0
  %v2653 = vpop.f32.mrb[0].mxu0
  %2654 = vdwg.mxu0
  %v2655 = vtanh.pop %v2649
  %v2656 = vtanh.pop %v2651
  %v2657 = vpack.c.bf16 %v2655, %v2655
  %v2658 = vpack.c.bf16 %v2656, %v2656
  %v2659 = vld [vmem:[%s12] sm:$0xff]
  %v2660 = vld [vmem:[%s12 + $0x8] sm:$0xff]
  %v2661 = vld [vmem:[%s12 + $0x10] sm:$0xff]
  %v2662 = vld [vmem:[%s12 + $0x18] sm:$0xff]
  %v2663 = vld [vmem:[%s12 + $0x20] sm:$0xff]
  %v2664 = vld [vmem:[%s12 + $0x28] sm:$0xff]
  %v2665 = vld [vmem:[%s12 + $0x30] sm:$0xff]
  %v2666 = vld [vmem:[%s12 + $0x38] sm:$0xff]
  %v2667 = vld [vmem:[%s12 + $0x40] sm:$0xff]
  %v2668 = vld [vmem:[%s12 + $0x48] sm:$0xff]
  %v2669 = vld [vmem:[%s12 + $0x50] sm:$0xff]
  %v2670 = vld [vmem:[%s12 + $0x58] sm:$0xff]
  %v2671 = vld [vmem:[%s12 + $0x60] sm:$0xff]
  %v2672 = vld [vmem:[%s12 + $0x68] sm:$0xff]
  %v2673 = vld [vmem:[%s12 + $0x70] sm:$0xff]
  %v2674 = vld [vmem:[%s12 + $0x78] sm:$0xff]
  %v2675 = vld [vmem:[%s12 + $0x80] sm:$0xff]
  %v2676 = vld [vmem:[%s12 + $0x88] sm:$0xff]
  %v2677 = vld [vmem:[%s12 + $0x90] sm:$0xff]
  %v2678 = vld [vmem:[%s12 + $0x98] sm:$0xff]
  %v2679 = vld [vmem:[%s12 + $0xa0] sm:$0xff]
  %v2680 = vld [vmem:[%s12 + $0xa8] sm:$0xff]
  %v2681 = vld [vmem:[%s12 + $0xb0] sm:$0xff]
  %v2682 = vld [vmem:[%s12 + $0xb8] sm:$0xff]
  %v2683 = vld [vmem:[%s12 + $0xc0] sm:$0xff]
  %v2684 = vld [vmem:[%s12 + $0xc8] sm:$0xff]
  %v2685 = vld [vmem:[%s12 + $0xd0] sm:$0xff]
  %v2686 = vld [vmem:[%s12 + $0xd8] sm:$0xff]
  %v2687 = vld [vmem:[%s12 + $0xe0] sm:$0xff]
  %v2688 = vld [vmem:[%s12 + $0xe8] sm:$0xff]
  %v2689 = vld [vmem:[%s12 + $0xf0] sm:$0xff]
  %v2690 = vld [vmem:[%s12 + $0xf8] sm:$0xff]
  %v2691 = vld [vmem:[%s13] sm:$0x3]
  %v2693 = vlaneseq
  %v2694 = vshrl.u32 %v2693, 7
  %v2695 = vsub.s32 0, %v2694
  %v2696 = vrot.slane %v2691, %v2695
  %v2697 = vlaneseq
  %v2698 = vshrl.u32 %v2697, 7
  %v2699 = vsub.s32 1, %v2698
  %v2700 = vrot.slane %v2691, %v2699
  %v2735 = vunpack.c.l.b16 %v2659
  %v2736 = vunpack.c.h.b16 %v2659
  %v2737 = vunpack.c.l.b16 %v2660
  %v2738 = vunpack.c.h.b16 %v2660
  %v2739 = vunpack.c.l.b16 %v2661
  %v2740 = vunpack.c.h.b16 %v2661
  %v2741 = vunpack.c.l.b16 %v2662
  %v2742 = vunpack.c.h.b16 %v2662
  %v2743 = vunpack.c.l.b16 %v2663
  %v2744 = vunpack.c.h.b16 %v2663
  %v2745 = vunpack.c.l.b16 %v2664
  %v2746 = vunpack.c.h.b16 %v2664
  %v2747 = vunpack.c.l.b16 %v2665
  %v2748 = vunpack.c.h.b16 %v2665
  %v2749 = vunpack.c.l.b16 %v2666
  %v2750 = vunpack.c.h.b16 %v2666
  %v2751 = vunpack.c.l.b16 %v2667
  %v2752 = vunpack.c.h.b16 %v2667
  %v2753 = vunpack.c.l.b16 %v2668
  %v2754 = vunpack.c.h.b16 %v2668
  %v2755 = vunpack.c.l.b16 %v2669
  %v2756 = vunpack.c.h.b16 %v2669
  %v2757 = vunpack.c.l.b16 %v2670
  %v2758 = vunpack.c.h.b16 %v2670
  %v2759 = vunpack.c.l.b16 %v2671
  %v2760 = vunpack.c.h.b16 %v2671
  %v2761 = vunpack.c.l.b16 %v2672
  %v2762 = vunpack.c.h.b16 %v2672
  %v2763 = vunpack.c.l.b16 %v2673
  %v2764 = vunpack.c.h.b16 %v2673
  %v2765 = vunpack.c.l.b16 %v2674
  %v2766 = vunpack.c.h.b16 %v2674
  %v2767 = vunpack.c.l.b16 %v2675
  %v2768 = vunpack.c.h.b16 %v2675
  %v2769 = vunpack.c.l.b16 %v2676
  %v2770 = vunpack.c.h.b16 %v2676
  %v2771 = vunpack.c.l.b16 %v2677
  %v2772 = vunpack.c.h.b16 %v2677
  %v2773 = vunpack.c.l.b16 %v2678
  %v2774 = vunpack.c.h.b16 %v2678
  %v2775 = vunpack.c.l.b16 %v2679
  %v2776 = vunpack.c.h.b16 %v2679
  %v2777 = vunpack.c.l.b16 %v2680
  %v2778 = vunpack.c.h.b16 %v2680
  %v2779 = vunpack.c.l.b16 %v2681
  %v2780 = vunpack.c.h.b16 %v2681
  %v2781 = vunpack.c.l.b16 %v2682
  %v2782 = vunpack.c.h.b16 %v2682
  %v2783 = vunpack.c.l.b16 %v2683
  %v2784 = vunpack.c.h.b16 %v2683
  %v2785 = vunpack.c.l.b16 %v2684
  %v2786 = vunpack.c.h.b16 %v2684
  %v2787 = vunpack.c.l.b16 %v2685
  %v2788 = vunpack.c.h.b16 %v2685
  %v2789 = vunpack.c.l.b16 %v2686
  %v2790 = vunpack.c.h.b16 %v2686
  %v2791 = vunpack.c.l.b16 %v2687
  %v2792 = vunpack.c.h.b16 %v2687
  %v2793 = vunpack.c.l.b16 %v2688
  %v2794 = vunpack.c.h.b16 %v2688
  %v2795 = vunpack.c.l.b16 %v2689
  %v2796 = vunpack.c.h.b16 %v2689
  %v2797 = vunpack.c.l.b16 %v2690
  %v2798 = vunpack.c.h.b16 %v2690
  %v2799 = vpack.c.b16 %v2737, %v2735
  %v2800 = vpack.c.b16 %v2738, %v2736
  %v2801 = vpack.c.b16 %v2741, %v2739
  %v2802 = vpack.c.b16 %v2742, %v2740
  %v2803 = vpack.c.b16 %v2745, %v2743
  %v2804 = vpack.c.b16 %v2746, %v2744
  %v2805 = vpack.c.b16 %v2749, %v2747
  %v2806 = vpack.c.b16 %v2750, %v2748
  %v2807 = vpack.c.b16 %v2753, %v2751
  %v2808 = vpack.c.b16 %v2754, %v2752
  %v2809 = vpack.c.b16 %v2757, %v2755
  %v2810 = vpack.c.b16 %v2758, %v2756
  %v2811 = vpack.c.b16 %v2761, %v2759
  %v2812 = vpack.c.b16 %v2762, %v2760
  %v2813 = vpack.c.b16 %v2765, %v2763
  %v2814 = vpack.c.b16 %v2766, %v2764
  %v2815 = vpack.c.b16 %v2769, %v2767
  %v2816 = vpack.c.b16 %v2770, %v2768
  %v2817 = vpack.c.b16 %v2773, %v2771
  %v2818 = vpack.c.b16 %v2774, %v2772
  %v2819 = vpack.c.b16 %v2777, %v2775
  %v2820 = vpack.c.b16 %v2778, %v2776
  %v2821 = vpack.c.b16 %v2781, %v2779
  %v2822 = vpack.c.b16 %v2782, %v2780
  %v2823 = vpack.c.b16 %v2785, %v2783
  %v2824 = vpack.c.b16 %v2786, %v2784
  %v2825 = vpack.c.b16 %v2789, %v2787
  %v2826 = vpack.c.b16 %v2790, %v2788
  %v2827 = vpack.c.b16 %v2793, %v2791
  %v2828 = vpack.c.b16 %v2794, %v2792
  %v2829 = vpack.c.b16 %v2797, %v2795
  %v2830 = vpack.c.b16 %v2798, %v2796
  %2863 = vmatprep.subr.bf16.mxu0 %v2800
  %2864 = vmatpush1.bf16.msra.mxu0 %v2799
  %2865 = vmatprep.subr.bf16.mxu0 %v2802
  %2866 = vmatpush1.bf16.msra.mxu0 %v2801
  %2867 = vmatprep.subr.bf16.mxu0 %v2804
  %2868 = vmatpush1.bf16.msra.mxu0 %v2803
  %2869 = vmatprep.subr.bf16.mxu0 %v2806
  %2870 = vmatpush1.bf16.msra.mxu0 %v2805
  %2871 = vmatprep.subr.bf16.mxu0 %v2808
  %2872 = vmatpush1.bf16.msra.mxu0 %v2807
  %2873 = vmatprep.subr.bf16.mxu0 %v2810
  %2874 = vmatpush1.bf16.msra.mxu0 %v2809
  %2875 = vmatprep.subr.bf16.mxu0 %v2812
  %2876 = vmatpush1.bf16.msra.mxu0 %v2811
  %2877 = vmatprep.subr.bf16.mxu0 %v2814
  %2878 = vmatpush1.bf16.msra.mxu0 %v2813
  %2879 = vmatprep.subr.bf16.mxu0 %v2816
  %2880 = vmatpush1.bf16.msra.mxu0 %v2815
  %2881 = vmatprep.subr.bf16.mxu0 %v2818
  %2882 = vmatpush1.bf16.msra.mxu0 %v2817
  %2883 = vmatprep.subr.bf16.mxu0 %v2820
  %2884 = vmatpush1.bf16.msra.mxu0 %v2819
  %2885 = vmatprep.subr.bf16.mxu0 %v2822
  %2886 = vmatpush1.bf16.msra.mxu0 %v2821
  %2887 = vmatprep.subr.bf16.mxu0 %v2824
  %2888 = vmatpush1.bf16.msra.mxu0 %v2823
  %2889 = vmatprep.subr.bf16.mxu0 %v2826
  %2890 = vmatpush1.bf16.msra.mxu0 %v2825
  %2891 = vmatprep.subr.bf16.mxu0 %v2828
  %2892 = vmatpush1.bf16.msra.mxu0 %v2827
  %2893 = vmatprep.subr.bf16.mxu0 %v2830
  %2894 = vmatpush1.bf16.msra.mxu0 %v2829
  %2895 = vmatprep.mubr.bf16.mxu0 %v2658
  %2896 = vmatmul.mubr.bf16.gmra.mrb[0].mxu0 %v2657
  %v2897 = vpop.f32.mrb[0].mxu0
  %v2898 = vadd.f32 %v2696, %v2897
  %v2899 = vpop.f32.mrb[0].mxu0
  %v2900 = vadd.f32 %v2700, %v2899
  %v2901 = vpop.f32.mrb[0].mxu0
  %v2902 = vpop.f32.mrb[0].mxu0
  %2903 = vdwg.mxu0
  %2904 = vst [vmem:[%s14] sm:$0xff] %v2898
  %vm2905 = vcmask 556032
  %2906 = vst.msk [vmem:[%s14 + $0x8] sm:$0xff] %vm2905, %v2900
  %s2907 = scalar_lea.vmem %s12, 256
  %v2908 = vld [vmem:[%s2907] sm:$0xff]
  %v2909 = vld [vmem:[%s2907 + $0x8] sm:$0xff]
  %v2910 = vld [vmem:[%s2907 + $0x10] sm:$0xff]
  %v2911 = vld [vmem:[%s2907 + $0x18] sm:$0xff]
  %v2912 = vld [vmem:[%s2907 + $0x20] sm:$0xff]
  %v2913 = vld [vmem:[%s2907 + $0x28] sm:$0xff]
  %v2914 = vld [vmem:[%s2907 + $0x30] sm:$0xff]
  %v2915 = vld [vmem:[%s2907 + $0x38] sm:$0xff]
  %v2916 = vld [vmem:[%s2907 + $0x40] sm:$0xff]
  %v2917 = vld [vmem:[%s2907 + $0x48] sm:$0xff]
  %v2918 = vld [vmem:[%s2907 + $0x50] sm:$0xff]
  %v2919 = vld [vmem:[%s2907 + $0x58] sm:$0xff]
  %v2920 = vld [vmem:[%s2907 + $0x60] sm:$0xff]
  %v2921 = vld [vmem:[%s2907 + $0x68] sm:$0xff]
  %v2922 = vld [vmem:[%s2907 + $0x70] sm:$0xff]
  %v2923 = vld [vmem:[%s2907 + $0x78] sm:$0xff]
  %v2924 = vld [vmem:[%s2907 + $0x80] sm:$0xff]
  %v2925 = vld [vmem:[%s2907 + $0x88] sm:$0xff]
  %v2926 = vld [vmem:[%s2907 + $0x90] sm:$0xff]
  %v2927 = vld [vmem:[%s2907 + $0x98] sm:$0xff]
  %v2928 = vld [vmem:[%s2907 + $0xa0] sm:$0xff]
  %v2929 = vld [vmem:[%s2907 + $0xa8] sm:$0xff]
  %v2930 = vld [vmem:[%s2907 + $0xb0] sm:$0xff]
  %v2931 = vld [vmem:[%s2907 + $0xb8] sm:$0xff]
  %v2932 = vld [vmem:[%s2907 + $0xc0] sm:$0xff]
  %v2933 = vld [vmem:[%s2907 + $0xc8] sm:$0xff]
  %v2934 = vld [vmem:[%s2907 + $0xd0] sm:$0xff]
  %v2935 = vld [vmem:[%s2907 + $0xd8] sm:$0xff]
  %v2936 = vld [vmem:[%s2907 + $0xe0] sm:$0xff]
  %v2937 = vld [vmem:[%s2907 + $0xe8] sm:$0xff]
  %v2938 = vld [vmem:[%s2907 + $0xf0] sm:$0xff]
  %v2939 = vld [vmem:[%s2907 + $0xf8] sm:$0xff]
  %s2940 = scalar_lea.vmem %s13, 2
  %v2941 = vld [vmem:[%s2940] sm:$0x3]
  %v2943 = vlaneseq
  %v2944 = vshrl.u32 %v2943, 7
  %v2945 = vsub.s32 0, %v2944
  %v2946 = vrot.slane %v2941, %v2945
  %v2947 = vlaneseq
  %v2948 = vshrl.u32 %v2947, 7
  %v2949 = vsub.s32 1, %v2948
  %v2950 = vrot.slane %v2941, %v2949
  %v2985 = vunpack.c.l.b16 %v2908
  %v2986 = vunpack.c.h.b16 %v2908
  %v2987 = vunpack.c.l.b16 %v2909
  %v2988 = vunpack.c.h.b16 %v2909
  %v2989 = vunpack.c.l.b16 %v2910
  %v2990 = vunpack.c.h.b16 %v2910
  %v2991 = vunpack.c.l.b16 %v2911
  %v2992 = vunpack.c.h.b16 %v2911
  %v2993 = vunpack.c.l.b16 %v2912
  %v2994 = vunpack.c.h.b16 %v2912
  %v2995 = vunpack.c.l.b16 %v2913
  %v2996 = vunpack.c.h.b16 %v2913
  %v2997 = vunpack.c.l.b16 %v2914
  %v2998 = vunpack.c.h.b16 %v2914
  %v2999 = vunpack.c.l.b16 %v2915
  %v3000 = vunpack.c.h.b16 %v2915
  %v3001 = vunpack.c.l.b16 %v2916
  %v3002 = vunpack.c.h.b16 %v2916
  %v3003 = vunpack.c.l.b16 %v2917
  %v3004 = vunpack.c.h.b16 %v2917
  %v3005 = vunpack.c.l.b16 %v2918
  %v3006 = vunpack.c.h.b16 %v2918
  %v3007 = vunpack.c.l.b16 %v2919
  %v3008 = vunpack.c.h.b16 %v2919
  %v3009 = vunpack.c.l.b16 %v2920
  %v3010 = vunpack.c.h.b16 %v2920
  %v3011 = vunpack.c.l.b16 %v2921
  %v3012 = vunpack.c.h.b16 %v2921
  %v3013 = vunpack.c.l.b16 %v2922
  %v3014 = vunpack.c.h.b16 %v2922
  %v3015 = vunpack.c.l.b16 %v2923
  %v3016 = vunpack.c.h.b16 %v2923
  %v3017 = vunpack.c.l.b16 %v2924
  %v3018 = vunpack.c.h.b16 %v2924
  %v3019 = vunpack.c.l.b16 %v2925
  %v3020 = vunpack.c.h.b16 %v2925
  %v3021 = vunpack.c.l.b16 %v2926
  %v3022 = vunpack.c.h.b16 %v2926
  %v3023 = vunpack.c.l.b16 %v2927
  %v3024 = vunpack.c.h.b16 %v2927
  %v3025 = vunpack.c.l.b16 %v2928
  %v3026 = vunpack.c.h.b16 %v2928
  %v3027 = vunpack.c.l.b16 %v2929
  %v3028 = vunpack.c.h.b16 %v2929
  %v3029 = vunpack.c.l.b16 %v2930
  %v3030 = vunpack.c.h.b16 %v2930
  %v3031 = vunpack.c.l.b16 %v2931
  %v3032 = vunpack.c.h.b16 %v2931
  %v3033 = vunpack.c.l.b16 %v2932
  %v3034 = vunpack.c.h.b16 %v2932
  %v3035 = vunpack.c.l.b16 %v2933
  %v3036 = vunpack.c.h.b16 %v2933
  %v3037 = vunpack.c.l.b16 %v2934
  %v3038 = vunpack.c.h.b16 %v2934
  %v3039 = vunpack.c.l.b16 %v2935
  %v3040 = vunpack.c.h.b16 %v2935
  %v3041 = vunpack.c.l.b16 %v2936
  %v3042 = vunpack.c.h.b16 %v2936
  %v3043 = vunpack.c.l.b16 %v2937
  %v3044 = vunpack.c.h.b16 %v2937
  %v3045 = vunpack.c.l.b16 %v2938
  %v3046 = vunpack.c.h.b16 %v2938
  %v3047 = vunpack.c.l.b16 %v2939
  %v3048 = vunpack.c.h.b16 %v2939
  %v3049 = vpack.c.b16 %v2987, %v2985
  %v3050 = vpack.c.b16 %v2988, %v2986
  %v3051 = vpack.c.b16 %v2991, %v2989
  %v3052 = vpack.c.b16 %v2992, %v2990
  %v3053 = vpack.c.b16 %v2995, %v2993
  %v3054 = vpack.c.b16 %v2996, %v2994
  %v3055 = vpack.c.b16 %v2999, %v2997
  %v3056 = vpack.c.b16 %v3000, %v2998
  %v3057 = vpack.c.b16 %v3003, %v3001
  %v3058 = vpack.c.b16 %v3004, %v3002
  %v3059 = vpack.c.b16 %v3007, %v3005
  %v3060 = vpack.c.b16 %v3008, %v3006
  %v3061 = vpack.c.b16 %v3011, %v3009
  %v3062 = vpack.c.b16 %v3012, %v3010
  %v3063 = vpack.c.b16 %v3015, %v3013
  %v3064 = vpack.c.b16 %v3016, %v3014
  %v3065 = vpack.c.b16 %v3019, %v3017
  %v3066 = vpack.c.b16 %v3020, %v3018
  %v3067 = vpack.c.b16 %v3023, %v3021
  %v3068 = vpack.c.b16 %v3024, %v3022
  %v3069 = vpack.c.b16 %v3027, %v3025
  %v3070 = vpack.c.b16 %v3028, %v3026
  %v3071 = vpack.c.b16 %v3031, %v3029
  %v3072 = vpack.c.b16 %v3032, %v3030
  %v3073 = vpack.c.b16 %v3035, %v3033
  %v3074 = vpack.c.b16 %v3036, %v3034
  %v3075 = vpack.c.b16 %v3039, %v3037
  %v3076 = vpack.c.b16 %v3040, %v3038
  %v3077 = vpack.c.b16 %v3043, %v3041
  %v3078 = vpack.c.b16 %v3044, %v3042
  %v3079 = vpack.c.b16 %v3047, %v3045
  %v3080 = vpack.c.b16 %v3048, %v3046
  %3113 = vmatprep.subr.bf16.mxu0 %v3050
  %3114 = vmatpush1.bf16.msra.mxu0 %v3049
  %3115 = vmatprep.subr.bf16.mxu0 %v3052
  %3116 = vmatpush1.bf16.msra.mxu0 %v3051
  %3117 = vmatprep.subr.bf16.mxu0 %v3054
  %3118 = vmatpush1.bf16.msra.mxu0 %v3053
  %3119 = vmatprep.subr.bf16.mxu0 %v3056
  %3120 = vmatpush1.bf16.msra.mxu0 %v3055
  %3121 = vmatprep.subr.bf16.mxu0 %v3058
  %3122 = vmatpush1.bf16.msra.mxu0 %v3057
  %3123 = vmatprep.subr.bf16.mxu0 %v3060
  %3124 = vmatpush1.bf16.msra.mxu0 %v3059
  %3125 = vmatprep.subr.bf16.mxu0 %v3062
  %3126 = vmatpush1.bf16.msra.mxu0 %v3061
  %3127 = vmatprep.subr.bf16.mxu0 %v3064
  %3128 = vmatpush1.bf16.msra.mxu0 %v3063
  %3129 = vmatprep.subr.bf16.mxu0 %v3066
  %3130 = vmatpush1.bf16.msra.mxu0 %v3065
  %3131 = vmatprep.subr.bf16.mxu0 %v3068
  %3132 = vmatpush1.bf16.msra.mxu0 %v3067
  %3133 = vmatprep.subr.bf16.mxu0 %v3070
  %3134 = vmatpush1.bf16.msra.mxu0 %v3069
  %3135 = vmatprep.subr.bf16.mxu0 %v3072
  %3136 = vmatpush1.bf16.msra.mxu0 %v3071
  %3137 = vmatprep.subr.bf16.mxu0 %v3074
  %3138 = vmatpush1.bf16.msra.mxu0 %v3073
  %3139 = vmatprep.subr.bf16.mxu0 %v3076
  %3140 = vmatpush1.bf16.msra.mxu0 %v3075
  %3141 = vmatprep.subr.bf16.mxu0 %v3078
  %3142 = vmatpush1.bf16.msra.mxu0 %v3077
  %3143 = vmatprep.subr.bf16.mxu0 %v3080
  %3144 = vmatpush1.bf16.msra.mxu0 %v3079
  %3145 = vmatprep.mubr.bf16.mxu0 %v2658
  %3146 = vmatmul.mubr.bf16.gmra.mrb[0].mxu0 %v2657
  %v3147 = vpop.f32.mrb[0].mxu0
  %v3148 = vadd.f32 %v2946, %v3147
  %v3149 = vpop.f32.mrb[0].mxu0
  %v3150 = vadd.f32 %v2950, %v3149
  %v3151 = vpop.f32.mrb[0].mxu0
  %v3152 = vpop.f32.mrb[0].mxu0
  %3153 = vdwg.mxu0
  %s3154 = scalar_lea.vmem %s14, 16
  %3155 = vst [vmem:[%s3154] sm:$0xff] %v3148
  %3156 = vst.msk [vmem:[%s3154 + $0x8] sm:$0xff] %vm2905, %v3150
  %v3157 = vmax.f32 %v2898, %v3148
  %v3158 = vmax.f32 %v2900, %v3150
  %v3159 = vsub.f32 %v2898, %v3157
  %v3160 = vsub.f32 %v2900, %v3158
  %v3161 = vmul.f32 %v3159, 1.442695
  %v3162 = vpow.pop %v3161
  %v3163 = vmul.f32 %v3160, 1.442695
  %v3164 = vpow.pop %v3163
  %v3165 = vsub.f32 %v3148, %v3157
  %v3166 = vsub.f32 %v3150, %v3158
  %v3167 = vmul.f32 %v3165, 1.442695
  %v3168 = vpow.pop %v3167
  %v3169 = vmul.f32 %v3166, 1.442695
  %v3170 = vpow.pop %v3169
  %v3171 = vadd.f32 %v3162, %v3168
  %v3172 = vadd.f32 %v3164, %v3170
  %s3173 = scalar_lea.vmem %s12, 512
  %v3174 = vld [vmem:[%s3173] sm:$0xff]
  %v3175 = vld [vmem:[%s3173 + $0x8] sm:$0xff]
  %v3176 = vld [vmem:[%s3173 + $0x10] sm:$0xff]
  %v3177 = vld [vmem:[%s3173 + $0x18] sm:$0xff]
  %v3178 = vld [vmem:[%s3173 + $0x20] sm:$0xff]
  %v3179 = vld [vmem:[%s3173 + $0x28] sm:$0xff]
  %v3180 = vld [vmem:[%s3173 + $0x30] sm:$0xff]
  %v3181 = vld [vmem:[%s3173 + $0x38] sm:$0xff]
  %v3182 = vld [vmem:[%s3173 + $0x40] sm:$0xff]
  %v3183 = vld [vmem:[%s3173 + $0x48] sm:$0xff]
  %v3184 = vld [vmem:[%s3173 + $0x50] sm:$0xff]
  %v3185 = vld [vmem:[%s3173 + $0x58] sm:$0xff]
  %v3186 = vld [vmem:[%s3173 + $0x60] sm:$0xff]
  %v3187 = vld [vmem:[%s3173 + $0x68] sm:$0xff]
  %v3188 = vld [vmem:[%s3173 + $0x70] sm:$0xff]
  %v3189 = vld [vmem:[%s3173 + $0x78] sm:$0xff]
  %v3190 = vld [vmem:[%s3173 + $0x80] sm:$0xff]
  %v3191 = vld [vmem:[%s3173 + $0x88] sm:$0xff]
  %v3192 = vld [vmem:[%s3173 + $0x90] sm:$0xff]
  %v3193 = vld [vmem:[%s3173 + $0x98] sm:$0xff]
  %v3194 = vld [vmem:[%s3173 + $0xa0] sm:$0xff]
  %v3195 = vld [vmem:[%s3173 + $0xa8] sm:$0xff]
  %v3196 = vld [vmem:[%s3173 + $0xb0] sm:$0xff]
  %v3197 = vld [vmem:[%s3173 + $0xb8] sm:$0xff]
  %v3198 = vld [vmem:[%s3173 + $0xc0] sm:$0xff]
  %v3199 = vld [vmem:[%s3173 + $0xc8] sm:$0xff]
  %v3200 = vld [vmem:[%s3173 + $0xd0] sm:$0xff]
  %v3201 = vld [vmem:[%s3173 + $0xd8] sm:$0xff]
  %v3202 = vld [vmem:[%s3173 + $0xe0] sm:$0xff]
  %v3203 = vld [vmem:[%s3173 + $0xe8] sm:$0xff]
  %v3204 = vld [vmem:[%s3173 + $0xf0] sm:$0xff]
  %v3205 = vld [vmem:[%s3173 + $0xf8] sm:$0xff]
  %s3206 = scalar_lea.vmem %s13, 4
  %v3207 = vld [vmem:[%s3206] sm:$0x3]
  %v3209 = vlaneseq
  %v3210 = vshrl.u32 %v3209, 7
  %v3211 = vsub.s32 0, %v3210
  %v3212 = vrot.slane %v3207, %v3211
  %v3213 = vlaneseq
  %v3214 = vshrl.u32 %v3213, 7
  %v3215 = vsub.s32 1, %v3214
  %v3216 = vrot.slane %v3207, %v3215
  %v3251 = vunpack.c.l.b16 %v3174
  %v3252 = vunpack.c.h.b16 %v3174
  %v3253 = vunpack.c.l.b16 %v3175
  %v3254 = vunpack.c.h.b16 %v3175
  %v3255 = vunpack.c.l.b16 %v3176
  %v3256 = vunpack.c.h.b16 %v3176
  %v3257 = vunpack.c.l.b16 %v3177
  %v3258 = vunpack.c.h.b16 %v3177
  %v3259 = vunpack.c.l.b16 %v3178
  %v3260 = vunpack.c.h.b16 %v3178
  %v3261 = vunpack.c.l.b16 %v3179
  %v3262 = vunpack.c.h.b16 %v3179
  %v3263 = vunpack.c.l.b16 %v3180
  %v3264 = vunpack.c.h.b16 %v3180
  %v3265 = vunpack.c.l.b16 %v3181
  %v3266 = vunpack.c.h.b16 %v3181
  %v3267 = vunpack.c.l.b16 %v3182
  %v3268 = vunpack.c.h.b16 %v3182
  %v3269 = vunpack.c.l.b16 %v3183
  %v3270 = vunpack.c.h.b16 %v3183
  %v3271 = vunpack.c.l.b16 %v3184
  %v3272 = vunpack.c.h.b16 %v3184
  %v3273 = vunpack.c.l.b16 %v3185
  %v3274 = vunpack.c.h.b16 %v3185
  %v3275 = vunpack.c.l.b16 %v3186
  %v3276 = vunpack.c.h.b16 %v3186
  %v3277 = vunpack.c.l.b16 %v3187
  %v3278 = vunpack.c.h.b16 %v3187
  %v3279 = vunpack.c.l.b16 %v3188
  %v3280 = vunpack.c.h.b16 %v3188
  %v3281 = vunpack.c.l.b16 %v3189
  %v3282 = vunpack.c.h.b16 %v3189
  %v3283 = vunpack.c.l.b16 %v3190
  %v3284 = vunpack.c.h.b16 %v3190
  %v3285 = vunpack.c.l.b16 %v3191
  %v3286 = vunpack.c.h.b16 %v3191
  %v3287 = vunpack.c.l.b16 %v3192
  %v3288 = vunpack.c.h.b16 %v3192
  %v3289 = vunpack.c.l.b16 %v3193
  %v3290 = vunpack.c.h.b16 %v3193
  %v3291 = vunpack.c.l.b16 %v3194
  %v3292 = vunpack.c.h.b16 %v3194
  %v3293 = vunpack.c.l.b16 %v3195
  %v3294 = vunpack.c.h.b16 %v3195
  %v3295 = vunpack.c.l.b16 %v3196
  %v3296 = vunpack.c.h.b16 %v3196
  %v3297 = vunpack.c.l.b16 %v3197
  %v3298 = vunpack.c.h.b16 %v3197
  %v3299 = vunpack.c.l.b16 %v3198
  %v3300 = vunpack.c.h.b16 %v3198
  %v3301 = vunpack.c.l.b16 %v3199
  %v3302 = vunpack.c.h.b16 %v3199
  %v3303 = vunpack.c.l.b16 %v3200
  %v3304 = vunpack.c.h.b16 %v3200
  %v3305 = vunpack.c.l.b16 %v3201
  %v3306 = vunpack.c.h.b16 %v3201
  %v3307 = vunpack.c.l.b16 %v3202
  %v3308 = vunpack.c.h.b16 %v3202
  %v3309 = vunpack.c.l.b16 %v3203
  %v3310 = vunpack.c.h.b16 %v3203
  %v3311 = vunpack.c.l.b16 %v3204
  %v3312 = vunpack.c.h.b16 %v3204
  %v3313 = vunpack.c.l.b16 %v3205
  %v3314 = vunpack.c.h.b16 %v3205
  %v3315 = vpack.c.b16 %v3253, %v3251
  %v3316 = vpack.c.b16 %v3254, %v3252
  %v3317 = vpack.c.b16 %v3257, %v3255
  %v3318 = vpack.c.b16 %v3258, %v3256
  %v3319 = vpack.c.b16 %v3261, %v3259
  %v3320 = vpack.c.b16 %v3262, %v3260
  %v3321 = vpack.c.b16 %v3265, %v3263
  %v3322 = vpack.c.b16 %v3266, %v3264
  %v3323 = vpack.c.b16 %v3269, %v3267
  %v3324 = vpack.c.b16 %v3270, %v3268
  %v3325 = vpack.c.b16 %v3273, %v3271
  %v3326 = vpack.c.b16 %v3274, %v3272
  %v3327 = vpack.c.b16 %v3277, %v3275
  %v3328 = vpack.c.b16 %v3278, %v3276
  %v3329 = vpack.c.b16 %v3281, %v3279
  %v3330 = vpack.c.b16 %v3282, %v3280
  %v3331 = vpack.c.b16 %v3285, %v3283
  %v3332 = vpack.c.b16 %v3286, %v3284
  %v3333 = vpack.c.b16 %v3289, %v3287
  %v3334 = vpack.c.b16 %v3290, %v3288
  %v3335 = vpack.c.b16 %v3293, %v3291
  %v3336 = vpack.c.b16 %v3294, %v3292
  %v3337 = vpack.c.b16 %v3297, %v3295
  %v3338 = vpack.c.b16 %v3298, %v3296
  %v3339 = vpack.c.b16 %v3301, %v3299
  %v3340 = vpack.c.b16 %v3302, %v3300
  %v3341 = vpack.c.b16 %v3305, %v3303
  %v3342 = vpack.c.b16 %v3306, %v3304
  %v3343 = vpack.c.b16 %v3309, %v3307
  %v3344 = vpack.c.b16 %v3310, %v3308
  %v3345 = vpack.c.b16 %v3313, %v3311
  %v3346 = vpack.c.b16 %v3314, %v3312
  %3379 = vmatprep.subr.bf16.mxu0 %v3316
  %3380 = vmatpush1.bf16.msra.mxu0 %v3315
  %3381 = vmatprep.subr.bf16.mxu0 %v3318
  %3382 = vmatpush1.bf16.msra.mxu0 %v3317
  %3383 = vmatprep.subr.bf16.mxu0 %v3320
  %3384 = vmatpush1.bf16.msra.mxu0 %v3319
  %3385 = vmatprep.subr.bf16.mxu0 %v3322
  %3386 = vmatpush1.bf16.msra.mxu0 %v3321
  %3387 = vmatprep.subr.bf16.mxu0 %v3324
  %3388 = vmatpush1.bf16.msra.mxu0 %v3323
  %3389 = vmatprep.subr.bf16.mxu0 %v3326
  %3390 = vmatpush1.bf16.msra.mxu0 %v3325
  %3391 = vmatprep.subr.bf16.mxu0 %v3328
  %3392 = vmatpush1.bf16.msra.mxu0 %v3327
  %3393 = vmatprep.subr.bf16.mxu0 %v3330
  %3394 = vmatpush1.bf16.msra.mxu0 %v3329
  %3395 = vmatprep.subr.bf16.mxu0 %v3332
  %3396 = vmatpush1.bf16.msra.mxu0 %v3331
  %3397 = vmatprep.subr.bf16.mxu0 %v3334
  %3398 = vmatpush1.bf16.msra.mxu0 %v3333
  %3399 = vmatprep.subr.bf16.mxu0 %v3336
  %3400 = vmatpush1.bf16.msra.mxu0 %v3335
  %3401 = vmatprep.subr.bf16.mxu0 %v3338
  %3402 = vmatpush1.bf16.msra.mxu0 %v3337
  %3403 = vmatprep.subr.bf16.mxu0 %v3340
  %3404 = vmatpush1.bf16.msra.mxu0 %v3339
  %3405 = vmatprep.subr.bf16.mxu0 %v3342
  %3406 = vmatpush1.bf16.msra.mxu0 %v3341
  %3407 = vmatprep.subr.bf16.mxu0 %v3344
  %3408 = vmatpush1.bf16.msra.mxu0 %v3343
  %3409 = vmatprep.subr.bf16.mxu0 %v3346
  %3410 = vmatpush1.bf16.msra.mxu0 %v3345
  %3411 = vmatprep.mubr.bf16.mxu0 %v2658
  %3412 = vmatmul.mubr.bf16.gmra.mrb[0].mxu0 %v2657
  %v3413 = vpop.f32.mrb[0].mxu0
  %v3414 = vadd.f32 %v3212, %v3413
  %v3415 = vpop.f32.mrb[0].mxu0
  %v3416 = vadd.f32 %v3216, %v3415
  %v3417 = vpop.f32.mrb[0].mxu0
  %v3418 = vpop.f32.mrb[0].mxu0
  %3419 = vdwg.mxu0
  %s3420 = scalar_lea.vmem %s14, 32
  %3421 = vst [vmem:[%s3420] sm:$0xff] %v3414
  %3422 = vst.msk [vmem:[%s3420 + $0x8] sm:$0xff] %vm2905, %v3416
  %v3423 = vmax.f32 %v3157, %v3414
  %v3424 = vmax.f32 %v3158, %v3416
  %v3425 = vsub.f32 %v3157, %v3423
  %v3426 = vsub.f32 %v3158, %v3424
  %v3427 = vmul.f32 %v3425, 1.442695
  %v3428 = vpow.pop %v3427
  %v3429 = vmul.f32 %v3426, 1.442695
  %v3430 = vpow.pop %v3429
  %v3431 = vmul.f32 %v3171, %v3428
  %v3432 = vmul.f32 %v3172, %v3430
  %v3433 = vsub.f32 %v3414, %v3423
  %v3434 = vsub.f32 %v3416, %v3424
  %v3435 = vmul.f32 %v3433, 1.442695
  %v3436 = vpow.pop %v3435
  %v3437 = vmul.f32 %v3434, 1.442695
  %v3438 = vpow.pop %v3437
  %v3439 = vadd.f32 %v3431, %v3436
  %v3440 = vadd.f32 %v3432, %v3438
  %s3441 = scalar_lea.vmem %s12, 768
  %v3442 = vld [vmem:[%s3441] sm:$0xff]
  %v3443 = vld [vmem:[%s3441 + $0x8] sm:$0xff]
  %v3444 = vld [vmem:[%s3441 + $0x10] sm:$0xff]
  %v3445 = vld [vmem:[%s3441 + $0x18] sm:$0xff]
  %v3446 = vld [vmem:[%s3441 + $0x20] sm:$0xff]
  %v3447 = vld [vmem:[%s3441 + $0x28] sm:$0xff]
  %v3448 = vld [vmem:[%s3441 + $0x30] sm:$0xff]
  %v3449 = vld [vmem:[%s3441 + $0x38] sm:$0xff]
  %v3450 = vld [vmem:[%s3441 + $0x40] sm:$0xff]
  %v3451 = vld [vmem:[%s3441 + $0x48] sm:$0xff]
  %v3452 = vld [vmem:[%s3441 + $0x50] sm:$0xff]
  %v3453 = vld [vmem:[%s3441 + $0x58] sm:$0xff]
  %v3454 = vld [vmem:[%s3441 + $0x60] sm:$0xff]
  %v3455 = vld [vmem:[%s3441 + $0x68] sm:$0xff]
  %v3456 = vld [vmem:[%s3441 + $0x70] sm:$0xff]
  %v3457 = vld [vmem:[%s3441 + $0x78] sm:$0xff]
  %v3458 = vld [vmem:[%s3441 + $0x80] sm:$0xff]
  %v3459 = vld [vmem:[%s3441 + $0x88] sm:$0xff]
  %v3460 = vld [vmem:[%s3441 + $0x90] sm:$0xff]
  %v3461 = vld [vmem:[%s3441 + $0x98] sm:$0xff]
  %v3462 = vld [vmem:[%s3441 + $0xa0] sm:$0xff]
  %v3463 = vld [vmem:[%s3441 + $0xa8] sm:$0xff]
  %v3464 = vld [vmem:[%s3441 + $0xb0] sm:$0xff]
  %v3465 = vld [vmem:[%s3441 + $0xb8] sm:$0xff]
  %v3466 = vld [vmem:[%s3441 + $0xc0] sm:$0xff]
  %v3467 = vld [vmem:[%s3441 + $0xc8] sm:$0xff]
  %v3468 = vld [vmem:[%s3441 + $0xd0] sm:$0xff]
  %v3469 = vld [vmem:[%s3441 + $0xd8] sm:$0xff]
  %v3470 = vld [vmem:[%s3441 + $0xe0] sm:$0xff]
  %v3471 = vld [vmem:[%s3441 + $0xe8] sm:$0xff]
  %v3472 = vld [vmem:[%s3441 + $0xf0] sm:$0xff]
  %v3473 = vld [vmem:[%s3441 + $0xf8] sm:$0xff]
  %s3474 = scalar_lea.vmem %s13, 6
  %v3475 = vld [vmem:[%s3474] sm:$0x3]
  %v3477 = vlaneseq
  %v3478 = vshrl.u32 %v3477, 7
  %v3479 = vsub.s32 0, %v3478
  %v3480 = vrot.slane %v3475, %v3479
  %v3481 = vlaneseq
  %v3482 = vshrl.u32 %v3481, 7
  %v3483 = vsub.s32 1, %v3482
  %v3484 = vrot.slane %v3475, %v3483
  %v3519 = vunpack.c.l.b16 %v3442
  %v3520 = vunpack.c.h.b16 %v3442
  %v3521 = vunpack.c.l.b16 %v3443
  %v3522 = vunpack.c.h.b16 %v3443
  %v3523 = vunpack.c.l.b16 %v3444
  %v3524 = vunpack.c.h.b16 %v3444
  %v3525 = vunpack.c.l.b16 %v3445
  %v3526 = vunpack.c.h.b16 %v3445
  %v3527 = vunpack.c.l.b16 %v3446
  %v3528 = vunpack.c.h.b16 %v3446
  %v3529 = vunpack.c.l.b16 %v3447
  %v3530 = vunpack.c.h.b16 %v3447
  %v3531 = vunpack.c.l.b16 %v3448
  %v3532 = vunpack.c.h.b16 %v3448
  %v3533 = vunpack.c.l.b16 %v3449
  %v3534 = vunpack.c.h.b16 %v3449
  %v3535 = vunpack.c.l.b16 %v3450
  %v3536 = vunpack.c.h.b16 %v3450
  %v3537 = vunpack.c.l.b16 %v3451
  %v3538 = vunpack.c.h.b16 %v3451
  %v3539 = vunpack.c.l.b16 %v3452
  %v3540 = vunpack.c.h.b16 %v3452
  %v3541 = vunpack.c.l.b16 %v3453
  %v3542 = vunpack.c.h.b16 %v3453
  %v3543 = vunpack.c.l.b16 %v3454
  %v3544 = vunpack.c.h.b16 %v3454
  %v3545 = vunpack.c.l.b16 %v3455
  %v3546 = vunpack.c.h.b16 %v3455
  %v3547 = vunpack.c.l.b16 %v3456
  %v3548 = vunpack.c.h.b16 %v3456
  %v3549 = vunpack.c.l.b16 %v3457
  %v3550 = vunpack.c.h.b16 %v3457
  %v3551 = vunpack.c.l.b16 %v3458
  %v3552 = vunpack.c.h.b16 %v3458
  %v3553 = vunpack.c.l.b16 %v3459
  %v3554 = vunpack.c.h.b16 %v3459
  %v3555 = vunpack.c.l.b16 %v3460
  %v3556 = vunpack.c.h.b16 %v3460
  %v3557 = vunpack.c.l.b16 %v3461
  %v3558 = vunpack.c.h.b16 %v3461
  %v3559 = vunpack.c.l.b16 %v3462
  %v3560 = vunpack.c.h.b16 %v3462
  %v3561 = vunpack.c.l.b16 %v3463
  %v3562 = vunpack.c.h.b16 %v3463
  %v3563 = vunpack.c.l.b16 %v3464
  %v3564 = vunpack.c.h.b16 %v3464
  %v3565 = vunpack.c.l.b16 %v3465
  %v3566 = vunpack.c.h.b16 %v3465
  %v3567 = vunpack.c.l.b16 %v3466
  %v3568 = vunpack.c.h.b16 %v3466
  %v3569 = vunpack.c.l.b16 %v3467
  %v3570 = vunpack.c.h.b16 %v3467
  %v3571 = vunpack.c.l.b16 %v3468
  %v3572 = vunpack.c.h.b16 %v3468
  %v3573 = vunpack.c.l.b16 %v3469
  %v3574 = vunpack.c.h.b16 %v3469
  %v3575 = vunpack.c.l.b16 %v3470
  %v3576 = vunpack.c.h.b16 %v3470
  %v3577 = vunpack.c.l.b16 %v3471
  %v3578 = vunpack.c.h.b16 %v3471
  %v3579 = vunpack.c.l.b16 %v3472
  %v3580 = vunpack.c.h.b16 %v3472
  %v3581 = vunpack.c.l.b16 %v3473
  %v3582 = vunpack.c.h.b16 %v3473
  %v3583 = vpack.c.b16 %v3521, %v3519
  %v3584 = vpack.c.b16 %v3522, %v3520
  %v3585 = vpack.c.b16 %v3525, %v3523
  %v3586 = vpack.c.b16 %v3526, %v3524
  %v3587 = vpack.c.b16 %v3529, %v3527
  %v3588 = vpack.c.b16 %v3530, %v3528
  %v3589 = vpack.c.b16 %v3533, %v3531
  %v3590 = vpack.c.b16 %v3534, %v3532
  %v3591 = vpack.c.b16 %v3537, %v3535
  %v3592 = vpack.c.b16 %v3538, %v3536
  %v3593 = vpack.c.b16 %v3541, %v3539
  %v3594 = vpack.c.b16 %v3542, %v3540
  %v3595 = vpack.c.b16 %v3545, %v3543
  %v3596 = vpack.c.b16 %v3546, %v3544
  %v3597 = vpack.c.b16 %v3549, %v3547
  %v3598 = vpack.c.b16 %v3550, %v3548
  %v3599 = vpack.c.b16 %v3553, %v3551
  %v3600 = vpack.c.b16 %v3554, %v3552
  %v3601 = vpack.c.b16 %v3557, %v3555
  %v3602 = vpack.c.b16 %v3558, %v3556
  %v3603 = vpack.c.b16 %v3561, %v3559
  %v3604 = vpack.c.b16 %v3562, %v3560
  %v3605 = vpack.c.b16 %v3565, %v3563
  %v3606 = vpack.c.b16 %v3566, %v3564
  %v3607 = vpack.c.b16 %v3569, %v3567
  %v3608 = vpack.c.b16 %v3570, %v3568
  %v3609 = vpack.c.b16 %v3573, %v3571
  %v3610 = vpack.c.b16 %v3574, %v3572
  %v3611 = vpack.c.b16 %v3577, %v3575
  %v3612 = vpack.c.b16 %v3578, %v3576
  %v3613 = vpack.c.b16 %v3581, %v3579
  %v3614 = vpack.c.b16 %v3582, %v3580
  %3647 = vmatprep.subr.bf16.mxu0 %v3584
  %3648 = vmatpush1.bf16.msra.mxu0 %v3583
  %3649 = vmatprep.subr.bf16.mxu0 %v3586
  %3650 = vmatpush1.bf16.msra.mxu0 %v3585
  %3651 = vmatprep.subr.bf16.mxu0 %v3588
  %3652 = vmatpush1.bf16.msra.mxu0 %v3587
  %3653 = vmatprep.subr.bf16.mxu0 %v3590
  %3654 = vmatpush1.bf16.msra.mxu0 %v3589
  %3655 = vmatprep.subr.bf16.mxu0 %v3592
  %3656 = vmatpush1.bf16.msra.mxu0 %v3591
  %3657 = vmatprep.subr.bf16.mxu0 %v3594
  %3658 = vmatpush1.bf16.msra.mxu0 %v3593
  %3659 = vmatprep.subr.bf16.mxu0 %v3596
  %3660 = vmatpush1.bf16.msra.mxu0 %v3595
  %3661 = vmatprep.subr.bf16.mxu0 %v3598
  %3662 = vmatpush1.bf16.msra.mxu0 %v3597
  %3663 = vmatprep.subr.bf16.mxu0 %v3600
  %3664 = vmatpush1.bf16.msra.mxu0 %v3599
  %3665 = vmatprep.subr.bf16.mxu0 %v3602
  %3666 = vmatpush1.bf16.msra.mxu0 %v3601
  %3667 = vmatprep.subr.bf16.mxu0 %v3604
  %3668 = vmatpush1.bf16.msra.mxu0 %v3603
  %3669 = vmatprep.subr.bf16.mxu0 %v3606
  %3670 = vmatpush1.bf16.msra.mxu0 %v3605
  %3671 = vmatprep.subr.bf16.mxu0 %v3608
  %3672 = vmatpush1.bf16.msra.mxu0 %v3607
  %3673 = vmatprep.subr.bf16.mxu0 %v3610
  %3674 = vmatpush1.bf16.msra.mxu0 %v3609
  %3675 = vmatprep.subr.bf16.mxu0 %v3612
  %3676 = vmatpush1.bf16.msra.mxu0 %v3611
  %3677 = vmatprep.subr.bf16.mxu0 %v3614
  %3678 = vmatpush1.bf16.msra.mxu0 %v3613
  %3679 = vmatprep.mubr.bf16.mxu0 %v2658
  %3680 = vmatmul.mubr.bf16.gmra.mrb[0].mxu0 %v2657
  %v3681 = vpop.f32.mrb[0].mxu0
  %v3682 = vadd.f32 %v3480, %v3681
  %v3683 = vpop.f32.mrb[0].mxu0
  %v3684 = vadd.f32 %v3484, %v3683
  %v3685 = vpop.f32.mrb[0].mxu0
  %v3686 = vpop.f32.mrb[0].mxu0
  %3687 = vdwg.mxu0
  %s3688 = scalar_lea.vmem %s14, 48
  %3689 = vst [vmem:[%s3688] sm:$0xff] %v3682
  %3690 = vst.msk [vmem:[%s3688 + $0x8] sm:$0xff] %vm2905, %v3684
  %v3691 = vmax.f32 %v3423, %v3682
  %v3692 = vmax.f32 %v3424, %v3684
  %v3693 = vsub.f32 %v3423, %v3691
  %v3694 = vsub.f32 %v3424, %v3692
  %v3695 = vmul.f32 %v3693, 1.442695
  %v3696 = vpow.pop %v3695
  %v3697 = vmul.f32 %v3694, 1.442695
  %v3698 = vpow.pop %v3697
  %v3699 = vmul.f32 %v3439, %v3696
  %v3700 = vmul.f32 %v3440, %v3698
  %v3701 = vsub.f32 %v3682, %v3691
  %v3702 = vsub.f32 %v3684, %v3692
  %v3703 = vmul.f32 %v3701, 1.442695
  %v3704 = vpow.pop %v3703
  %v3705 = vmul.f32 %v3702, 1.442695
  %v3706 = vpow.pop %v3705
  %v3707 = vadd.f32 %v3699, %v3704
  %v3708 = vadd.f32 %v3700, %v3706
  %s3709 = scalar_lea.vmem %s12, 1024
  %v3710 = vld [vmem:[%s3709] sm:$0xff]
  %v3711 = vld [vmem:[%s3709 + $0x8] sm:$0xff]
  %v3712 = vld [vmem:[%s3709 + $0x10] sm:$0xff]
  %v3713 = vld [vmem:[%s3709 + $0x18] sm:$0xff]
  %v3714 = vld [vmem:[%s3709 + $0x20] sm:$0xff]
  %v3715 = vld [vmem:[%s3709 + $0x28] sm:$0xff]
  %v3716 = vld [vmem:[%s3709 + $0x30] sm:$0xff]
  %v3717 = vld [vmem:[%s3709 + $0x38] sm:$0xff]
  %v3718 = vld [vmem:[%s3709 + $0x40] sm:$0xff]
  %v3719 = vld [vmem:[%s3709 + $0x48] sm:$0xff]
  %v3720 = vld [vmem:[%s3709 + $0x50] sm:$0xff]
  %v3721 = vld [vmem:[%s3709 + $0x58] sm:$0xff]
  %v3722 = vld [vmem:[%s3709 + $0x60] sm:$0xff]
  %v3723 = vld [vmem:[%s3709 + $0x68] sm:$0xff]
  %v3724 = vld [vmem:[%s3709 + $0x70] sm:$0xff]
  %v3725 = vld [vmem:[%s3709 + $0x78] sm:$0xff]
  %v3726 = vld [vmem:[%s3709 + $0x80] sm:$0xff]
  %v3727 = vld [vmem:[%s3709 + $0x88] sm:$0xff]
  %v3728 = vld [vmem:[%s3709 + $0x90] sm:$0xff]
  %v3729 = vld [vmem:[%s3709 + $0x98] sm:$0xff]
  %v3730 = vld [vmem:[%s3709 + $0xa0] sm:$0xff]
  %v3731 = vld [vmem:[%s3709 + $0xa8] sm:$0xff]
  %v3732 = vld [vmem:[%s3709 + $0xb0] sm:$0xff]
  %v3733 = vld [vmem:[%s3709 + $0xb8] sm:$0xff]
  %v3734 = vld [vmem:[%s3709 + $0xc0] sm:$0xff]
  %v3735 = vld [vmem:[%s3709 + $0xc8] sm:$0xff]
  %v3736 = vld [vmem:[%s3709 + $0xd0] sm:$0xff]
  %v3737 = vld [vmem:[%s3709 + $0xd8] sm:$0xff]
  %v3738 = vld [vmem:[%s3709 + $0xe0] sm:$0xff]
  %v3739 = vld [vmem:[%s3709 + $0xe8] sm:$0xff]
  %v3740 = vld [vmem:[%s3709 + $0xf0] sm:$0xff]
  %v3741 = vld [vmem:[%s3709 + $0xf8] sm:$0xff]
  %s3742 = scalar_lea.vmem %s13, 8
  %v3743 = vld [vmem:[%s3742] sm:$0x3]
  %v3745 = vlaneseq
  %v3746 = vshrl.u32 %v3745, 7
  %v3747 = vsub.s32 0, %v3746
  %v3748 = vrot.slane %v3743, %v3747
  %v3749 = vlaneseq
  %v3750 = vshrl.u32 %v3749, 7
  %v3751 = vsub.s32 1, %v3750
  %v3752 = vrot.slane %v3743, %v3751
  %v3787 = vunpack.c.l.b16 %v3710
  %v3788 = vunpack.c.h.b16 %v3710
  %v3789 = vunpack.c.l.b16 %v3711
  %v3790 = vunpack.c.h.b16 %v3711
  %v3791 = vunpack.c.l.b16 %v3712
  %v3792 = vunpack.c.h.b16 %v3712
  %v3793 = vunpack.c.l.b16 %v3713
  %v3794 = vunpack.c.h.b16 %v3713
  %v3795 = vunpack.c.l.b16 %v3714
  %v3796 = vunpack.c.h.b16 %v3714
  %v3797 = vunpack.c.l.b16 %v3715
  %v3798 = vunpack.c.h.b16 %v3715
  %v3799 = vunpack.c.l.b16 %v3716
  %v3800 = vunpack.c.h.b16 %v3716
  %v3801 = vunpack.c.l.b16 %v3717
  %v3802 = vunpack.c.h.b16 %v3717
  %v3803 = vunpack.c.l.b16 %v3718
  %v3804 = vunpack.c.h.b16 %v3718
  %v3805 = vunpack.c.l.b16 %v3719
  %v3806 = vunpack.c.h.b16 %v3719
  %v3807 = vunpack.c.l.b16 %v3720
  %v3808 = vunpack.c.h.b16 %v3720
  %v3809 = vunpack.c.l.b16 %v3721
  %v3810 = vunpack.c.h.b16 %v3721
  %v3811 = vunpack.c.l.b16 %v3722
  %v3812 = vunpack.c.h.b16 %v3722
  %v3813 = vunpack.c.l.b16 %v3723
  %v3814 = vunpack.c.h.b16 %v3723
  %v3815 = vunpack.c.l.b16 %v3724
  %v3816 = vunpack.c.h.b16 %v3724
  %v3817 = vunpack.c.l.b16 %v3725
  %v3818 = vunpack.c.h.b16 %v3725
  %v3819 = vunpack.c.l.b16 %v3726
  %v3820 = vunpack.c.h.b16 %v3726
  %v3821 = vunpack.c.l.b16 %v3727
  %v3822 = vunpack.c.h.b16 %v3727
  %v3823 = vunpack.c.l.b16 %v3728
  %v3824 = vunpack.c.h.b16 %v3728
  %v3825 = vunpack.c.l.b16 %v3729
  %v3826 = vunpack.c.h.b16 %v3729
  %v3827 = vunpack.c.l.b16 %v3730
  %v3828 = vunpack.c.h.b16 %v3730
  %v3829 = vunpack.c.l.b16 %v3731
  %v3830 = vunpack.c.h.b16 %v3731
  %v3831 = vunpack.c.l.b16 %v3732
  %v3832 = vunpack.c.h.b16 %v3732
  %v3833 = vunpack.c.l.b16 %v3733
  %v3834 = vunpack.c.h.b16 %v3733
  %v3835 = vunpack.c.l.b16 %v3734
  %v3836 = vunpack.c.h.b16 %v3734
  %v3837 = vunpack.c.l.b16 %v3735
  %v3838 = vunpack.c.h.b16 %v3735
  %v3839 = vunpack.c.l.b16 %v3736
  %v3840 = vunpack.c.h.b16 %v3736
  %v3841 = vunpack.c.l.b16 %v3737
  %v3842 = vunpack.c.h.b16 %v3737
  %v3843 = vunpack.c.l.b16 %v3738
  %v3844 = vunpack.c.h.b16 %v3738
  %v3845 = vunpack.c.l.b16 %v3739
  %v3846 = vunpack.c.h.b16 %v3739
  %v3847 = vunpack.c.l.b16 %v3740
  %v3848 = vunpack.c.h.b16 %v3740
  %v3849 = vunpack.c.l.b16 %v3741
  %v3850 = vunpack.c.h.b16 %v3741
  %v3851 = vpack.c.b16 %v3789, %v3787
  %v3852 = vpack.c.b16 %v3790, %v3788
  %v3853 = vpack.c.b16 %v3793, %v3791
  %v3854 = vpack.c.b16 %v3794, %v3792
  %v3855 = vpack.c.b16 %v3797, %v3795
  %v3856 = vpack.c.b16 %v3798, %v3796
  %v3857 = vpack.c.b16 %v3801, %v3799
  %v3858 = vpack.c.b16 %v3802, %v3800
  %v3859 = vpack.c.b16 %v3805, %v3803
  %v3860 = vpack.c.b16 %v3806, %v3804
  %v3861 = vpack.c.b16 %v3809, %v3807
  %v3862 = vpack.c.b16 %v3810, %v3808
  %v3863 = vpack.c.b16 %v3813, %v3811
  %v3864 = vpack.c.b16 %v3814, %v3812
  %v3865 = vpack.c.b16 %v3817, %v3815
  %v3866 = vpack.c.b16 %v3818, %v3816
  %v3867 = vpack.c.b16 %v3821, %v3819
  %v3868 = vpack.c.b16 %v3822, %v3820
  %v3869 = vpack.c.b16 %v3825, %v3823
  %v3870 = vpack.c.b16 %v3826, %v3824
  %v3871 = vpack.c.b16 %v3829, %v3827
  %v3872 = vpack.c.b16 %v3830, %v3828
  %v3873 = vpack.c.b16 %v3833, %v3831
  %v3874 = vpack.c.b16 %v3834, %v3832
  %v3875 = vpack.c.b16 %v3837, %v3835
  %v3876 = vpack.c.b16 %v3838, %v3836
  %v3877 = vpack.c.b16 %v3841, %v3839
  %v3878 = vpack.c.b16 %v3842, %v3840
  %v3879 = vpack.c.b16 %v3845, %v3843
  %v3880 = vpack.c.b16 %v3846, %v3844
  %v3881 = vpack.c.b16 %v3849, %v3847
  %v3882 = vpack.c.b16 %v3850, %v3848
  %3915 = vmatprep.subr.bf16.mxu0 %v3852
  %3916 = vmatpush1.bf16.msra.mxu0 %v3851
  %3917 = vmatprep.subr.bf16.mxu0 %v3854
  %3918 = vmatpush1.bf16.msra.mxu0 %v3853
  %3919 = vmatprep.subr.bf16.mxu0 %v3856
  %3920 = vmatpush1.bf16.msra.mxu0 %v3855
  %3921 = vmatprep.subr.bf16.mxu0 %v3858
  %3922 = vmatpush1.bf16.msra.mxu0 %v3857
  %3923 = vmatprep.subr.bf16.mxu0 %v3860
  %3924 = vmatpush1.bf16.msra.mxu0 %v3859
  %3925 = vmatprep.subr.bf16.mxu0 %v3862
  %3926 = vmatpush1.bf16.msra.mxu0 %v3861
  %3927 = vmatprep.subr.bf16.mxu0 %v3864
  %3928 = vmatpush1.bf16.msra.mxu0 %v3863
  %3929 = vmatprep.subr.bf16.mxu0 %v3866
  %3930 = vmatpush1.bf16.msra.mxu0 %v3865
  %3931 = vmatprep.subr.bf16.mxu0 %v3868
  %3932 = vmatpush1.bf16.msra.mxu0 %v3867
  %3933 = vmatprep.subr.bf16.mxu0 %v3870
  %3934 = vmatpush1.bf16.msra.mxu0 %v3869
  %3935 = vmatprep.subr.bf16.mxu0 %v3872
  %3936 = vmatpush1.bf16.msra.mxu0 %v3871
  %3937 = vmatprep.subr.bf16.mxu0 %v3874
  %3938 = vmatpush1.bf16.msra.mxu0 %v3873
  %3939 = vmatprep.subr.bf16.mxu0 %v3876
  %3940 = vmatpush1.bf16.msra.mxu0 %v3875
  %3941 = vmatprep.subr.bf16.mxu0 %v3878
  %3942 = vmatpush1.bf16.msra.mxu0 %v3877
  %3943 = vmatprep.subr.bf16.mxu0 %v3880
  %3944 = vmatpush1.bf16.msra.mxu0 %v3879
  %3945 = vmatprep.subr.bf16.mxu0 %v3882
  %3946 = vmatpush1.bf16.msra.mxu0 %v3881
  %3947 = vmatprep.mubr.bf16.mxu0 %v2658
  %3948 = vmatmul.mubr.bf16.gmra.mrb[0].mxu0 %v2657
  %v3949 = vpop.f32.mrb[0].mxu0
  %v3950 = vadd.f32 %v3748, %v3949
  %v3951 = vpop.f32.mrb[0].mxu0
  %v3952 = vadd.f32 %v3752, %v3951
  %v3953 = vpop.f32.mrb[0].mxu0
  %v3954 = vpop.f32.mrb[0].mxu0
  %3955 = vdwg.mxu0
  %s3956 = scalar_lea.vmem %s14, 64
  %3957 = vst [vmem:[%s3956] sm:$0xff] %v3950
  %3958 = vst.msk [vmem:[%s3956 + $0x8] sm:$0xff] %vm2905, %v3952
  %v3959 = vmax.f32 %v3691, %v3950
  %v3960 = vmax.f32 %v3692, %v3952
  %v3961 = vsub.f32 %v3691, %v3959
  %v3962 = vsub.f32 %v3692, %v3960
  %v3963 = vmul.f32 %v3961, 1.442695
  %v3964 = vpow.pop %v3963
  %v3965 = vmul.f32 %v3962, 1.442695
  %v3966 = vpow.pop %v3965
  %v3967 = vmul.f32 %v3707, %v3964
  %v3968 = vmul.f32 %v3708, %v3966
  %v3969 = vsub.f32 %v3950, %v3959
  %v3970 = vsub.f32 %v3952, %v3960
  %v3971 = vmul.f32 %v3969, 1.442695
  %v3972 = vpow.pop %v3971
  %v3973 = vmul.f32 %v3970, 1.442695
  %v3974 = vpow.pop %v3973
  %v3975 = vadd.f32 %v3967, %v3972
  %v3976 = vadd.f32 %v3968, %v3974
  %s3977 = scalar_lea.vmem %s12, 1280
  %v3978 = vld [vmem:[%s3977] sm:$0xff]
  %v3979 = vld [vmem:[%s3977 + $0x8] sm:$0xff]
  %v3980 = vld [vmem:[%s3977 + $0x10] sm:$0xff]
  %v3981 = vld [vmem:[%s3977 + $0x18] sm:$0xff]
  %v3982 = vld [vmem:[%s3977 + $0x20] sm:$0xff]
  %v3983 = vld [vmem:[%s3977 + $0x28] sm:$0xff]
  %v3984 = vld [vmem:[%s3977 + $0x30] sm:$0xff]
  %v3985 = vld [vmem:[%s3977 + $0x38] sm:$0xff]
  %v3986 = vld [vmem:[%s3977 + $0x40] sm:$0xff]
  %v3987 = vld [vmem:[%s3977 + $0x48] sm:$0xff]
  %v3988 = vld [vmem:[%s3977 + $0x50] sm:$0xff]
  %v3989 = vld [vmem:[%s3977 + $0x58] sm:$0xff]
  %v3990 = vld [vmem:[%s3977 + $0x60] sm:$0xff]
  %v3991 = vld [vmem:[%s3977 + $0x68] sm:$0xff]
  %v3992 = vld [vmem:[%s3977 + $0x70] sm:$0xff]
  %v3993 = vld [vmem:[%s3977 + $0x78] sm:$0xff]
  %v3994 = vld [vmem:[%s3977 + $0x80] sm:$0xff]
  %v3995 = vld [vmem:[%s3977 + $0x88] sm:$0xff]
  %v3996 = vld [vmem:[%s3977 + $0x90] sm:$0xff]
  %v3997 = vld [vmem:[%s3977 + $0x98] sm:$0xff]
  %v3998 = vld [vmem:[%s3977 + $0xa0] sm:$0xff]
  %v3999 = vld [vmem:[%s3977 + $0xa8] sm:$0xff]
  %v4000 = vld [vmem:[%s3977 + $0xb0] sm:$0xff]
  %v4001 = vld [vmem:[%s3977 + $0xb8] sm:$0xff]
  %v4002 = vld [vmem:[%s3977 + $0xc0] sm:$0xff]
  %v4003 = vld [vmem:[%s3977 + $0xc8] sm:$0xff]
  %v4004 = vld [vmem:[%s3977 + $0xd0] sm:$0xff]
  %v4005 = vld [vmem:[%s3977 + $0xd8] sm:$0xff]
  %v4006 = vld [vmem:[%s3977 + $0xe0] sm:$0xff]
  %v4007 = vld [vmem:[%s3977 + $0xe8] sm:$0xff]
  %v4008 = vld [vmem:[%s3977 + $0xf0] sm:$0xff]
  %v4009 = vld [vmem:[%s3977 + $0xf8] sm:$0xff]
  %s4010 = scalar_lea.vmem %s13, 10
  %v4011 = vld [vmem:[%s4010] sm:$0x3]
  %v4013 = vlaneseq
  %v4014 = vshrl.u32 %v4013, 7
  %v4015 = vsub.s32 0, %v4014
  %v4016 = vrot.slane %v4011, %v4015
  %v4017 = vlaneseq
  %v4018 = vshrl.u32 %v4017, 7
  %v4019 = vsub.s32 1, %v4018
  %v4020 = vrot.slane %v4011, %v4019
  %v4055 = vunpack.c.l.b16 %v3978
  %v4056 = vunpack.c.h.b16 %v3978
  %v4057 = vunpack.c.l.b16 %v3979
  %v4058 = vunpack.c.h.b16 %v3979
  %v4059 = vunpack.c.l.b16 %v3980
  %v4060 = vunpack.c.h.b16 %v3980
  %v4061 = vunpack.c.l.b16 %v3981
  %v4062 = vunpack.c.h.b16 %v3981
  %v4063 = vunpack.c.l.b16 %v3982
  %v4064 = vunpack.c.h.b16 %v3982
  %v4065 = vunpack.c.l.b16 %v3983
  %v4066 = vunpack.c.h.b16 %v3983
  %v4067 = vunpack.c.l.b16 %v3984
  %v4068 = vunpack.c.h.b16 %v3984
  %v4069 = vunpack.c.l.b16 %v3985
  %v4070 = vunpack.c.h.b16 %v3985
  %v4071 = vunpack.c.l.b16 %v3986
  %v4072 = vunpack.c.h.b16 %v3986
  %v4073 = vunpack.c.l.b16 %v3987
  %v4074 = vunpack.c.h.b16 %v3987
  %v4075 = vunpack.c.l.b16 %v3988
  %v4076 = vunpack.c.h.b16 %v3988
  %v4077 = vunpack.c.l.b16 %v3989
  %v4078 = vunpack.c.h.b16 %v3989
  %v4079 = vunpack.c.l.b16 %v3990
  %v4080 = vunpack.c.h.b16 %v3990
  %v4081 = vunpack.c.l.b16 %v3991
  %v4082 = vunpack.c.h.b16 %v3991
  %v4083 = vunpack.c.l.b16 %v3992
  %v4084 = vunpack.c.h.b16 %v3992
  %v4085 = vunpack.c.l.b16 %v3993
  %v4086 = vunpack.c.h.b16 %v3993
  %v4087 = vunpack.c.l.b16 %v3994
  %v4088 = vunpack.c.h.b16 %v3994
  %v4089 = vunpack.c.l.b16 %v3995
  %v4090 = vunpack.c.h.b16 %v3995
  %v4091 = vunpack.c.l.b16 %v3996
  %v4092 = vunpack.c.h.b16 %v3996
  %v4093 = vunpack.c.l.b16 %v3997
  %v4094 = vunpack.c.h.b16 %v3997
  %v4095 = vunpack.c.l.b16 %v3998
  %v4096 = vunpack.c.h.b16 %v3998
  %v4097 = vunpack.c.l.b16 %v3999
  %v4098 = vunpack.c.h.b16 %v3999
  %v4099 = vunpack.c.l.b16 %v4000
  %v4100 = vunpack.c.h.b16 %v4000
  %v4101 = vunpack.c.l.b16 %v4001
  %v4102 = vunpack.c.h.b16 %v4001
  %v4103 = vunpack.c.l.b16 %v4002
  %v4104 = vunpack.c.h.b16 %v4002
  %v4105 = vunpack.c.l.b16 %v4003
  %v4106 = vunpack.c.h.b16 %v4003
  %v4107 = vunpack.c.l.b16 %v4004
  %v4108 = vunpack.c.h.b16 %v4004
  %v4109 = vunpack.c.l.b16 %v4005
  %v4110 = vunpack.c.h.b16 %v4005
  %v4111 = vunpack.c.l.b16 %v4006
  %v4112 = vunpack.c.h.b16 %v4006
  %v4113 = vunpack.c.l.b16 %v4007
  %v4114 = vunpack.c.h.b16 %v4007
  %v4115 = vunpack.c.l.b16 %v4008
  %v4116 = vunpack.c.h.b16 %v4008
  %v4117 = vunpack.c.l.b16 %v4009
  %v4118 = vunpack.c.h.b16 %v4009
  %v4119 = vpack.c.b16 %v4057, %v4055
  %v4120 = vpack.c.b16 %v4058, %v4056
  %v4121 = vpack.c.b16 %v4061, %v4059
  %v4122 = vpack.c.b16 %v4062, %v4060
  %v4123 = vpack.c.b16 %v4065, %v4063
  %v4124 = vpack.c.b16 %v4066, %v4064
  %v4125 = vpack.c.b16 %v4069, %v4067
  %v4126 = vpack.c.b16 %v4070, %v4068
  %v4127 = vpack.c.b16 %v4073, %v4071
  %v4128 = vpack.c.b16 %v4074, %v4072
  %v4129 = vpack.c.b16 %v4077, %v4075
  %v4130 = vpack.c.b16 %v4078, %v4076
  %v4131 = vpack.c.b16 %v4081, %v4079
  %v4132 = vpack.c.b16 %v4082, %v4080
  %v4133 = vpack.c.b16 %v4085, %v4083
  %v4134 = vpack.c.b16 %v4086, %v4084
  %v4135 = vpack.c.b16 %v4089, %v4087
  %v4136 = vpack.c.b16 %v4090, %v4088
  %v4137 = vpack.c.b16 %v4093, %v4091
  %v4138 = vpack.c.b16 %v4094, %v4092
  %v4139 = vpack.c.b16 %v4097, %v4095
  %v4140 = vpack.c.b16 %v4098, %v4096
  %v4141 = vpack.c.b16 %v4101, %v4099
  %v4142 = vpack.c.b16 %v4102, %v4100
  %v4143 = vpack.c.b16 %v4105, %v4103
  %v4144 = vpack.c.b16 %v4106, %v4104
  %v4145 = vpack.c.b16 %v4109, %v4107
  %v4146 = vpack.c.b16 %v4110, %v4108
  %v4147 = vpack.c.b16 %v4113, %v4111
  %v4148 = vpack.c.b16 %v4114, %v4112
  %v4149 = vpack.c.b16 %v4117, %v4115
  %v4150 = vpack.c.b16 %v4118, %v4116
  %4183 = vmatprep.subr.bf16.mxu0 %v4120
  %4184 = vmatpush1.bf16.msra.mxu0 %v4119
  %4185 = vmatprep.subr.bf16.mxu0 %v4122
  %4186 = vmatpush1.bf16.msra.mxu0 %v4121
  %4187 = vmatprep.subr.bf16.mxu0 %v4124
  %4188 = vmatpush1.bf16.msra.mxu0 %v4123
  %4189 = vmatprep.subr.bf16.mxu0 %v4126
  %4190 = vmatpush1.bf16.msra.mxu0 %v4125
  %4191 = vmatprep.subr.bf16.mxu0 %v4128
  %4192 = vmatpush1.bf16.msra.mxu0 %v4127
  %4193 = vmatprep.subr.bf16.mxu0 %v4130
  %4194 = vmatpush1.bf16.msra.mxu0 %v4129
  %4195 = vmatprep.subr.bf16.mxu0 %v4132
  %4196 = vmatpush1.bf16.msra.mxu0 %v4131
  %4197 = vmatprep.subr.bf16.mxu0 %v4134
  %4198 = vmatpush1.bf16.msra.mxu0 %v4133
  %4199 = vmatprep.subr.bf16.mxu0 %v4136
  %4200 = vmatpush1.bf16.msra.mxu0 %v4135
  %4201 = vmatprep.subr.bf16.mxu0 %v4138
  %4202 = vmatpush1.bf16.msra.mxu0 %v4137
  %4203 = vmatprep.subr.bf16.mxu0 %v4140
  %4204 = vmatpush1.bf16.msra.mxu0 %v4139
  %4205 = vmatprep.subr.bf16.mxu0 %v4142
  %4206 = vmatpush1.bf16.msra.mxu0 %v4141
  %4207 = vmatprep.subr.bf16.mxu0 %v4144
  %4208 = vmatpush1.bf16.msra.mxu0 %v4143
  %4209 = vmatprep.subr.bf16.mxu0 %v4146
  %4210 = vmatpush1.bf16.msra.mxu0 %v4145
  %4211 = vmatprep.subr.bf16.mxu0 %v4148
  %4212 = vmatpush1.bf16.msra.mxu0 %v4147
  %4213 = vmatprep.subr.bf16.mxu0 %v4150
  %4214 = vmatpush1.bf16.msra.mxu0 %v4149
  %4215 = vmatprep.mubr.bf16.mxu0 %v2658
  %4216 = vmatmul.mubr.bf16.gmra.mrb[0].mxu0 %v2657
  %v4217 = vpop.f32.mrb[0].mxu0
  %v4218 = vadd.f32 %v4016, %v4217
  %v4219 = vpop.f32.mrb[0].mxu0
  %v4220 = vadd.f32 %v4020, %v4219
  %v4221 = vpop.f32.mrb[0].mxu0
  %v4222 = vpop.f32.mrb[0].mxu0
  %4223 = vdwg.mxu0
  %s4224 = scalar_lea.vmem %s14, 80
  %4225 = vst [vmem:[%s4224] sm:$0xff] %v4218
  %4226 = vst.msk [vmem:[%s4224 + $0x8] sm:$0xff] %vm2905, %v4220
  %v4227 = vmax.f32 %v3959, %v4218
  %v4228 = vmax.f32 %v3960, %v4220
  %v4229 = vsub.f32 %v3959, %v4227
  %v4230 = vsub.f32 %v3960, %v4228
  %v4231 = vmul.f32 %v4229, 1.442695
  %v4232 = vpow.pop %v4231
  %v4233 = vmul.f32 %v4230, 1.442695
  %v4234 = vpow.pop %v4233
  %v4235 = vmul.f32 %v3975, %v4232
  %v4236 = vmul.f32 %v3976, %v4234
  %v4237 = vsub.f32 %v4218, %v4227
  %v4238 = vsub.f32 %v4220, %v4228
  %v4239 = vmul.f32 %v4237, 1.442695
  %v4240 = vpow.pop %v4239
  %v4241 = vmul.f32 %v4238, 1.442695
  %v4242 = vpow.pop %v4241
  %v4243 = vadd.f32 %v4235, %v4240
  %v4244 = vadd.f32 %v4236, %v4242
  %s4245 = scalar_lea.vmem %s12, 1536
  %v4246 = vld [vmem:[%s4245] sm:$0xff]
  %v4247 = vld [vmem:[%s4245 + $0x8] sm:$0xff]
  %v4248 = vld [vmem:[%s4245 + $0x10] sm:$0xff]
  %v4249 = vld [vmem:[%s4245 + $0x18] sm:$0xff]
  %v4250 = vld [vmem:[%s4245 + $0x20] sm:$0xff]
  %v4251 = vld [vmem:[%s4245 + $0x28] sm:$0xff]
  %v4252 = vld [vmem:[%s4245 + $0x30] sm:$0xff]
  %v4253 = vld [vmem:[%s4245 + $0x38] sm:$0xff]
  %v4254 = vld [vmem:[%s4245 + $0x40] sm:$0xff]
  %v4255 = vld [vmem:[%s4245 + $0x48] sm:$0xff]
  %v4256 = vld [vmem:[%s4245 + $0x50] sm:$0xff]
  %v4257 = vld [vmem:[%s4245 + $0x58] sm:$0xff]
  %v4258 = vld [vmem:[%s4245 + $0x60] sm:$0xff]
  %v4259 = vld [vmem:[%s4245 + $0x68] sm:$0xff]
  %v4260 = vld [vmem:[%s4245 + $0x70] sm:$0xff]
  %v4261 = vld [vmem:[%s4245 + $0x78] sm:$0xff]
  %v4262 = vld [vmem:[%s4245 + $0x80] sm:$0xff]
  %v4263 = vld [vmem:[%s4245 + $0x88] sm:$0xff]
  %v4264 = vld [vmem:[%s4245 + $0x90] sm:$0xff]
  %v4265 = vld [vmem:[%s4245 + $0x98] sm:$0xff]
  %v4266 = vld [vmem:[%s4245 + $0xa0] sm:$0xff]
  %v4267 = vld [vmem:[%s4245 + $0xa8] sm:$0xff]
  %v4268 = vld [vmem:[%s4245 + $0xb0] sm:$0xff]
  %v4269 = vld [vmem:[%s4245 + $0xb8] sm:$0xff]
  %v4270 = vld [vmem:[%s4245 + $0xc0] sm:$0xff]
  %v4271 = vld [vmem:[%s4245 + $0xc8] sm:$0xff]
  %v4272 = vld [vmem:[%s4245 + $0xd0] sm:$0xff]
  %v4273 = vld [vmem:[%s4245 + $0xd8] sm:$0xff]
  %v4274 = vld [vmem:[%s4245 + $0xe0] sm:$0xff]
  %v4275 = vld [vmem:[%s4245 + $0xe8] sm:$0xff]
  %v4276 = vld [vmem:[%s4245 + $0xf0] sm:$0xff]
  %v4277 = vld [vmem:[%s4245 + $0xf8] sm:$0xff]
  %s4278 = scalar_lea.vmem %s13, 12
  %v4279 = vld [vmem:[%s4278] sm:$0x3]
  %v4281 = vlaneseq
  %v4282 = vshrl.u32 %v4281, 7
  %v4283 = vsub.s32 0, %v4282
  %v4284 = vrot.slane %v4279, %v4283
  %v4285 = vlaneseq
  %v4286 = vshrl.u32 %v4285, 7
  %v4287 = vsub.s32 1, %v4286
  %v4288 = vrot.slane %v4279, %v4287
  %v4323 = vunpack.c.l.b16 %v4246
  %v4324 = vunpack.c.h.b16 %v4246
  %v4325 = vunpack.c.l.b16 %v4247
  %v4326 = vunpack.c.h.b16 %v4247
  %v4327 = vunpack.c.l.b16 %v4248
  %v4328 = vunpack.c.h.b16 %v4248
  %v4329 = vunpack.c.l.b16 %v4249
  %v4330 = vunpack.c.h.b16 %v4249
  %v4331 = vunpack.c.l.b16 %v4250
  %v4332 = vunpack.c.h.b16 %v4250
  %v4333 = vunpack.c.l.b16 %v4251
  %v4334 = vunpack.c.h.b16 %v4251
  %v4335 = vunpack.c.l.b16 %v4252
  %v4336 = vunpack.c.h.b16 %v4252
  %v4337 = vunpack.c.l.b16 %v4253
  %v4338 = vunpack.c.h.b16 %v4253
  %v4339 = vunpack.c.l.b16 %v4254
  %v4340 = vunpack.c.h.b16 %v4254
  %v4341 = vunpack.c.l.b16 %v4255
  %v4342 = vunpack.c.h.b16 %v4255
  %v4343 = vunpack.c.l.b16 %v4256
  %v4344 = vunpack.c.h.b16 %v4256
  %v4345 = vunpack.c.l.b16 %v4257
  %v4346 = vunpack.c.h.b16 %v4257
  %v4347 = vunpack.c.l.b16 %v4258
  %v4348 = vunpack.c.h.b16 %v4258
  %v4349 = vunpack.c.l.b16 %v4259
  %v4350 = vunpack.c.h.b16 %v4259
  %v4351 = vunpack.c.l.b16 %v4260
  %v4352 = vunpack.c.h.b16 %v4260
  %v4353 = vunpack.c.l.b16 %v4261
  %v4354 = vunpack.c.h.b16 %v4261
  %v4355 = vunpack.c.l.b16 %v4262
  %v4356 = vunpack.c.h.b16 %v4262
  %v4357 = vunpack.c.l.b16 %v4263
  %v4358 = vunpack.c.h.b16 %v4263
  %v4359 = vunpack.c.l.b16 %v4264
  %v4360 = vunpack.c.h.b16 %v4264
  %v4361 = vunpack.c.l.b16 %v4265
  %v4362 = vunpack.c.h.b16 %v4265
  %v4363 = vunpack.c.l.b16 %v4266
  %v4364 = vunpack.c.h.b16 %v4266
  %v4365 = vunpack.c.l.b16 %v4267
  %v4366 = vunpack.c.h.b16 %v4267
  %v4367 = vunpack.c.l.b16 %v4268
  %v4368 = vunpack.c.h.b16 %v4268
  %v4369 = vunpack.c.l.b16 %v4269
  %v4370 = vunpack.c.h.b16 %v4269
  %v4371 = vunpack.c.l.b16 %v4270
  %v4372 = vunpack.c.h.b16 %v4270
  %v4373 = vunpack.c.l.b16 %v4271
  %v4374 = vunpack.c.h.b16 %v4271
  %v4375 = vunpack.c.l.b16 %v4272
  %v4376 = vunpack.c.h.b16 %v4272
  %v4377 = vunpack.c.l.b16 %v4273
  %v4378 = vunpack.c.h.b16 %v4273
  %v4379 = vunpack.c.l.b16 %v4274
  %v4380 = vunpack.c.h.b16 %v4274
  %v4381 = vunpack.c.l.b16 %v4275
  %v4382 = vunpack.c.h.b16 %v4275
  %v4383 = vunpack.c.l.b16 %v4276
  %v4384 = vunpack.c.h.b16 %v4276
  %v4385 = vunpack.c.l.b16 %v4277
  %v4386 = vunpack.c.h.b16 %v4277
  %v4387 = vpack.c.b16 %v4325, %v4323
  %v4388 = vpack.c.b16 %v4326, %v4324
  %v4389 = vpack.c.b16 %v4329, %v4327
  %v4390 = vpack.c.b16 %v4330, %v4328
  %v4391 = vpack.c.b16 %v4333, %v4331
  %v4392 = vpack.c.b16 %v4334, %v4332
  %v4393 = vpack.c.b16 %v4337, %v4335
  %v4394 = vpack.c.b16 %v4338, %v4336
  %v4395 = vpack.c.b16 %v4341, %v4339
  %v4396 = vpack.c.b16 %v4342, %v4340
  %v4397 = vpack.c.b16 %v4345, %v4343
  %v4398 = vpack.c.b16 %v4346, %v4344
  %v4399 = vpack.c.b16 %v4349, %v4347
  %v4400 = vpack.c.b16 %v4350, %v4348
  %v4401 = vpack.c.b16 %v4353, %v4351
  %v4402 = vpack.c.b16 %v4354, %v4352
  %v4403 = vpack.c.b16 %v4357, %v4355
  %v4404 = vpack.c.b16 %v4358, %v4356
  %v4405 = vpack.c.b16 %v4361, %v4359
  %v4406 = vpack.c.b16 %v4362, %v4360
  %v4407 = vpack.c.b16 %v4365, %v4363
  %v4408 = vpack.c.b16 %v4366, %v4364
  %v4409 = vpack.c.b16 %v4369, %v4367
  %v4410 = vpack.c.b16 %v4370, %v4368
  %v4411 = vpack.c.b16 %v4373, %v4371
  %v4412 = vpack.c.b16 %v4374, %v4372
  %v4413 = vpack.c.b16 %v4377, %v4375
  %v4414 = vpack.c.b16 %v4378, %v4376
  %v4415 = vpack.c.b16 %v4381, %v4379
  %v4416 = vpack.c.b16 %v4382, %v4380
  %v4417 = vpack.c.b16 %v4385, %v4383
  %v4418 = vpack.c.b16 %v4386, %v4384
  %4451 = vmatprep.subr.bf16.mxu0 %v4388
  %4452 = vmatpush1.bf16.msra.mxu0 %v4387
  %4453 = vmatprep.subr.bf16.mxu0 %v4390
  %4454 = vmatpush1.bf16.msra.mxu0 %v4389
  %4455 = vmatprep.subr.bf16.mxu0 %v4392
  %4456 = vmatpush1.bf16.msra.mxu0 %v4391
  %4457 = vmatprep.subr.bf16.mxu0 %v4394
  %4458 = vmatpush1.bf16.msra.mxu0 %v4393
  %4459 = vmatprep.subr.bf16.mxu0 %v4396
  %4460 = vmatpush1.bf16.msra.mxu0 %v4395
  %4461 = vmatprep.subr.bf16.mxu0 %v4398
  %4462 = vmatpush1.bf16.msra.mxu0 %v4397
  %4463 = vmatprep.subr.bf16.mxu0 %v4400
  %4464 = vmatpush1.bf16.msra.mxu0 %v4399
  %4465 = vmatprep.subr.bf16.mxu0 %v4402
  %4466 = vmatpush1.bf16.msra.mxu0 %v4401
  %4467 = vmatprep.subr.bf16.mxu0 %v4404
  %4468 = vmatpush1.bf16.msra.mxu0 %v4403
  %4469 = vmatprep.subr.bf16.mxu0 %v4406
  %4470 = vmatpush1.bf16.msra.mxu0 %v4405
  %4471 = vmatprep.subr.bf16.mxu0 %v4408
  %4472 = vmatpush1.bf16.msra.mxu0 %v4407
  %4473 = vmatprep.subr.bf16.mxu0 %v4410
  %4474 = vmatpush1.bf16.msra.mxu0 %v4409
  %4475 = vmatprep.subr.bf16.mxu0 %v4412
  %4476 = vmatpush1.bf16.msra.mxu0 %v4411
  %4477 = vmatprep.subr.bf16.mxu0 %v4414
  %4478 = vmatpush1.bf16.msra.mxu0 %v4413
  %4479 = vmatprep.subr.bf16.mxu0 %v4416
  %4480 = vmatpush1.bf16.msra.mxu0 %v4415
  %4481 = vmatprep.subr.bf16.mxu0 %v4418
  %4482 = vmatpush1.bf16.msra.mxu0 %v4417
  %4483 = vmatprep.mubr.bf16.mxu0 %v2658
  %4484 = vmatmul.mubr.bf16.gmra.mrb[0].mxu0 %v2657
  %v4485 = vpop.f32.mrb[0].mxu0
  %v4486 = vadd.f32 %v4284, %v4485
  %v4487 = vpop.f32.mrb[0].mxu0
  %v4488 = vadd.f32 %v4288, %v4487
  %v4489 = vpop.f32.mrb[0].mxu0
  %v4490 = vpop.f32.mrb[0].mxu0
  %4491 = vdwg.mxu0
  %s4492 = scalar_lea.vmem %s14, 96
  %4493 = vst [vmem:[%s4492] sm:$0xff] %v4486
  %4494 = vst.msk [vmem:[%s4492 + $0x8] sm:$0xff] %vm2905, %v4488
  %v4495 = vmax.f32 %v4227, %v4486
  %v4496 = vmax.f32 %v4228, %v4488
  %v4497 = vsub.f32 %v4227, %v4495
  %v4498 = vsub.f32 %v4228, %v4496
  %v4499 = vmul.f32 %v4497, 1.442695
  %v4500 = vpow.pop %v4499
  %v4501 = vmul.f32 %v4498, 1.442695
  %v4502 = vpow.pop %v4501
  %v4503 = vmul.f32 %v4243, %v4500
  %v4504 = vmul.f32 %v4244, %v4502
  %v4505 = vsub.f32 %v4486, %v4495
  %v4506 = vsub.f32 %v4488, %v4496
  %v4507 = vmul.f32 %v4505, 1.442695
  %v4508 = vpow.pop %v4507
  %v4509 = vmul.f32 %v4506, 1.442695
  %v4510 = vpow.pop %v4509
  %v4511 = vadd.f32 %v4503, %v4508
  %v4512 = vadd.f32 %v4504, %v4510
  %s4513 = scalar_lea.vmem %s12, 1792
  %v4514 = vld [vmem:[%s4513] sm:$0xff]
  %v4515 = vld [vmem:[%s4513 + $0x8] sm:$0xff]
  %v4516 = vld [vmem:[%s4513 + $0x10] sm:$0xff]
  %v4517 = vld [vmem:[%s4513 + $0x18] sm:$0xff]
  %v4518 = vld [vmem:[%s4513 + $0x20] sm:$0xff]
  %v4519 = vld [vmem:[%s4513 + $0x28] sm:$0xff]
  %v4520 = vld [vmem:[%s4513 + $0x30] sm:$0xff]
  %v4521 = vld [vmem:[%s4513 + $0x38] sm:$0xff]
  %v4522 = vld [vmem:[%s4513 + $0x40] sm:$0xff]
  %v4523 = vld [vmem:[%s4513 + $0x48] sm:$0xff]
  %v4524 = vld [vmem:[%s4513 + $0x50] sm:$0xff]
  %v4525 = vld [vmem:[%s4513 + $0x58] sm:$0xff]
  %v4526 = vld [vmem:[%s4513 + $0x60] sm:$0xff]
  %v4527 = vld [vmem:[%s4513 + $0x68] sm:$0xff]
  %v4528 = vld [vmem:[%s4513 + $0x70] sm:$0xff]
  %v4529 = vld [vmem:[%s4513 + $0x78] sm:$0xff]
  %v4530 = vld [vmem:[%s4513 + $0x80] sm:$0xff]
  %v4531 = vld [vmem:[%s4513 + $0x88] sm:$0xff]
  %v4532 = vld [vmem:[%s4513 + $0x90] sm:$0xff]
  %v4533 = vld [vmem:[%s4513 + $0x98] sm:$0xff]
  %v4534 = vld [vmem:[%s4513 + $0xa0] sm:$0xff]
  %v4535 = vld [vmem:[%s4513 + $0xa8] sm:$0xff]
  %v4536 = vld [vmem:[%s4513 + $0xb0] sm:$0xff]
  %v4537 = vld [vmem:[%s4513 + $0xb8] sm:$0xff]
  %v4538 = vld [vmem:[%s4513 + $0xc0] sm:$0xff]
  %v4539 = vld [vmem:[%s4513 + $0xc8] sm:$0xff]
  %v4540 = vld [vmem:[%s4513 + $0xd0] sm:$0xff]
  %v4541 = vld [vmem:[%s4513 + $0xd8] sm:$0xff]
  %v4542 = vld [vmem:[%s4513 + $0xe0] sm:$0xff]
  %v4543 = vld [vmem:[%s4513 + $0xe8] sm:$0xff]
  %v4544 = vld [vmem:[%s4513 + $0xf0] sm:$0xff]
  %v4545 = vld [vmem:[%s4513 + $0xf8] sm:$0xff]
  %s4546 = scalar_lea.vmem %s13, 14
  %v4547 = vld [vmem:[%s4546] sm:$0x3]
  %v4549 = vlaneseq
  %v4550 = vshrl.u32 %v4549, 7
  %v4551 = vsub.s32 0, %v4550
  %v4552 = vrot.slane %v4547, %v4551
  %v4553 = vlaneseq
  %v4554 = vshrl.u32 %v4553, 7
  %v4555 = vsub.s32 1, %v4554
  %v4556 = vrot.slane %v4547, %v4555
  %v4591 = vunpack.c.l.b16 %v4514
  %v4592 = vunpack.c.h.b16 %v4514
  %v4593 = vunpack.c.l.b16 %v4515
  %v4594 = vunpack.c.h.b16 %v4515
  %v4595 = vunpack.c.l.b16 %v4516
  %v4596 = vunpack.c.h.b16 %v4516
  %v4597 = vunpack.c.l.b16 %v4517
  %v4598 = vunpack.c.h.b16 %v4517
  %v4599 = vunpack.c.l.b16 %v4518
  %v4600 = vunpack.c.h.b16 %v4518
  %v4601 = vunpack.c.l.b16 %v4519
  %v4602 = vunpack.c.h.b16 %v4519
  %v4603 = vunpack.c.l.b16 %v4520
  %v4604 = vunpack.c.h.b16 %v4520
  %v4605 = vunpack.c.l.b16 %v4521
  %v4606 = vunpack.c.h.b16 %v4521
  %v4607 = vunpack.c.l.b16 %v4522
  %v4608 = vunpack.c.h.b16 %v4522
  %v4609 = vunpack.c.l.b16 %v4523
  %v4610 = vunpack.c.h.b16 %v4523
  %v4611 = vunpack.c.l.b16 %v4524
  %v4612 = vunpack.c.h.b16 %v4524
  %v4613 = vunpack.c.l.b16 %v4525
  %v4614 = vunpack.c.h.b16 %v4525
  %v4615 = vunpack.c.l.b16 %v4526
  %v4616 = vunpack.c.h.b16 %v4526
  %v4617 = vunpack.c.l.b16 %v4527
  %v4618 = vunpack.c.h.b16 %v4527
  %v4619 = vunpack.c.l.b16 %v4528
  %v4620 = vunpack.c.h.b16 %v4528
  %v4621 = vunpack.c.l.b16 %v4529
  %v4622 = vunpack.c.h.b16 %v4529
  %v4623 = vunpack.c.l.b16 %v4530
  %v4624 = vunpack.c.h.b16 %v4530
  %v4625 = vunpack.c.l.b16 %v4531
  %v4626 = vunpack.c.h.b16 %v4531
  %v4627 = vunpack.c.l.b16 %v4532
  %v4628 = vunpack.c.h.b16 %v4532
  %v4629 = vunpack.c.l.b16 %v4533
  %v4630 = vunpack.c.h.b16 %v4533
  %v4631 = vunpack.c.l.b16 %v4534
  %v4632 = vunpack.c.h.b16 %v4534
  %v4633 = vunpack.c.l.b16 %v4535
  %v4634 = vunpack.c.h.b16 %v4535
  %v4635 = vunpack.c.l.b16 %v4536
  %v4636 = vunpack.c.h.b16 %v4536
  %v4637 = vunpack.c.l.b16 %v4537
  %v4638 = vunpack.c.h.b16 %v4537
  %v4639 = vunpack.c.l.b16 %v4538
  %v4640 = vunpack.c.h.b16 %v4538
  %v4641 = vunpack.c.l.b16 %v4539
  %v4642 = vunpack.c.h.b16 %v4539
  %v4643 = vunpack.c.l.b16 %v4540
  %v4644 = vunpack.c.h.b16 %v4540
  %v4645 = vunpack.c.l.b16 %v4541
  %v4646 = vunpack.c.h.b16 %v4541
  %v4647 = vunpack.c.l.b16 %v4542
  %v4648 = vunpack.c.h.b16 %v4542
  %v4649 = vunpack.c.l.b16 %v4543
  %v4650 = vunpack.c.h.b16 %v4543
  %v4651 = vunpack.c.l.b16 %v4544
  %v4652 = vunpack.c.h.b16 %v4544
  %v4653 = vunpack.c.l.b16 %v4545
  %v4654 = vunpack.c.h.b16 %v4545
  %v4655 = vpack.c.b16 %v4593, %v4591
  %v4656 = vpack.c.b16 %v4594, %v4592
  %v4657 = vpack.c.b16 %v4597, %v4595
  %v4658 = vpack.c.b16 %v4598, %v4596
  %v4659 = vpack.c.b16 %v4601, %v4599
  %v4660 = vpack.c.b16 %v4602, %v4600
  %v4661 = vpack.c.b16 %v4605, %v4603
  %v4662 = vpack.c.b16 %v4606, %v4604
  %v4663 = vpack.c.b16 %v4609, %v4607
  %v4664 = vpack.c.b16 %v4610, %v4608
  %v4665 = vpack.c.b16 %v4613, %v4611
  %v4666 = vpack.c.b16 %v4614, %v4612
  %v4667 = vpack.c.b16 %v4617, %v4615
  %v4668 = vpack.c.b16 %v4618, %v4616
  %v4669 = vpack.c.b16 %v4621, %v4619
  %v4670 = vpack.c.b16 %v4622, %v4620
  %v4671 = vpack.c.b16 %v4625, %v4623
  %v4672 = vpack.c.b16 %v4626, %v4624
  %v4673 = vpack.c.b16 %v4629, %v4627
  %v4674 = vpack.c.b16 %v4630, %v4628
  %v4675 = vpack.c.b16 %v4633, %v4631
  %v4676 = vpack.c.b16 %v4634, %v4632
  %v4677 = vpack.c.b16 %v4637, %v4635
  %v4678 = vpack.c.b16 %v4638, %v4636
  %v4679 = vpack.c.b16 %v4641, %v4639
  %v4680 = vpack.c.b16 %v4642, %v4640
  %v4681 = vpack.c.b16 %v4645, %v4643
  %v4682 = vpack.c.b16 %v4646, %v4644
  %v4683 = vpack.c.b16 %v4649, %v4647
  %v4684 = vpack.c.b16 %v4650, %v4648
  %v4685 = vpack.c.b16 %v4653, %v4651
  %v4686 = vpack.c.b16 %v4654, %v4652
  %4719 = vmatprep.subr.bf16.mxu0 %v4656
  %4720 = vmatpush1.bf16.msra.mxu0 %v4655
  %4721 = vmatprep.subr.bf16.mxu0 %v4658
  %4722 = vmatpush1.bf16.msra.mxu0 %v4657
  %4723 = vmatprep.subr.bf16.mxu0 %v4660
  %4724 = vmatpush1.bf16.msra.mxu0 %v4659
  %4725 = vmatprep.subr.bf16.mxu0 %v4662
  %4726 = vmatpush1.bf16.msra.mxu0 %v4661
  %4727 = vmatprep.subr.bf16.mxu0 %v4664
  %4728 = vmatpush1.bf16.msra.mxu0 %v4663
  %4729 = vmatprep.subr.bf16.mxu0 %v4666
  %4730 = vmatpush1.bf16.msra.mxu0 %v4665
  %4731 = vmatprep.subr.bf16.mxu0 %v4668
  %4732 = vmatpush1.bf16.msra.mxu0 %v4667
  %4733 = vmatprep.subr.bf16.mxu0 %v4670
  %4734 = vmatpush1.bf16.msra.mxu0 %v4669
  %4735 = vmatprep.subr.bf16.mxu0 %v4672
  %4736 = vmatpush1.bf16.msra.mxu0 %v4671
  %4737 = vmatprep.subr.bf16.mxu0 %v4674
  %4738 = vmatpush1.bf16.msra.mxu0 %v4673
  %4739 = vmatprep.subr.bf16.mxu0 %v4676
  %4740 = vmatpush1.bf16.msra.mxu0 %v4675
  %4741 = vmatprep.subr.bf16.mxu0 %v4678
  %4742 = vmatpush1.bf16.msra.mxu0 %v4677
  %4743 = vmatprep.subr.bf16.mxu0 %v4680
  %4744 = vmatpush1.bf16.msra.mxu0 %v4679
  %4745 = vmatprep.subr.bf16.mxu0 %v4682
  %4746 = vmatpush1.bf16.msra.mxu0 %v4681
  %4747 = vmatprep.subr.bf16.mxu0 %v4684
  %4748 = vmatpush1.bf16.msra.mxu0 %v4683
  %4749 = vmatprep.subr.bf16.mxu0 %v4686
  %4750 = vmatpush1.bf16.msra.mxu0 %v4685
  %4751 = vmatprep.mubr.bf16.mxu0 %v2658
  %4752 = vmatmul.mubr.bf16.gmra.mrb[0].mxu0 %v2657
  %v4753 = vpop.f32.mrb[0].mxu0
  %v4754 = vadd.f32 %v4552, %v4753
  %v4755 = vpop.f32.mrb[0].mxu0
  %v4756 = vadd.f32 %v4556, %v4755
  %v4757 = vpop.f32.mrb[0].mxu0
  %v4758 = vpop.f32.mrb[0].mxu0
  %4759 = vdwg.mxu0
  %s4760 = scalar_lea.vmem %s14, 112
  %4761 = vst [vmem:[%s4760] sm:$0xff] %v4754
  %4762 = vst.msk [vmem:[%s4760 + $0x8] sm:$0xff] %vm2905, %v4756
  %v4763 = vmax.f32 %v4495, %v4754
  %v4764 = vmax.f32 %v4496, %v4756
  %v4765 = vsub.f32 %v4495, %v4763
  %v4766 = vsub.f32 %v4496, %v4764
  %v4767 = vmul.f32 %v4765, 1.442695
  %v4768 = vpow.pop %v4767
  %v4769 = vmul.f32 %v4766, 1.442695
  %v4770 = vpow.pop %v4769
  %v4771 = vmul.f32 %v4511, %v4768
  %v4772 = vmul.f32 %v4512, %v4770
  %v4773 = vsub.f32 %v4754, %v4763
  %v4774 = vsub.f32 %v4756, %v4764
  %v4775 = vmul.f32 %v4773, 1.442695
  %v4776 = vpow.pop %v4775
  %v4777 = vmul.f32 %v4774, 1.442695
  %v4778 = vpow.pop %v4777
  %v4779 = vadd.f32 %v4771, %v4776
  %v4780 = vadd.f32 %v4772, %v4778
  %s4781 = scalar_lea.vmem %s12, 2048
  %v4782 = vld [vmem:[%s4781] sm:$0xff]
  %v4783 = vld [vmem:[%s4781 + $0x8] sm:$0xff]
  %v4784 = vld [vmem:[%s4781 + $0x10] sm:$0xff]
  %v4785 = vld [vmem:[%s4781 + $0x18] sm:$0xff]
  %v4786 = vld [vmem:[%s4781 + $0x20] sm:$0xff]
  %v4787 = vld [vmem:[%s4781 + $0x28] sm:$0xff]
  %v4788 = vld [vmem:[%s4781 + $0x30] sm:$0xff]
  %v4789 = vld [vmem:[%s4781 + $0x38] sm:$0xff]
  %v4790 = vld [vmem:[%s4781 + $0x40] sm:$0xff]
  %v4791 = vld [vmem:[%s4781 + $0x48] sm:$0xff]
  %v4792 = vld [vmem:[%s4781 + $0x50] sm:$0xff]
  %v4793 = vld [vmem:[%s4781 + $0x58] sm:$0xff]
  %v4794 = vld [vmem:[%s4781 + $0x60] sm:$0xff]
  %v4795 = vld [vmem:[%s4781 + $0x68] sm:$0xff]
  %v4796 = vld [vmem:[%s4781 + $0x70] sm:$0xff]
  %v4797 = vld [vmem:[%s4781 + $0x78] sm:$0xff]
  %v4798 = vld [vmem:[%s4781 + $0x80] sm:$0xff]
  %v4799 = vld [vmem:[%s4781 + $0x88] sm:$0xff]
  %v4800 = vld [vmem:[%s4781 + $0x90] sm:$0xff]
  %v4801 = vld [vmem:[%s4781 + $0x98] sm:$0xff]
  %v4802 = vld [vmem:[%s4781 + $0xa0] sm:$0xff]
  %v4803 = vld [vmem:[%s4781 + $0xa8] sm:$0xff]
  %v4804 = vld [vmem:[%s4781 + $0xb0] sm:$0xff]
  %v4805 = vld [vmem:[%s4781 + $0xb8] sm:$0xff]
  %v4806 = vld [vmem:[%s4781 + $0xc0] sm:$0xff]
  %v4807 = vld [vmem:[%s4781 + $0xc8] sm:$0xff]
  %v4808 = vld [vmem:[%s4781 + $0xd0] sm:$0xff]
  %v4809 = vld [vmem:[%s4781 + $0xd8] sm:$0xff]
  %v4810 = vld [vmem:[%s4781 + $0xe0] sm:$0xff]
  %v4811 = vld [vmem:[%s4781 + $0xe8] sm:$0xff]
  %v4812 = vld [vmem:[%s4781 + $0xf0] sm:$0xff]
  %v4813 = vld [vmem:[%s4781 + $0xf8] sm:$0xff]
  %s4814 = scalar_lea.vmem %s13, 16
  %v4815 = vld [vmem:[%s4814] sm:$0x3]
  %v4817 = vlaneseq
  %v4818 = vshrl.u32 %v4817, 7
  %v4819 = vsub.s32 0, %v4818
  %v4820 = vrot.slane %v4815, %v4819
  %v4821 = vlaneseq
  %v4822 = vshrl.u32 %v4821, 7
  %v4823 = vsub.s32 1, %v4822
  %v4824 = vrot.slane %v4815, %v4823
  %v4859 = vunpack.c.l.b16 %v4782
  %v4860 = vunpack.c.h.b16 %v4782
  %v4861 = vunpack.c.l.b16 %v4783
  %v4862 = vunpack.c.h.b16 %v4783
  %v4863 = vunpack.c.l.b16 %v4784
  %v4864 = vunpack.c.h.b16 %v4784
  %v4865 = vunpack.c.l.b16 %v4785
  %v4866 = vunpack.c.h.b16 %v4785
  %v4867 = vunpack.c.l.b16 %v4786
  %v4868 = vunpack.c.h.b16 %v4786
  %v4869 = vunpack.c.l.b16 %v4787
  %v4870 = vunpack.c.h.b16 %v4787
  %v4871 = vunpack.c.l.b16 %v4788
  %v4872 = vunpack.c.h.b16 %v4788
  %v4873 = vunpack.c.l.b16 %v4789
  %v4874 = vunpack.c.h.b16 %v4789
  %v4875 = vunpack.c.l.b16 %v4790
  %v4876 = vunpack.c.h.b16 %v4790
  %v4877 = vunpack.c.l.b16 %v4791
  %v4878 = vunpack.c.h.b16 %v4791
  %v4879 = vunpack.c.l.b16 %v4792
  %v4880 = vunpack.c.h.b16 %v4792
  %v4881 = vunpack.c.l.b16 %v4793
  %v4882 = vunpack.c.h.b16 %v4793
  %v4883 = vunpack.c.l.b16 %v4794
  %v4884 = vunpack.c.h.b16 %v4794
  %v4885 = vunpack.c.l.b16 %v4795
  %v4886 = vunpack.c.h.b16 %v4795
  %v4887 = vunpack.c.l.b16 %v4796
  %v4888 = vunpack.c.h.b16 %v4796
  %v4889 = vunpack.c.l.b16 %v4797
  %v4890 = vunpack.c.h.b16 %v4797
  %v4891 = vunpack.c.l.b16 %v4798
  %v4892 = vunpack.c.h.b16 %v4798
  %v4893 = vunpack.c.l.b16 %v4799
  %v4894 = vunpack.c.h.b16 %v4799
  %v4895 = vunpack.c.l.b16 %v4800
  %v4896 = vunpack.c.h.b16 %v4800
  %v4897 = vunpack.c.l.b16 %v4801
  %v4898 = vunpack.c.h.b16 %v4801
  %v4899 = vunpack.c.l.b16 %v4802
  %v4900 = vunpack.c.h.b16 %v4802
  %v4901 = vunpack.c.l.b16 %v4803
  %v4902 = vunpack.c.h.b16 %v4803
  %v4903 = vunpack.c.l.b16 %v4804
  %v4904 = vunpack.c.h.b16 %v4804
  %v4905 = vunpack.c.l.b16 %v4805
  %v4906 = vunpack.c.h.b16 %v4805
  %v4907 = vunpack.c.l.b16 %v4806
  %v4908 = vunpack.c.h.b16 %v4806
  %v4909 = vunpack.c.l.b16 %v4807
  %v4910 = vunpack.c.h.b16 %v4807
  %v4911 = vunpack.c.l.b16 %v4808
  %v4912 = vunpack.c.h.b16 %v4808
  %v4913 = vunpack.c.l.b16 %v4809
  %v4914 = vunpack.c.h.b16 %v4809
  %v4915 = vunpack.c.l.b16 %v4810
  %v4916 = vunpack.c.h.b16 %v4810
  %v4917 = vunpack.c.l.b16 %v4811
  %v4918 = vunpack.c.h.b16 %v4811
  %v4919 = vunpack.c.l.b16 %v4812
  %v4920 = vunpack.c.h.b16 %v4812
  %v4921 = vunpack.c.l.b16 %v4813
  %v4922 = vunpack.c.h.b16 %v4813
  %v4923 = vpack.c.b16 %v4861, %v4859
  %v4924 = vpack.c.b16 %v4862, %v4860
  %v4925 = vpack.c.b16 %v4865, %v4863
  %v4926 = vpack.c.b16 %v4866, %v4864
  %v4927 = vpack.c.b16 %v4869, %v4867
  %v4928 = vpack.c.b16 %v4870, %v4868
  %v4929 = vpack.c.b16 %v4873, %v4871
  %v4930 = vpack.c.b16 %v4874, %v4872
  %v4931 = vpack.c.b16 %v4877, %v4875
  %v4932 = vpack.c.b16 %v4878, %v4876
  %v4933 = vpack.c.b16 %v4881, %v4879
  %v4934 = vpack.c.b16 %v4882, %v4880
  %v4935 = vpack.c.b16 %v4885, %v4883
  %v4936 = vpack.c.b16 %v4886, %v4884
  %v4937 = vpack.c.b16 %v4889, %v4887
  %v4938 = vpack.c.b16 %v4890, %v4888
  %v4939 = vpack.c.b16 %v4893, %v4891
  %v4940 = vpack.c.b16 %v4894, %v4892
  %v4941 = vpack.c.b16 %v4897, %v4895
  %v4942 = vpack.c.b16 %v4898, %v4896
  %v4943 = vpack.c.b16 %v4901, %v4899
  %v4944 = vpack.c.b16 %v4902, %v4900
  %v4945 = vpack.c.b16 %v4905, %v4903
  %v4946 = vpack.c.b16 %v4906, %v4904
  %v4947 = vpack.c.b16 %v4909, %v4907
  %v4948 = vpack.c.b16 %v4910, %v4908
  %v4949 = vpack.c.b16 %v4913, %v4911
  %v4950 = vpack.c.b16 %v4914, %v4912
  %v4951 = vpack.c.b16 %v4917, %v4915
  %v4952 = vpack.c.b16 %v4918, %v4916
  %v4953 = vpack.c.b16 %v4921, %v4919
  %v4954 = vpack.c.b16 %v4922, %v4920
  %4987 = vmatprep.subr.bf16.mxu0 %v4924
  %4988 = vmatpush1.bf16.msra.mxu0 %v4923
  %4989 = vmatprep.subr.bf16.mxu0 %v4926
  %4990 = vmatpush1.bf16.msra.mxu0 %v4925
  %4991 = vmatprep.subr.bf16.mxu0 %v4928
  %4992 = vmatpush1.bf16.msra.mxu0 %v4927
  %4993 = vmatprep.subr.bf16.mxu0 %v4930
  %4994 = vmatpush1.bf16.msra.mxu0 %v4929
  %4995 = vmatprep.subr.bf16.mxu0 %v4932
  %4996 = vmatpush1.bf16.msra.mxu0 %v4931
  %4997 = vmatprep.subr.bf16.mxu0 %v4934
  %4998 = vmatpush1.bf16.msra.mxu0 %v4933
  %4999 = vmatprep.subr.bf16.mxu0 %v4936
  %5000 = vmatpush1.bf16.msra.mxu0 %v4935
  %5001 = vmatprep.subr.bf16.mxu0 %v4938
  %5002 = vmatpush1.bf16.msra.mxu0 %v4937
  %5003 = vmatprep.subr.bf16.mxu0 %v4940
  %5004 = vmatpush1.bf16.msra.mxu0 %v4939
  %5005 = vmatprep.subr.bf16.mxu0 %v4942
  %5006 = vmatpush1.bf16.msra.mxu0 %v4941
  %5007 = vmatprep.subr.bf16.mxu0 %v4944
  %5008 = vmatpush1.bf16.msra.mxu0 %v4943
  %5009 = vmatprep.subr.bf16.mxu0 %v4946
  %5010 = vmatpush1.bf16.msra.mxu0 %v4945
  %5011 = vmatprep.subr.bf16.mxu0 %v4948
  %5012 = vmatpush1.bf16.msra.mxu0 %v4947
  %5013 = vmatprep.subr.bf16.mxu0 %v4950
  %5014 = vmatpush1.bf16.msra.mxu0 %v4949
  %5015 = vmatprep.subr.bf16.mxu0 %v4952
  %5016 = vmatpush1.bf16.msra.mxu0 %v4951
  %5017 = vmatprep.subr.bf16.mxu0 %v4954
  %5018 = vmatpush1.bf16.msra.mxu0 %v4953
  %5019 = vmatprep.mubr.bf16.mxu0 %v2658
  %5020 = vmatmul.mubr.bf16.gmra.mrb[0].mxu0 %v2657
  %v5021 = vpop.f32.mrb[0].mxu0
  %v5022 = vadd.f32 %v4820, %v5021
  %v5023 = vpop.f32.mrb[0].mxu0
  %v5024 = vadd.f32 %v4824, %v5023
  %v5025 = vpop.f32.mrb[0].mxu0
  %v5026 = vpop.f32.mrb[0].mxu0
  %5027 = vdwg.mxu0
  %s5028 = scalar_lea.vmem %s14, 128
  %5029 = vst [vmem:[%s5028] sm:$0xff] %v5022
  %5030 = vst.msk [vmem:[%s5028 + $0x8] sm:$0xff] %vm2905, %v5024
  %v5031 = vmax.f32 %v4763, %v5022
  %v5032 = vmax.f32 %v4764, %v5024
  %v5033 = vsub.f32 %v4763, %v5031
  %v5034 = vsub.f32 %v4764, %v5032
  %v5035 = vmul.f32 %v5033, 1.442695
  %v5036 = vpow.pop %v5035
  %v5037 = vmul.f32 %v5034, 1.442695
  %v5038 = vpow.pop %v5037
  %v5039 = vmul.f32 %v4779, %v5036
  %v5040 = vmul.f32 %v4780, %v5038
  %v5041 = vsub.f32 %v5022, %v5031
  %v5042 = vsub.f32 %v5024, %v5032
  %v5043 = vmul.f32 %v5041, 1.442695
  %v5044 = vpow.pop %v5043
  %v5045 = vmul.f32 %v5042, 1.442695
  %v5046 = vpow.pop %v5045
  %v5047 = vadd.f32 %v5039, %v5044
  %v5048 = vadd.f32 %v5040, %v5046
  %s5049 = scalar_lea.vmem %s12, 2304
  %v5050 = vld [vmem:[%s5049] sm:$0xff]
  %v5051 = vld [vmem:[%s5049 + $0x8] sm:$0xff]
  %v5052 = vld [vmem:[%s5049 + $0x10] sm:$0xff]
  %v5053 = vld [vmem:[%s5049 + $0x18] sm:$0xff]
  %v5054 = vld [vmem:[%s5049 + $0x20] sm:$0xff]
  %v5055 = vld [vmem:[%s5049 + $0x28] sm:$0xff]
  %v5056 = vld [vmem:[%s5049 + $0x30] sm:$0xff]
  %v5057 = vld [vmem:[%s5049 + $0x38] sm:$0xff]
  %v5058 = vld [vmem:[%s5049 + $0x40] sm:$0xff]
  %v5059 = vld [vmem:[%s5049 + $0x48] sm:$0xff]
  %v5060 = vld [vmem:[%s5049 + $0x50] sm:$0xff]
  %v5061 = vld [vmem:[%s5049 + $0x58] sm:$0xff]
  %v5062 = vld [vmem:[%s5049 + $0x60] sm:$0xff]
  %v5063 = vld [vmem:[%s5049 + $0x68] sm:$0xff]
  %v5064 = vld [vmem:[%s5049 + $0x70] sm:$0xff]
  %v5065 = vld [vmem:[%s5049 + $0x78] sm:$0xff]
  %v5066 = vld [vmem:[%s5049 + $0x80] sm:$0xff]
  %v5067 = vld [vmem:[%s5049 + $0x88] sm:$0xff]
  %v5068 = vld [vmem:[%s5049 + $0x90] sm:$0xff]
  %v5069 = vld [vmem:[%s5049 + $0x98] sm:$0xff]
  %v5070 = vld [vmem:[%s5049 + $0xa0] sm:$0xff]
  %v5071 = vld [vmem:[%s5049 + $0xa8] sm:$0xff]
  %v5072 = vld [vmem:[%s5049 + $0xb0] sm:$0xff]
  %v5073 = vld [vmem:[%s5049 + $0xb8] sm:$0xff]
  %v5074 = vld [vmem:[%s5049 + $0xc0] sm:$0xff]
  %v5075 = vld [vmem:[%s5049 + $0xc8] sm:$0xff]
  %v5076 = vld [vmem:[%s5049 + $0xd0] sm:$0xff]
  %v5077 = vld [vmem:[%s5049 + $0xd8] sm:$0xff]
  %v5078 = vld [vmem:[%s5049 + $0xe0] sm:$0xff]
  %v5079 = vld [vmem:[%s5049 + $0xe8] sm:$0xff]
  %v5080 = vld [vmem:[%s5049 + $0xf0] sm:$0xff]
  %v5081 = vld [vmem:[%s5049 + $0xf8] sm:$0xff]
  %s5082 = scalar_lea.vmem %s13, 18
  %v5083 = vld [vmem:[%s5082] sm:$0x3]
  %v5085 = vlaneseq
  %v5086 = vshrl.u32 %v5085, 7
  %v5087 = vsub.s32 0, %v5086
  %v5088 = vrot.slane %v5083, %v5087
  %v5089 = vlaneseq
  %v5090 = vshrl.u32 %v5089, 7
  %v5091 = vsub.s32 1, %v5090
  %v5092 = vrot.slane %v5083, %v5091
  %v5127 = vunpack.c.l.b16 %v5050
  %v5128 = vunpack.c.h.b16 %v5050
  %v5129 = vunpack.c.l.b16 %v5051
  %v5130 = vunpack.c.h.b16 %v5051
  %v5131 = vunpack.c.l.b16 %v5052
  %v5132 = vunpack.c.h.b16 %v5052
  %v5133 = vunpack.c.l.b16 %v5053
  %v5134 = vunpack.c.h.b16 %v5053
  %v5135 = vunpack.c.l.b16 %v5054
  %v5136 = vunpack.c.h.b16 %v5054
  %v5137 = vunpack.c.l.b16 %v5055
  %v5138 = vunpack.c.h.b16 %v5055
  %v5139 = vunpack.c.l.b16 %v5056
  %v5140 = vunpack.c.h.b16 %v5056
  %v5141 = vunpack.c.l.b16 %v5057
  %v5142 = vunpack.c.h.b16 %v5057
  %v5143 = vunpack.c.l.b16 %v5058
  %v5144 = vunpack.c.h.b16 %v5058
  %v5145 = vunpack.c.l.b16 %v5059
  %v5146 = vunpack.c.h.b16 %v5059
  %v5147 = vunpack.c.l.b16 %v5060
  %v5148 = vunpack.c.h.b16 %v5060
  %v5149 = vunpack.c.l.b16 %v5061
  %v5150 = vunpack.c.h.b16 %v5061
  %v5151 = vunpack.c.l.b16 %v5062
  %v5152 = vunpack.c.h.b16 %v5062
  %v5153 = vunpack.c.l.b16 %v5063
  %v5154 = vunpack.c.h.b16 %v5063
  %v5155 = vunpack.c.l.b16 %v5064
  %v5156 = vunpack.c.h.b16 %v5064
  %v5157 = vunpack.c.l.b16 %v5065
  %v5158 = vunpack.c.h.b16 %v5065
  %v5159 = vunpack.c.l.b16 %v5066
  %v5160 = vunpack.c.h.b16 %v5066
  %v5161 = vunpack.c.l.b16 %v5067
  %v5162 = vunpack.c.h.b16 %v5067
  %v5163 = vunpack.c.l.b16 %v5068
  %v5164 = vunpack.c.h.b16 %v5068
  %v5165 = vunpack.c.l.b16 %v5069
  %v5166 = vunpack.c.h.b16 %v5069
  %v5167 = vunpack.c.l.b16 %v5070
  %v5168 = vunpack.c.h.b16 %v5070
  %v5169 = vunpack.c.l.b16 %v5071
  %v5170 = vunpack.c.h.b16 %v5071
  %v5171 = vunpack.c.l.b16 %v5072
  %v5172 = vunpack.c.h.b16 %v5072
  %v5173 = vunpack.c.l.b16 %v5073
  %v5174 = vunpack.c.h.b16 %v5073
  %v5175 = vunpack.c.l.b16 %v5074
  %v5176 = vunpack.c.h.b16 %v5074
  %v5177 = vunpack.c.l.b16 %v5075
  %v5178 = vunpack.c.h.b16 %v5075
  %v5179 = vunpack.c.l.b16 %v5076
  %v5180 = vunpack.c.h.b16 %v5076
  %v5181 = vunpack.c.l.b16 %v5077
  %v5182 = vunpack.c.h.b16 %v5077
  %v5183 = vunpack.c.l.b16 %v5078
  %v5184 = vunpack.c.h.b16 %v5078
  %v5185 = vunpack.c.l.b16 %v5079
  %v5186 = vunpack.c.h.b16 %v5079
  %v5187 = vunpack.c.l.b16 %v5080
  %v5188 = vunpack.c.h.b16 %v5080
  %v5189 = vunpack.c.l.b16 %v5081
  %v5190 = vunpack.c.h.b16 %v5081
  %v5191 = vpack.c.b16 %v5129, %v5127
  %v5192 = vpack.c.b16 %v5130, %v5128
  %v5193 = vpack.c.b16 %v5133, %v5131
  %v5194 = vpack.c.b16 %v5134, %v5132
  %v5195 = vpack.c.b16 %v5137, %v5135
  %v5196 = vpack.c.b16 %v5138, %v5136
  %v5197 = vpack.c.b16 %v5141, %v5139
  %v5198 = vpack.c.b16 %v5142, %v5140
  %v5199 = vpack.c.b16 %v5145, %v5143
  %v5200 = vpack.c.b16 %v5146, %v5144
  %v5201 = vpack.c.b16 %v5149, %v5147
  %v5202 = vpack.c.b16 %v5150, %v5148
  %v5203 = vpack.c.b16 %v5153, %v5151
  %v5204 = vpack.c.b16 %v5154, %v5152
  %v5205 = vpack.c.b16 %v5157, %v5155
  %v5206 = vpack.c.b16 %v5158, %v5156
  %v5207 = vpack.c.b16 %v5161, %v5159
  %v5208 = vpack.c.b16 %v5162, %v5160
  %v5209 = vpack.c.b16 %v5165, %v5163
  %v5210 = vpack.c.b16 %v5166, %v5164
  %v5211 = vpack.c.b16 %v5169, %v5167
  %v5212 = vpack.c.b16 %v5170, %v5168
  %v5213 = vpack.c.b16 %v5173, %v5171
  %v5214 = vpack.c.b16 %v5174, %v5172
  %v5215 = vpack.c.b16 %v5177, %v5175
  %v5216 = vpack.c.b16 %v5178, %v5176
  %v5217 = vpack.c.b16 %v5181, %v5179
  %v5218 = vpack.c.b16 %v5182, %v5180
  %v5219 = vpack.c.b16 %v5185, %v5183
  %v5220 = vpack.c.b16 %v5186, %v5184
  %v5221 = vpack.c.b16 %v5189, %v5187
  %v5222 = vpack.c.b16 %v5190, %v5188
  %5255 = vmatprep.subr.bf16.mxu0 %v5192
  %5256 = vmatpush1.bf16.msra.mxu0 %v5191
  %5257 = vmatprep.subr.bf16.mxu0 %v5194
  %5258 = vmatpush1.bf16.msra.mxu0 %v5193
  %5259 = vmatprep.subr.bf16.mxu0 %v5196
  %5260 = vmatpush1.bf16.msra.mxu0 %v5195
  %5261 = vmatprep.subr.bf16.mxu0 %v5198
  %5262 = vmatpush1.bf16.msra.mxu0 %v5197
  %5263 = vmatprep.subr.bf16.mxu0 %v5200
  %5264 = vmatpush1.bf16.msra.mxu0 %v5199
  %5265 = vmatprep.subr.bf16.mxu0 %v5202
  %5266 = vmatpush1.bf16.msra.mxu0 %v5201
  %5267 = vmatprep.subr.bf16.mxu0 %v5204
  %5268 = vmatpush1.bf16.msra.mxu0 %v5203
  %5269 = vmatprep.subr.bf16.mxu0 %v5206
  %5270 = vmatpush1.bf16.msra.mxu0 %v5205
  %5271 = vmatprep.subr.bf16.mxu0 %v5208
  %5272 = vmatpush1.bf16.msra.mxu0 %v5207
  %5273 = vmatprep.subr.bf16.mxu0 %v5210
  %5274 = vmatpush1.bf16.msra.mxu0 %v5209
  %5275 = vmatprep.subr.bf16.mxu0 %v5212
  %5276 = vmatpush1.bf16.msra.mxu0 %v5211
  %5277 = vmatprep.subr.bf16.mxu0 %v5214
  %5278 = vmatpush1.bf16.msra.mxu0 %v5213
  %5279 = vmatprep.subr.bf16.mxu0 %v5216
  %5280 = vmatpush1.bf16.msra.mxu0 %v5215
  %5281 = vmatprep.subr.bf16.mxu0 %v5218
  %5282 = vmatpush1.bf16.msra.mxu0 %v5217
  %5283 = vmatprep.subr.bf16.mxu0 %v5220
  %5284 = vmatpush1.bf16.msra.mxu0 %v5219
  %5285 = vmatprep.subr.bf16.mxu0 %v5222
  %5286 = vmatpush1.bf16.msra.mxu0 %v5221
  %5287 = vmatprep.mubr.bf16.mxu0 %v2658
  %5288 = vmatmul.mubr.bf16.gmra.mrb[0].mxu0 %v2657
  %v5289 = vpop.f32.mrb[0].mxu0
  %v5290 = vadd.f32 %v5088, %v5289
  %v5291 = vpop.f32.mrb[0].mxu0
  %v5292 = vadd.f32 %v5092, %v5291
  %v5293 = vpop.f32.mrb[0].mxu0
  %v5294 = vpop.f32.mrb[0].mxu0
  %5295 = vdwg.mxu0
  %s5296 = scalar_lea.vmem %s14, 144
  %5297 = vst [vmem:[%s5296] sm:$0xff] %v5290
  %5298 = vst.msk [vmem:[%s5296 + $0x8] sm:$0xff] %vm2905, %v5292
  %v5299 = vmax.f32 %v5031, %v5290
  %v5300 = vmax.f32 %v5032, %v5292
  %v5301 = vsub.f32 %v5031, %v5299
  %v5302 = vsub.f32 %v5032, %v5300
  %v5303 = vmul.f32 %v5301, 1.442695
  %v5304 = vpow.pop %v5303
  %v5305 = vmul.f32 %v5302, 1.442695
  %v5306 = vpow.pop %v5305
  %v5307 = vmul.f32 %v5047, %v5304
  %v5308 = vmul.f32 %v5048, %v5306
  %v5309 = vsub.f32 %v5290, %v5299
  %v5310 = vsub.f32 %v5292, %v5300
  %v5311 = vmul.f32 %v5309, 1.442695
  %v5312 = vpow.pop %v5311
  %v5313 = vmul.f32 %v5310, 1.442695
  %v5314 = vpow.pop %v5313
  %v5315 = vadd.f32 %v5307, %v5312
  %v5316 = vadd.f32 %v5308, %v5314
  %s5317 = scalar_lea.vmem %s12, 2560
  %v5318 = vld [vmem:[%s5317] sm:$0xff]
  %v5319 = vld [vmem:[%s5317 + $0x8] sm:$0xff]
  %v5320 = vld [vmem:[%s5317 + $0x10] sm:$0xff]
  %v5321 = vld [vmem:[%s5317 + $0x18] sm:$0xff]
  %v5322 = vld [vmem:[%s5317 + $0x20] sm:$0xff]
  %v5323 = vld [vmem:[%s5317 + $0x28] sm:$0xff]
  %v5324 = vld [vmem:[%s5317 + $0x30] sm:$0xff]
  %v5325 = vld [vmem:[%s5317 + $0x38] sm:$0xff]
  %v5326 = vld [vmem:[%s5317 + $0x40] sm:$0xff]
  %v5327 = vld [vmem:[%s5317 + $0x48] sm:$0xff]
  %v5328 = vld [vmem:[%s5317 + $0x50] sm:$0xff]
  %v5329 = vld [vmem:[%s5317 + $0x58] sm:$0xff]
  %v5330 = vld [vmem:[%s5317 + $0x60] sm:$0xff]
  %v5331 = vld [vmem:[%s5317 + $0x68] sm:$0xff]
  %v5332 = vld [vmem:[%s5317 + $0x70] sm:$0xff]
  %v5333 = vld [vmem:[%s5317 + $0x78] sm:$0xff]
  %v5334 = vld [vmem:[%s5317 + $0x80] sm:$0xff]
  %v5335 = vld [vmem:[%s5317 + $0x88] sm:$0xff]
  %v5336 = vld [vmem:[%s5317 + $0x90] sm:$0xff]
  %v5337 = vld [vmem:[%s5317 + $0x98] sm:$0xff]
  %v5338 = vld [vmem:[%s5317 + $0xa0] sm:$0xff]
  %v5339 = vld [vmem:[%s5317 + $0xa8] sm:$0xff]
  %v5340 = vld [vmem:[%s5317 + $0xb0] sm:$0xff]
  %v5341 = vld [vmem:[%s5317 + $0xb8] sm:$0xff]
  %v5342 = vld [vmem:[%s5317 + $0xc0] sm:$0xff]
  %v5343 = vld [vmem:[%s5317 + $0xc8] sm:$0xff]
  %v5344 = vld [vmem:[%s5317 + $0xd0] sm:$0xff]
  %v5345 = vld [vmem:[%s5317 + $0xd8] sm:$0xff]
  %v5346 = vld [vmem:[%s5317 + $0xe0] sm:$0xff]
  %v5347 = vld [vmem:[%s5317 + $0xe8] sm:$0xff]
  %v5348 = vld [vmem:[%s5317 + $0xf0] sm:$0xff]
  %v5349 = vld [vmem:[%s5317 + $0xf8] sm:$0xff]
  %s5350 = scalar_lea.vmem %s13, 20
  %v5351 = vld [vmem:[%s5350] sm:$0x3]
  %v5353 = vlaneseq
  %v5354 = vshrl.u32 %v5353, 7
  %v5355 = vsub.s32 0, %v5354
  %v5356 = vrot.slane %v5351, %v5355
  %v5357 = vlaneseq
  %v5358 = vshrl.u32 %v5357, 7
  %v5359 = vsub.s32 1, %v5358
  %v5360 = vrot.slane %v5351, %v5359
  %v5395 = vunpack.c.l.b16 %v5318
  %v5396 = vunpack.c.h.b16 %v5318
  %v5397 = vunpack.c.l.b16 %v5319
  %v5398 = vunpack.c.h.b16 %v5319
  %v5399 = vunpack.c.l.b16 %v5320
  %v5400 = vunpack.c.h.b16 %v5320
  %v5401 = vunpack.c.l.b16 %v5321
  %v5402 = vunpack.c.h.b16 %v5321
  %v5403 = vunpack.c.l.b16 %v5322
  %v5404 = vunpack.c.h.b16 %v5322
  %v5405 = vunpack.c.l.b16 %v5323
  %v5406 = vunpack.c.h.b16 %v5323
  %v5407 = vunpack.c.l.b16 %v5324
  %v5408 = vunpack.c.h.b16 %v5324
  %v5409 = vunpack.c.l.b16 %v5325
  %v5410 = vunpack.c.h.b16 %v5325
  %v5411 = vunpack.c.l.b16 %v5326
  %v5412 = vunpack.c.h.b16 %v5326
  %v5413 = vunpack.c.l.b16 %v5327
  %v5414 = vunpack.c.h.b16 %v5327
  %v5415 = vunpack.c.l.b16 %v5328
  %v5416 = vunpack.c.h.b16 %v5328
  %v5417 = vunpack.c.l.b16 %v5329
  %v5418 = vunpack.c.h.b16 %v5329
  %v5419 = vunpack.c.l.b16 %v5330
  %v5420 = vunpack.c.h.b16 %v5330
  %v5421 = vunpack.c.l.b16 %v5331
  %v5422 = vunpack.c.h.b16 %v5331
  %v5423 = vunpack.c.l.b16 %v5332
  %v5424 = vunpack.c.h.b16 %v5332
  %v5425 = vunpack.c.l.b16 %v5333
  %v5426 = vunpack.c.h.b16 %v5333
  %v5427 = vunpack.c.l.b16 %v5334
  %v5428 = vunpack.c.h.b16 %v5334
  %v5429 = vunpack.c.l.b16 %v5335
  %v5430 = vunpack.c.h.b16 %v5335
  %v5431 = vunpack.c.l.b16 %v5336
  %v5432 = vunpack.c.h.b16 %v5336
  %v5433 = vunpack.c.l.b16 %v5337
  %v5434 = vunpack.c.h.b16 %v5337
  %v5435 = vunpack.c.l.b16 %v5338
  %v5436 = vunpack.c.h.b16 %v5338
  %v5437 = vunpack.c.l.b16 %v5339
  %v5438 = vunpack.c.h.b16 %v5339
  %v5439 = vunpack.c.l.b16 %v5340
  %v5440 = vunpack.c.h.b16 %v5340
  %v5441 = vunpack.c.l.b16 %v5341
  %v5442 = vunpack.c.h.b16 %v5341
  %v5443 = vunpack.c.l.b16 %v5342
  %v5444 = vunpack.c.h.b16 %v5342
  %v5445 = vunpack.c.l.b16 %v5343
  %v5446 = vunpack.c.h.b16 %v5343
  %v5447 = vunpack.c.l.b16 %v5344
  %v5448 = vunpack.c.h.b16 %v5344
  %v5449 = vunpack.c.l.b16 %v5345
  %v5450 = vunpack.c.h.b16 %v5345
  %v5451 = vunpack.c.l.b16 %v5346
  %v5452 = vunpack.c.h.b16 %v5346
  %v5453 = vunpack.c.l.b16 %v5347
  %v5454 = vunpack.c.h.b16 %v5347
  %v5455 = vunpack.c.l.b16 %v5348
  %v5456 = vunpack.c.h.b16 %v5348
  %v5457 = vunpack.c.l.b16 %v5349
  %v5458 = vunpack.c.h.b16 %v5349
  %v5459 = vpack.c.b16 %v5397, %v5395
  %v5460 = vpack.c.b16 %v5398, %v5396
  %v5461 = vpack.c.b16 %v5401, %v5399
  %v5462 = vpack.c.b16 %v5402, %v5400
  %v5463 = vpack.c.b16 %v5405, %v5403
  %v5464 = vpack.c.b16 %v5406, %v5404
  %v5465 = vpack.c.b16 %v5409, %v5407
  %v5466 = vpack.c.b16 %v5410, %v5408
  %v5467 = vpack.c.b16 %v5413, %v5411
  %v5468 = vpack.c.b16 %v5414, %v5412
  %v5469 = vpack.c.b16 %v5417, %v5415
  %v5470 = vpack.c.b16 %v5418, %v5416
  %v5471 = vpack.c.b16 %v5421, %v5419
  %v5472 = vpack.c.b16 %v5422, %v5420
  %v5473 = vpack.c.b16 %v5425, %v5423
  %v5474 = vpack.c.b16 %v5426, %v5424
  %v5475 = vpack.c.b16 %v5429, %v5427
  %v5476 = vpack.c.b16 %v5430, %v5428
  %v5477 = vpack.c.b16 %v5433, %v5431
  %v5478 = vpack.c.b16 %v5434, %v5432
  %v5479 = vpack.c.b16 %v5437, %v5435
  %v5480 = vpack.c.b16 %v5438, %v5436
  %v5481 = vpack.c.b16 %v5441, %v5439
  %v5482 = vpack.c.b16 %v5442, %v5440
  %v5483 = vpack.c.b16 %v5445, %v5443
  %v5484 = vpack.c.b16 %v5446, %v5444
  %v5485 = vpack.c.b16 %v5449, %v5447
  %v5486 = vpack.c.b16 %v5450, %v5448
  %v5487 = vpack.c.b16 %v5453, %v5451
  %v5488 = vpack.c.b16 %v5454, %v5452
  %v5489 = vpack.c.b16 %v5457, %v5455
  %v5490 = vpack.c.b16 %v5458, %v5456
  %5523 = vmatprep.subr.bf16.mxu0 %v5460
  %5524 = vmatpush1.bf16.msra.mxu0 %v5459
  %5525 = vmatprep.subr.bf16.mxu0 %v5462
  %5526 = vmatpush1.bf16.msra.mxu0 %v5461
  %5527 = vmatprep.subr.bf16.mxu0 %v5464
  %5528 = vmatpush1.bf16.msra.mxu0 %v5463
  %5529 = vmatprep.subr.bf16.mxu0 %v5466
  %5530 = vmatpush1.bf16.msra.mxu0 %v5465
  %5531 = vmatprep.subr.bf16.mxu0 %v5468
  %5532 = vmatpush1.bf16.msra.mxu0 %v5467
  %5533 = vmatprep.subr.bf16.mxu0 %v5470
  %5534 = vmatpush1.bf16.msra.mxu0 %v5469
  %5535 = vmatprep.subr.bf16.mxu0 %v5472
  %5536 = vmatpush1.bf16.msra.mxu0 %v5471
  %5537 = vmatprep.subr.bf16.mxu0 %v5474
  %5538 = vmatpush1.bf16.msra.mxu0 %v5473
  %5539 = vmatprep.subr.bf16.mxu0 %v5476
  %5540 = vmatpush1.bf16.msra.mxu0 %v5475
  %5541 = vmatprep.subr.bf16.mxu0 %v5478
  %5542 = vmatpush1.bf16.msra.mxu0 %v5477
  %5543 = vmatprep.subr.bf16.mxu0 %v5480
  %5544 = vmatpush1.bf16.msra.mxu0 %v5479
  %5545 = vmatprep.subr.bf16.mxu0 %v5482
  %5546 = vmatpush1.bf16.msra.mxu0 %v5481
  %5547 = vmatprep.subr.bf16.mxu0 %v5484
  %5548 = vmatpush1.bf16.msra.mxu0 %v5483
  %5549 = vmatprep.subr.bf16.mxu0 %v5486
  %5550 = vmatpush1.bf16.msra.mxu0 %v5485
  %5551 = vmatprep.subr.bf16.mxu0 %v5488
  %5552 = vmatpush1.bf16.msra.mxu0 %v5487
  %5553 = vmatprep.subr.bf16.mxu0 %v5490
  %5554 = vmatpush1.bf16.msra.mxu0 %v5489
  %5555 = vmatprep.mubr.bf16.mxu0 %v2658
  %5556 = vmatmul.mubr.bf16.gmra.mrb[0].mxu0 %v2657
  %v5557 = vpop.f32.mrb[0].mxu0
  %v5558 = vadd.f32 %v5356, %v5557
  %v5559 = vpop.f32.mrb[0].mxu0
  %v5560 = vadd.f32 %v5360, %v5559
  %v5561 = vpop.f32.mrb[0].mxu0
  %v5562 = vpop.f32.mrb[0].mxu0
  %5563 = vdwg.mxu0
  %s5564 = scalar_lea.vmem %s14, 160
  %5565 = vst [vmem:[%s5564] sm:$0xff] %v5558
  %5566 = vst.msk [vmem:[%s5564 + $0x8] sm:$0xff] %vm2905, %v5560
  %v5567 = vmax.f32 %v5299, %v5558
  %v5568 = vmax.f32 %v5300, %v5560
  %v5569 = vsub.f32 %v5299, %v5567
  %v5570 = vsub.f32 %v5300, %v5568
  %v5571 = vmul.f32 %v5569, 1.442695
  %v5572 = vpow.pop %v5571
  %v5573 = vmul.f32 %v5570, 1.442695
  %v5574 = vpow.pop %v5573
  %v5575 = vmul.f32 %v5315, %v5572
  %v5576 = vmul.f32 %v5316, %v5574
  %v5577 = vsub.f32 %v5558, %v5567
  %v5578 = vsub.f32 %v5560, %v5568
  %v5579 = vmul.f32 %v5577, 1.442695
  %v5580 = vpow.pop %v5579
  %v5581 = vmul.f32 %v5578, 1.442695
  %v5582 = vpow.pop %v5581
  %v5583 = vadd.f32 %v5575, %v5580
  %v5584 = vadd.f32 %v5576, %v5582
  %v5585 = vlog2.pop %v5583
  %v5586 = vmul.f32 %v5585, 0.6931472
  %v5587 = vlog2.pop %v5584
  %v5588 = vmul.f32 %v5587, 0.6931472
  %v5589 = vadd.f32 %v5567, %v5586
  %v5590 = vadd.f32 %v5568, %v5588
  %v5591 = vld [vmem:[%s14] sm:$0xff]
  %v5592 = vld [vmem:[%s14 + $0x8] sm:$0xff]
  %v5593 = vsub.f32 %v5591, %v5589
  %v5594 = vsub.f32 %v5592, %v5590
  %5595 = vst [vmem:[%s14] sm:$0xff] %v5593
  %5596 = vst.msk [vmem:[%s14 + $0x8] sm:$0xff] %vm2905, %v5594
  %v5597 = vld [vmem:[%s3154] sm:$0xff]
  %v5598 = vld [vmem:[%s3154 + $0x8] sm:$0xff]
  %v5599 = vsub.f32 %v5597, %v5589
  %v5600 = vsub.f32 %v5598, %v5590
  %5601 = vst [vmem:[%s3154] sm:$0xff] %v5599
  %5602 = vst.msk [vmem:[%s3154 + $0x8] sm:$0xff] %vm2905, %v5600
  %v5603 = vld [vmem:[%s3420] sm:$0xff]
  %v5604 = vld [vmem:[%s3420 + $0x8] sm:$0xff]
  %v5605 = vsub.f32 %v5603, %v5589
  %v5606 = vsub.f32 %v5604, %v5590
  %5607 = vst [vmem:[%s3420] sm:$0xff] %v5605
  %5608 = vst.msk [vmem:[%s3420 + $0x8] sm:$0xff] %vm2905, %v5606
  %v5609 = vld [vmem:[%s3688] sm:$0xff]
  %v5610 = vld [vmem:[%s3688 + $0x8] sm:$0xff]
  %v5611 = vsub.f32 %v5609, %v5589
  %v5612 = vsub.f32 %v5610, %v5590
  %5613 = vst [vmem:[%s3688] sm:$0xff] %v5611
  %5614 = vst.msk [vmem:[%s3688 + $0x8] sm:$0xff] %vm2905, %v5612
  %v5615 = vld [vmem:[%s3956] sm:$0xff]
  %v5616 = vld [vmem:[%s3956 + $0x8] sm:$0xff]
  %v5617 = vsub.f32 %v5615, %v5589
  %v5618 = vsub.f32 %v5616, %v5590
  %5619 = vst [vmem:[%s3956] sm:$0xff] %v5617
  %5620 = vst.msk [vmem:[%s3956 + $0x8] sm:$0xff] %vm2905, %v5618
  %v5621 = vld [vmem:[%s4224] sm:$0xff]
  %v5622 = vld [vmem:[%s4224 + $0x8] sm:$0xff]
  %v5623 = vsub.f32 %v5621, %v5589
  %v5624 = vsub.f32 %v5622, %v5590
  %5625 = vst [vmem:[%s4224] sm:$0xff] %v5623
  %5626 = vst.msk [vmem:[%s4224 + $0x8] sm:$0xff] %vm2905, %v5624
  %v5627 = vld [vmem:[%s4492] sm:$0xff]
  %v5628 = vld [vmem:[%s4492 + $0x8] sm:$0xff]
  %v5629 = vsub.f32 %v5627, %v5589
  %v5630 = vsub.f32 %v5628, %v5590
  %5631 = vst [vmem:[%s4492] sm:$0xff] %v5629
  %5632 = vst.msk [vmem:[%s4492 + $0x8] sm:$0xff] %vm2905, %v5630
  %v5633 = vld [vmem:[%s4760] sm:$0xff]
  %v5634 = vld [vmem:[%s4760 + $0x8] sm:$0xff]
  %v5635 = vsub.f32 %v5633, %v5589
  %v5636 = vsub.f32 %v5634, %v5590
  %5637 = vst [vmem:[%s4760] sm:$0xff] %v5635
  %5638 = vst.msk [vmem:[%s4760 + $0x8] sm:$0xff] %vm2905, %v5636
  %v5639 = vld [vmem:[%s5028] sm:$0xff]
  %v5640 = vld [vmem:[%s5028 + $0x8] sm:$0xff]
  %v5641 = vsub.f32 %v5639, %v5589
  %v5642 = vsub.f32 %v5640, %v5590
  %5643 = vst [vmem:[%s5028] sm:$0xff] %v5641
  %5644 = vst.msk [vmem:[%s5028 + $0x8] sm:$0xff] %vm2905, %v5642
  %v5645 = vld [vmem:[%s5296] sm:$0xff]
  %v5646 = vld [vmem:[%s5296 + $0x8] sm:$0xff]
  %v5647 = vsub.f32 %v5645, %v5589
  %v5648 = vsub.f32 %v5646, %v5590
  %5649 = vst [vmem:[%s5296] sm:$0xff] %v5647
  %5650 = vst.msk [vmem:[%s5296 + $0x8] sm:$0xff] %vm2905, %v5648
  %v5651 = vld [vmem:[%s5564] sm:$0xff]
  %v5652 = vld [vmem:[%s5564 + $0x8] sm:$0xff]
  %v5653 = vsub.f32 %v5651, %v5589
  %v5654 = vsub.f32 %v5652, %v5590
  %5655 = vst [vmem:[%s5564] sm:$0xff] %v5653
  %5656 = vst.msk [vmem:[%s5564 + $0x8] sm:$0xff] %vm2905, %v5654
  // Predicated region
  $region58: #{vae_mario_forward.1} parent=0 // pred_check
    _
  $region59: #{vae_mario_forward.1} parent=0 // pred_check_branch
    %5658 = sbr.rel (0) target = $region61
  $region60: #{vae_mario_forward.1} parent=0 // pred_region
    _
  $region61: #{vae_mario_forward.1} parent=0 // pred_fallthru
    _
  // Predicated region
  $region62: #{vae_mario_forward.1} parent=0 // pred_check
    _
  $region63: #{vae_mario_forward.1} parent=0 // pred_check_branch
    %5660 = sbr.rel (0) target = $region65
  $region64: #{vae_mario_forward.1} parent=0 // pred_region
    _
  $region65: #{vae_mario_forward.1} parent=0 // pred_fallthru
    _
  // Predicated region
  $region66: #{vae_mario_forward.1} parent=0 // pred_check
    _
  $region67: #{vae_mario_forward.1} parent=0 // pred_check_branch
    %5662 = sbr.rel (0) target = $region69
  $region68: #{vae_mario_forward.1} parent=0 // pred_region
    _
  $region69: #{vae_mario_forward.1} parent=0 // pred_fallthru
    _
  // Predicated region
  $region70: #{vae_mario_forward.1} parent=0 // pred_check
    _
  $region71: #{vae_mario_forward.1} parent=0 // pred_check_branch
    %5664 = sbr.rel (0) target = $region73
  $region72: #{vae_mario_forward.1} parent=0 // pred_region
    _
  $region73: #{vae_mario_forward.1} parent=0 // pred_fallthru
    _

</llo_original>
